<compile_context>
chip_gen: v7x
topology: tpu7x:2x2x1
jax: 0.10.0
libtpu: 0.0.40
codegen_flags: <defaults>
</compile_context>

<pallas_src>
import random

import jax
import jax.numpy as jnp
from jax.experimental import pallas as pl
from jax.experimental.pallas import tpu as pltpu


def _round_up(x, m):
    return ((x + m - 1) // m) * m


# ---------------------------------------------------------------------------
# Fused encoder kernel: bidirectional LSTM over the whole source sequence.
# grid=(S,) sequential; forward direction consumes emb[t], backward consumes
# emb[S-1-t]; at the last step the hidden/cell reduction FCs are applied.
# ---------------------------------------------------------------------------
def _encoder_kernel(emb_f_ref, emb_b_ref,
                    wih_f_ref, whh_f_ref, b_f_ref,
                    wih_b_ref, whh_b_ref, b_b_ref,
                    fc_h_wf_ref, fc_h_wb_ref, fc_h_b_ref,
                    fc_c_wf_ref, fc_c_wb_ref, fc_c_b_ref,
                    enc_f_out_ref, enc_b_out_ref, hid_out_ref, cell_out_ref,
                    h_f_ref, c_f_ref, h_b_ref, c_b_ref):
    t = pl.program_id(0)
    S = pl.num_programs(0)

    @pl.when(t == 0)
    def _init():
        z = jnp.zeros_like(h_f_ref)
        h_f_ref[...] = z
        c_f_ref[...] = z
        h_b_ref[...] = z
        c_b_ref[...] = z

    def cell_step(x, h, c, wih, whh, b):
        H = h.shape[1]
        gates = (jnp.dot(x, wih, preferred_element_type=jnp.float32)
                 + jnp.dot(h, whh, preferred_element_type=jnp.float32)
                 + b)
        i = jax.nn.sigmoid(gates[:, 0:H])
        f = jax.nn.sigmoid(gates[:, H:2 * H])
        g = jnp.tanh(gates[:, 2 * H:3 * H])
        o = jax.nn.sigmoid(gates[:, 3 * H:4 * H])
        c_new = f * c + i * g
        h_new = o * jnp.tanh(c_new)
        return h_new, c_new

    h_f, c_f = cell_step(emb_f_ref[0], h_f_ref[...], c_f_ref[...],
                         wih_f_ref[...], whh_f_ref[...], b_f_ref[...])
    h_b, c_b = cell_step(emb_b_ref[0], h_b_ref[...], c_b_ref[...],
                         wih_b_ref[...], whh_b_ref[...], b_b_ref[...])
    h_f_ref[...] = h_f
    c_f_ref[...] = c_f
    h_b_ref[...] = h_b
    c_b_ref[...] = c_b

    enc_f_out_ref[0] = h_f
    enc_b_out_ref[0] = h_b

    @pl.when(t == S - 1)
    def _final():
        # hidden = [h_f ; h_b] @ fc_hidden_w + b   (split weight, no concat)
        hid_out_ref[...] = (
            jnp.dot(h_f, fc_h_wf_ref[...], preferred_element_type=jnp.float32)
            + jnp.dot(h_b, fc_h_wb_ref[...], preferred_element_type=jnp.float32)
            + fc_h_b_ref[...])
        cell_out_ref[...] = (
            jnp.dot(c_f, fc_c_wf_ref[...], preferred_element_type=jnp.float32)
            + jnp.dot(c_b, fc_c_wb_ref[...], preferred_element_type=jnp.float32)
            + fc_c_b_ref[...])


def _encoder_forward(p, emb_seq, H):
    S, B_pad, E = emb_seq.shape
    fc_h_wf, fc_h_wb = p["fc_hidden_w"][:H], p["fc_hidden_w"][H:]
    fc_c_wf, fc_c_wb = p["fc_cell_w"][:H], p["fc_cell_w"][H:]

    const2 = lambda t: (0, 0)
    out_shapes = (
        jax.ShapeDtypeStruct((S, B_pad, H), jnp.float32),   # fwd states
        jax.ShapeDtypeStruct((S, B_pad, H), jnp.float32),   # bwd states
        jax.ShapeDtypeStruct((B_pad, H), jnp.float32),      # reduced hidden
        jax.ShapeDtypeStruct((B_pad, H), jnp.float32),      # reduced cell
    )
    grid_spec = pltpu.PrefetchScalarGridSpec(
        num_scalar_prefetch=0,
        grid=(S,),
        in_specs=[
            pl.BlockSpec((1, B_pad, E), lambda t: (t, 0, 0)),
            pl.BlockSpec((1, B_pad, E), lambda t: (S - 1 - t, 0, 0)),
            pl.BlockSpec((E, 4 * H), const2),
            pl.BlockSpec((H, 4 * H), const2),
            pl.BlockSpec((1, 4 * H), const2),
            pl.BlockSpec((E, 4 * H), const2),
            pl.BlockSpec((H, 4 * H), const2),
            pl.BlockSpec((1, 4 * H), const2),
            pl.BlockSpec((H, H), const2),
            pl.BlockSpec((H, H), const2),
            pl.BlockSpec((1, H), const2),
            pl.BlockSpec((H, H), const2),
            pl.BlockSpec((H, H), const2),
            pl.BlockSpec((1, H), const2),
        ],
        out_specs=(
            pl.BlockSpec((1, B_pad, H), lambda t: (t, 0, 0)),
            pl.BlockSpec((1, B_pad, H), lambda t: (S - 1 - t, 0, 0)),
            pl.BlockSpec((B_pad, H), const2),
            pl.BlockSpec((B_pad, H), const2),
        ),
        scratch_shapes=[pltpu.VMEM((B_pad, H), jnp.float32)] * 4,
    )
    return pl.pallas_call(
        _encoder_kernel,
        out_shape=out_shapes,
        grid_spec=grid_spec,
        compiler_params=pltpu.CompilerParams(
            dimension_semantics=("arbitrary",)),
    )(emb_seq, emb_seq,
      p["enc_wih_f"], p["enc_whh_f"], p["enc_b_f"],
      p["enc_wih_b"], p["enc_whh_b"], p["enc_b_b"],
      fc_h_wf, fc_h_wb, p["fc_hidden_b"],
      fc_c_wf, fc_c_wb, p["fc_cell_b"])


# ---------------------------------------------------------------------------
# Fused decoder kernel: attention + LSTM cell + output projection + greedy
# best-guess, all T-1 steps inside one pallas_call. Recurrent state and the
# previous-step one-hot prediction live in VMEM scratch.
# ---------------------------------------------------------------------------
def _decoder_kernel(tf_ref,                                  # SMEM (T-1,) int32
                    tgt_oh_ref,                              # (1, B, Vp)
                    enc_e_ref,                               # (B, S)
                    enc_ref,                                 # (B, S, 2H)
                    hid0_ref, cell0_ref,                     # (B, H)
                    emb_tgt_ref,                             # (Vp, E)
                    we_h_ref,                                # (1, H)
                    w_ctx_ref, w_emb_ref, whh_ref, b_ref,    # decoder LSTM
                    fc_w_ref, fc_b_ref,                      # (H, Vp), (1, Vp)
                    out_ref,                                 # (1, B, Vp)
                    h_ref, c_ref, prev_ref):                 # VMEM scratch
    k = pl.program_id(0)
    H = h_ref.shape[1]
    Vp = prev_ref.shape[1]

    @pl.when(k == 0)
    def _init():
        h_ref[...] = hid0_ref[...]
        c_ref[...] = cell0_ref[...]
        prev_ref[...] = jnp.zeros_like(prev_ref)

    # teacher forcing: blend target token one-hot with previous best guess
    tf = (tf_ref[k] > 0).astype(jnp.float32)
    x_oh = tf * tgt_oh_ref[0] + (1.0 - tf) * prev_ref[...]          # (B, Vp)
    embed = jnp.dot(x_oh, emb_tgt_ref[...],
                    preferred_element_type=jnp.float32)             # (B, E)

    h = h_ref[...]
    c = c_ref[...]

    # attention: energy = relu(h·We_h + enc·We_enc + b), softmax over S (lanes)
    h_e = jnp.sum(h * we_h_ref[...], axis=-1, keepdims=True)        # (B, 1)
    energy = jnp.maximum(enc_e_ref[...] + h_e, 0.0)                 # (B, S)
    m = jnp.max(energy, axis=-1, keepdims=True)
    ex = jnp.exp(energy - m)
    attn = ex / jnp.sum(ex, axis=-1, keepdims=True)                 # (B, S)
    ctx = jnp.sum(attn[:, :, None] * enc_ref[...], axis=1)          # (B, 2H)

    # decoder LSTM cell with split input weights (no concat needed)
    gates = (jnp.dot(ctx, w_ctx_ref[...], preferred_element_type=jnp.float32)
             + jnp.dot(embed, w_emb_ref[...], preferred_element_type=jnp.float32)
             + jnp.dot(h, whh_ref[...], preferred_element_type=jnp.float32)
             + b_ref[...])
    i = jax.nn.sigmoid(gates[:, 0:H])
    f = jax.nn.sigmoid(gates[:, H:2 * H])
    g = jnp.tanh(gates[:, 2 * H:3 * H])
    o = jax.nn.sigmoid(gates[:, 3 * H:4 * H])
    c_new = f * c + i * g
    h_new = o * jnp.tanh(c_new)
    h_ref[...] = h_new
    c_ref[...] = c_new

    # lane-dense (Vp = multiple of 128) output projection
    logits = (jnp.dot(h_new, fc_w_ref[...], preferred_element_type=jnp.float32)
              + fc_b_ref[...])                                      # (B, Vp)
    out_ref[0] = logits

    # greedy best-guess one-hot for the next step (first max index)
    maxv = jnp.max(logits, axis=-1, keepdims=True)
    lane = jax.lax.broadcasted_iota(jnp.int32, logits.shape, 1)
    cand = jnp.where(logits == maxv, lane, jnp.int32(Vp))
    best = jnp.min(cand, axis=-1, keepdims=True)
    prev_ref[...] = (lane == best).astype(jnp.float32)


def _decoder_forward(p, tf_mask, tgt_oh, enc_bt, enc_energy, hidden0, cell0,
                     H, V_pad):
    T1, B_pad, _ = tgt_oh.shape
    S = enc_bt.shape[1]
    E = p["emb_tgt"].shape[1]
    V = p["fc_out_w"].shape[1]

    emb_tgt_p = jnp.zeros((V_pad, E), jnp.float32).at[:V].set(p["emb_tgt"])
    fc_w_p = jnp.zeros((H, V_pad), jnp.float32).at[:, :V].set(p["fc_out_w"])
    fc_b_p = jnp.full((1, V_pad), -1e9, jnp.float32).at[:, :V].set(p["fc_out_b"])
    we_h = p["energy_w"][:, :H]                       # (1, H)
    w_ctx = p["dec_wih"][:2 * H]                      # (2H, 4H)
    w_emb = p["dec_wih"][2 * H:]                      # (E, 4H)

    c2 = lambda k, tf: (0, 0)
    c3 = lambda k, tf: (0, 0, 0)
    grid_spec = pltpu.PrefetchScalarGridSpec(
        num_scalar_prefetch=1,
        grid=(T1,),
        in_specs=[
            pl.BlockSpec((1, B_pad, V_pad), lambda k, tf: (k, 0, 0)),
            pl.BlockSpec((B_pad, S), c2),
            pl.BlockSpec((B_pad, S, 2 * H), c3),
            pl.BlockSpec((B_pad, H), c2),
            pl.BlockSpec((B_pad, H), c2),
            pl.BlockSpec((V_pad, E), c2),
            pl.BlockSpec((1, H), c2),
            pl.BlockSpec((2 * H, 4 * H), c2),
            pl.BlockSpec((E, 4 * H), c2),
            pl.BlockSpec((H, 4 * H), c2),
            pl.BlockSpec((1, 4 * H), c2),
            pl.BlockSpec((H, V_pad), c2),
            pl.BlockSpec((1, V_pad), c2),
        ],
        out_specs=pl.BlockSpec((1, B_pad, V_pad), lambda k, tf: (k, 0, 0)),
        scratch_shapes=[
            pltpu.VMEM((B_pad, H), jnp.float32),
            pltpu.VMEM((B_pad, H), jnp.float32),
            pltpu.VMEM((B_pad, V_pad), jnp.float32),
        ],
    )
    return pl.pallas_call(
        _decoder_kernel,
        out_shape=jax.ShapeDtypeStruct((T1, B_pad, V_pad), jnp.float32),
        grid_spec=grid_spec,
        compiler_params=pltpu.CompilerParams(
            dimension_semantics=("arbitrary",)),
    )(tf_mask, tgt_oh, enc_energy, enc_bt, hidden0, cell0,
      emb_tgt_p, we_h, w_ctx, w_emb, p["dec_whh"], p["dec_b"],
      fc_w_p, fc_b_p)


# ---------------------------------------------------------------------------
# Full forward (jitted glue + two fused Pallas kernels)
# ---------------------------------------------------------------------------
@jax.jit
def seq2seq_forward(p, source, target, tf_mask):
    S, B = source.shape
    T, _ = target.shape
    H = p["enc_whh_f"].shape[0]
    V = p["fc_out_w"].shape[1]

    B_pad = max(8, _round_up(B, 8))
    V_pad = _round_up(V, 128)

    src_p = jnp.zeros((S, B_pad), source.dtype).at[:, :B].set(source)
    tgt_p = jnp.zeros((T, B_pad), target.dtype).at[:, :B].set(target)

    # TODO(synk): nn.Dropout on embeddings is identity at inference; omitted.
    emb_seq = jnp.take(p["emb_src"], src_p, axis=0)           # (S, B_pad, E)

    enc_f, enc_b, hidden0, cell0 = _encoder_forward(p, emb_seq, H)

    # (B, S, 2H) layout: softmax / weighted-sum axis is lane/sublane aligned
    enc_bt = jnp.transpose(jnp.concatenate([enc_f, enc_b], axis=-1), (1, 0, 2))

    # encoder-state part of the attention energy, computed once (incl. bias)
    we_enc = p["energy_w"][0, H:]                             # (2H,)
    enc_energy = (jnp.einsum("bsh,h->bs", enc_bt, we_enc)
                  + p["energy_b"][0, 0])                      # (B_pad, S)

    tgt_oh = jax.nn.one_hot(tgt_p[:T - 1], V_pad, dtype=jnp.float32)

    dec_out = _decoder_forward(p, tf_mask, tgt_oh, enc_bt, enc_energy,
                               hidden0, cell0, H, V_pad)      # (T-1,B_pad,Vp)

    outputs = jnp.zeros((T, B, V), jnp.float32)
    outputs = outputs.at[1:].set(dec_out[:, :B, :V])          # outputs[0] = 0
    return outputs


# ---------------------------------------------------------------------------
# Parameters (deterministic, synthetic)
# ---------------------------------------------------------------------------
def init_params(key, src_vocab, tgt_vocab, emb, hidden):
    ks = jax.random.split(key, 20)

    def w(k, shape):
        return jax.random.normal(k, shape, jnp.float32) * 0.1

    p = {}
    p["emb_src"] = w(ks[0], (src_vocab, emb))
    p["emb_tgt"] = w(ks[1], (tgt_vocab, emb))
    # encoder bidirectional LSTM (combined bias b_ih + b_hh pre-summed)
    p["enc_wih_f"] = w(ks[2], (emb, 4 * hidden))
    p["enc_whh_f"] = w(ks[3], (hidden, 4 * hidden))
    p["enc_b_f"] = w(ks[4], (1, 4 * hidden))
    p["enc_wih_b"] = w(ks[5], (emb, 4 * hidden))
    p["enc_whh_b"] = w(ks[6], (hidden, 4 * hidden))
    p["enc_b_b"] = w(ks[7], (1, 4 * hidden))
    # encoder hidden/cell reduction fc  (2H -> H)
    p["fc_hidden_w"] = w(ks[8], (2 * hidden, hidden))
    p["fc_hidden_b"] = w(ks[9], (1, hidden))
    p["fc_cell_w"] = w(ks[10], (2 * hidden, hidden))
    p["fc_cell_b"] = w(ks[11], (1, hidden))
    # decoder attention energy (3H -> 1), stored row-major as (1, 3H)
    p["energy_w"] = w(ks[12], (1, 3 * hidden))
    p["energy_b"] = w(ks[13], (1, 1))
    # decoder LSTM (input = [context(2H) ; embed(E)])
    p["dec_wih"] = w(ks[14], (2 * hidden + emb, 4 * hidden))
    p["dec_whh"] = w(ks[15], (hidden, 4 * hidden))
    p["dec_b"] = w(ks[16], (1, 4 * hidden))
    # decoder output fc  (H -> vocab)
    p["fc_out_w"] = w(ks[17], (hidden, tgt_vocab))
    p["fc_out_b"] = w(ks[18], (1, tgt_vocab))
    return p


def make_teacher_force_mask(target_len, teacher_force_ratio=0.5):
    # Reference draws a Python random.random() coin each iteration; the coin
    # drawn at iteration t selects the input for iteration t+1. Step 0 always
    # uses target[0].
    flags = [1] + [1 if random.random() < teacher_force_ratio else 0
                   for _ in range(target_len - 2)]
    return jnp.asarray(flags, dtype=jnp.int32)            # (T-1,)


# ---------------------------------------------------------------------------
if __name__ == "__main__":
    random.seed(0)  # deterministic teacher forcing

    SRC_LEN, TGT_LEN, BATCH = 8, 8, 2
    EMB, HIDDEN = 16, 32
    SRC_VOCAB, TGT_VOCAB = 20, 24

    key = jax.random.PRNGKey(0)
    k_param, k_src, k_tgt = jax.random.split(key, 3)

    params = init_params(k_param, SRC_VOCAB, TGT_VOCAB, EMB, HIDDEN)
    source = jax.random.randint(k_src, (SRC_LEN, BATCH), 0, SRC_VOCAB,
                                dtype=jnp.int32)
    target = jax.random.randint(k_tgt, (TGT_LEN, BATCH), 0, TGT_VOCAB,
                                dtype=jnp.int32)
    tf_mask = make_teacher_force_mask(TGT_LEN, teacher_force_ratio=0.5)

    outputs = seq2seq_forward(params, source, target, tf_mask)
    outputs = jax.block_until_ready(outputs)

    assert outputs.shape == (TGT_LEN, BATCH, TGT_VOCAB)
    assert bool(jnp.all(jnp.isfinite(outputs)))
    assert bool(jnp.all(outputs[0] == 0.0))  # outputs[0] never written

    print("KERNEL_OK")
</pallas_src>

<mosaic_0001>
module attributes {stable_mosaic.version = 11 : i64} {
  func.func @_encoder_kernel(%arg0: i32, %arg1: memref<1x8x16xf32, #tpu.memory_space<vmem>>, %arg2: memref<1x8x16xf32, #tpu.memory_space<vmem>>, %arg3: memref<16x128xf32, #tpu.memory_space<vmem>>, %arg4: memref<32x128xf32, #tpu.memory_space<vmem>>, %arg5: memref<1x128xf32, #tpu.memory_space<vmem>>, %arg6: memref<16x128xf32, #tpu.memory_space<vmem>>, %arg7: memref<32x128xf32, #tpu.memory_space<vmem>>, %arg8: memref<1x128xf32, #tpu.memory_space<vmem>>, %arg9: memref<32x32xf32, #tpu.memory_space<vmem>>, %arg10: memref<32x32xf32, #tpu.memory_space<vmem>>, %arg11: memref<1x32xf32, #tpu.memory_space<vmem>>, %arg12: memref<32x32xf32, #tpu.memory_space<vmem>>, %arg13: memref<32x32xf32, #tpu.memory_space<vmem>>, %arg14: memref<1x32xf32, #tpu.memory_space<vmem>>, %arg15: memref<1x8x32xf32, #tpu.memory_space<vmem>>, %arg16: memref<1x8x32xf32, #tpu.memory_space<vmem>>, %arg17: memref<8x32xf32, #tpu.memory_space<vmem>>, %arg18: memref<8x32xf32, #tpu.memory_space<vmem>>, %arg19: memref<8x32xf32, #tpu.memory_space<vmem>>, %arg20: memref<8x32xf32, #tpu.memory_space<vmem>>, %arg21: memref<8x32xf32, #tpu.memory_space<vmem>>, %arg22: memref<8x32xf32, #tpu.memory_space<vmem>>) attributes {dimension_semantics = [#tpu.dimension_semantics<arbitrary>], iteration_bounds = array<i64: 8>, scalar_prefetch = 0 : i64, scratch_operands = 4 : i64, tpu.core_type = #tpu.core_type<tc>, window_params = [{transform_indices = @transform_0, window_bounds = array<i64: 1, 8, 16>}, {transform_indices = @transform_1, window_bounds = array<i64: 1, 8, 16>}, {pipeline_mode = #tpu.pipeline_mode<synchronous>, transform_indices = @transform_2, window_bounds = array<i64: 16, 128>}, {pipeline_mode = #tpu.pipeline_mode<synchronous>, transform_indices = @transform_3, window_bounds = array<i64: 32, 128>}, {pipeline_mode = #tpu.pipeline_mode<synchronous>, transform_indices = @transform_4, window_bounds = array<i64: 1, 128>}, {pipeline_mode = #tpu.pipeline_mode<synchronous>, transform_indices = @transform_5, window_bounds = array<i64: 16, 128>}, {pipeline_mode = #tpu.pipeline_mode<synchronous>, transform_indices = @transform_6, window_bounds = array<i64: 32, 128>}, {pipeline_mode = #tpu.pipeline_mode<synchronous>, transform_indices = @transform_7, window_bounds = array<i64: 1, 128>}, {pipeline_mode = #tpu.pipeline_mode<synchronous>, transform_indices = @transform_8, window_bounds = array<i64: 32, 32>}, {pipeline_mode = #tpu.pipeline_mode<synchronous>, transform_indices = @transform_9, window_bounds = array<i64: 32, 32>}, {pipeline_mode = #tpu.pipeline_mode<synchronous>, transform_indices = @transform_10, window_bounds = array<i64: 1, 32>}, {pipeline_mode = #tpu.pipeline_mode<synchronous>, transform_indices = @transform_11, window_bounds = array<i64: 32, 32>}, {pipeline_mode = #tpu.pipeline_mode<synchronous>, transform_indices = @transform_12, window_bounds = array<i64: 32, 32>}, {pipeline_mode = #tpu.pipeline_mode<synchronous>, transform_indices = @transform_13, window_bounds = array<i64: 1, 32>}, {transform_indices = @transform_14, window_bounds = array<i64: 1, 8, 32>}, {transform_indices = @transform_15, window_bounds = array<i64: 1, 8, 32>}, {pipeline_mode = #tpu.pipeline_mode<synchronous>, transform_indices = @transform_16, window_bounds = array<i64: 8, 32>}, {pipeline_mode = #tpu.pipeline_mode<synchronous>, transform_indices = @transform_17, window_bounds = array<i64: 8, 32>}]} {
    %c0_i32 = arith.constant 0 : i32
    %0 = arith.cmpi eq, %arg0, %c0_i32 : i32
    %1 = arith.extui %0 : i1 to i32
    %c0_i32_0 = arith.constant 0 : i32
    %2 = arith.cmpi ne, %1, %c0_i32_0 : i32
    scf.if %2 {
      %cst_50 = arith.constant 0.000000e+00 : f32
      %90 = vector.broadcast %cst_50 : f32 to vector<8x32xf32>
      %c0_51 = arith.constant 0 : index
      %c0_52 = arith.constant 0 : index
      %91 = vector.load %arg19[%c0_51, %c0_52] : memref<8x32xf32, #tpu.memory_space<vmem>>, vector<8x32xf32>
      tpu.vector_store %arg19[%c0_51, %c0_52], %90 {strides = array<i32>} : memref<8x32xf32, #tpu.memory_space<vmem>>, vector<8x32xf32>,
      %c0_53 = arith.constant 0 : index
      %c0_54 = arith.constant 0 : index
      %92 = vector.load %arg20[%c0_53, %c0_54] : memref<8x32xf32, #tpu.memory_space<vmem>>, vector<8x32xf32>
      tpu.vector_store %arg20[%c0_53, %c0_54], %90 {strides = array<i32>} : memref<8x32xf32, #tpu.memory_space<vmem>>, vector<8x32xf32>,
      %c0_55 = arith.constant 0 : index
      %c0_56 = arith.constant 0 : index
      %93 = vector.load %arg21[%c0_55, %c0_56] : memref<8x32xf32, #tpu.memory_space<vmem>>, vector<8x32xf32>
      tpu.vector_store %arg21[%c0_55, %c0_56], %90 {strides = array<i32>} : memref<8x32xf32, #tpu.memory_space<vmem>>, vector<8x32xf32>,
      %c0_57 = arith.constant 0 : index
      %c0_58 = arith.constant 0 : index
      %94 = vector.load %arg22[%c0_57, %c0_58] : memref<8x32xf32, #tpu.memory_space<vmem>>, vector<8x32xf32>
      tpu.vector_store %arg22[%c0_57, %c0_58], %90 {strides = array<i32>} : memref<8x32xf32, #tpu.memory_space<vmem>>, vector<8x32xf32>,
    } else {
    }
    %c0 = arith.constant 0 : index
    %c0_1 = arith.constant 0 : index
    %c0_2 = arith.constant 0 : index
    %3 = vector.load %arg1[%c0, %c0_1, %c0_2] : memref<1x8x16xf32, #tpu.memory_space<vmem>>, vector<1x8x16xf32>
    %4 = vector.shape_cast %3 : vector<1x8x16xf32> to vector<8x16xf32>
    %c0_3 = arith.constant 0 : index
    %c0_4 = arith.constant 0 : index
    %5 = vector.load %arg19[%c0_3, %c0_4] : memref<8x32xf32, #tpu.memory_space<vmem>>, vector<8x32xf32>
    %c0_5 = arith.constant 0 : index
    %c0_6 = arith.constant 0 : index
    %6 = vector.load %arg20[%c0_5, %c0_6] : memref<8x32xf32, #tpu.memory_space<vmem>>, vector<8x32xf32>
    %c0_7 = arith.constant 0 : index
    %c0_8 = arith.constant 0 : index
    %7 = vector.load %arg3[%c0_7, %c0_8] : memref<16x128xf32, #tpu.memory_space<vmem>>, vector<16x128xf32>
    %c0_9 = arith.constant 0 : index
    %c0_10 = arith.constant 0 : index
    %8 = vector.load %arg4[%c0_9, %c0_10] : memref<32x128xf32, #tpu.memory_space<vmem>>, vector<32x128xf32>
    %c0_11 = arith.constant 0 : index
    %c0_12 = arith.constant 0 : index
    %9 = vector.load %arg5[%c0_11, %c0_12] : memref<1x128xf32, #tpu.memory_space<vmem>>, vector<1x128xf32>
    %cst = arith.constant dense<0.000000e+00> : vector<8x128xf32>
    %10 = tpu.matmul %4, %7, %cst {dimension_numbers = #tpu.dot_dimension_numbers<[1], [0], [0], [1], [0, 0, 1, 1], [], []>} : vector<8x16xf32>, vector<16x128xf32>, vector<8x128xf32> -> vector<8x128xf32>
    %cst_13 = arith.constant dense<0.000000e+00> : vector<8x128xf32>
    %11 = tpu.matmul %5, %8, %cst_13 {dimension_numbers = #tpu.dot_dimension_numbers<[1], [0], [0], [1], [0, 0, 1, 1], [], []>} : vector<8x32xf32>, vector<32x128xf32>, vector<8x128xf32> -> vector<8x128xf32>
    %12 = arith.addf %10, %11 : vector<8x128xf32>
    %13 = vector.broadcast %9 : vector<1x128xf32> to vector<8x128xf32>
    %14 = arith.addf %12, %13 : vector<8x128xf32>
    %15 = vector.extract_strided_slice %14 {offsets = [0, 0], sizes = [8, 32], strides = [1, 1]} : vector<8x128xf32> to vector<8x32xf32>
    %16 = arith.negf %15 : vector<8x32xf32>
    %17 = math.exp %16 : vector<8x32xf32>
    %cst_14 = arith.constant 1.000000e+00 : f32
    %18 = vector.broadcast %cst_14 : f32 to vector<8x32xf32>
    %19 = arith.addf %18, %17 : vector<8x32xf32>
    %20 = arith.divf %18, %19 : vector<8x32xf32>
    %21 = vector.extract_strided_slice %14 {offsets = [0, 32], sizes = [8, 32], strides = [1, 1]} : vector<8x128xf32> to vector<8x32xf32>
    %22 = arith.negf %21 : vector<8x32xf32>
    %23 = math.exp %22 : vector<8x32xf32>
    %cst_15 = arith.constant 1.000000e+00 : f32
    %24 = vector.broadcast %cst_15 : f32 to vector<8x32xf32>
    %25 = arith.addf %24, %23 : vector<8x32xf32>
    %26 = arith.divf %24, %25 : vector<8x32xf32>
    %27 = vector.extract_strided_slice %14 {offsets = [0, 64], sizes = [8, 32], strides = [1, 1]} : vector<8x128xf32> to vector<8x32xf32>
    %28 = math.tanh %27 : vector<8x32xf32>
    %29 = vector.extract_strided_slice %14 {offsets = [0, 96], sizes = [8, 32], strides = [1, 1]} : vector<8x128xf32> to vector<8x32xf32>
    %30 = arith.negf %29 : vector<8x32xf32>
    %31 = math.exp %30 : vector<8x32xf32>
    %cst_16 = arith.constant 1.000000e+00 : f32
    %32 = vector.broadcast %cst_16 : f32 to vector<8x32xf32>
    %33 = arith.addf %32, %31 : vector<8x32xf32>
    %34 = arith.divf %32, %33 : vector<8x32xf32>
    %35 = arith.mulf %26, %6 : vector<8x32xf32>
    %36 = arith.mulf %20, %28 : vector<8x32xf32>
    %37 = arith.addf %35, %36 : vector<8x32xf32>
    %38 = math.tanh %37 : vector<8x32xf32>
    %39 = arith.mulf %34, %38 : vector<8x32xf32>
    %c0_17 = arith.constant 0 : index
    %c0_18 = arith.constant 0 : index
    %c0_19 = arith.constant 0 : index
    %40 = vector.load %arg2[%c0_17, %c0_18, %c0_19] : memref<1x8x16xf32, #tpu.memory_space<vmem>>, vector<1x8x16xf32>
    %41 = vector.shape_cast %40 : vector<1x8x16xf32> to vector<8x16xf32>
    %c0_20 = arith.constant 0 : index
    %c0_21 = arith.constant 0 : index
    %42 = vector.load %arg21[%c0_20, %c0_21] : memref<8x32xf32, #tpu.memory_space<vmem>>, vector<8x32xf32>
    %c0_22 = arith.constant 0 : index
    %c0_23 = arith.constant 0 : index
    %43 = vector.load %arg22[%c0_22, %c0_23] : memref<8x32xf32, #tpu.memory_space<vmem>>, vector<8x32xf32>
    %c0_24 = arith.constant 0 : index
    %c0_25 = arith.constant 0 : index
    %44 = vector.load %arg6[%c0_24, %c0_25] : memref<16x128xf32, #tpu.memory_space<vmem>>, vector<16x128xf32>
    %c0_26 = arith.constant 0 : index
    %c0_27 = arith.constant 0 : index
    %45 = vector.load %arg7[%c0_26, %c0_27] : memref<32x128xf32, #tpu.memory_space<vmem>>, vector<32x128xf32>
    %c0_28 = arith.constant 0 : index
    %c0_29 = arith.constant 0 : index
    %46 = vector.load %arg8[%c0_28, %c0_29] : memref<1x128xf32, #tpu.memory_space<vmem>>, vector<1x128xf32>
    %cst_30 = arith.constant dense<0.000000e+00> : vector<8x128xf32>
    %47 = tpu.matmul %41, %44, %cst_30 {dimension_numbers = #tpu.dot_dimension_numbers<[1], [0], [0], [1], [0, 0, 1, 1], [], []>} : vector<8x16xf32>, vector<16x128xf32>, vector<8x128xf32> -> vector<8x128xf32>
    %cst_31 = arith.constant dense<0.000000e+00> : vector<8x128xf32>
    %48 = tpu.matmul %42, %45, %cst_31 {dimension_numbers = #tpu.dot_dimension_numbers<[1], [0], [0], [1], [0, 0, 1, 1], [], []>} : vector<8x32xf32>, vector<32x128xf32>, vector<8x128xf32> -> vector<8x128xf32>
    %49 = arith.addf %47, %48 : vector<8x128xf32>
    %50 = vector.broadcast %46 : vector<1x128xf32> to vector<8x128xf32>
    %51 = arith.addf %49, %50 : vector<8x128xf32>
    %52 = vector.extract_strided_slice %51 {offsets = [0, 0], sizes = [8, 32], strides = [1, 1]} : vector<8x128xf32> to vector<8x32xf32>
    %53 = arith.negf %52 : vector<8x32xf32>
    %54 = math.exp %53 : vector<8x32xf32>
    %cst_32 = arith.constant 1.000000e+00 : f32
    %55 = vector.broadcast %cst_32 : f32 to vector<8x32xf32>
    %56 = arith.addf %55, %54 : vector<8x32xf32>
    %57 = arith.divf %55, %56 : vector<8x32xf32>
    %58 = vector.extract_strided_slice %51 {offsets = [0, 32], sizes = [8, 32], strides = [1, 1]} : vector<8x128xf32> to vector<8x32xf32>
    %59 = arith.negf %58 : vector<8x32xf32>
    %60 = math.exp %59 : vector<8x32xf32>
    %cst_33 = arith.constant 1.000000e+00 : f32
    %61 = vector.broadcast %cst_33 : f32 to vector<8x32xf32>
    %62 = arith.addf %61, %60 : vector<8x32xf32>
    %63 = arith.divf %61, %62 : vector<8x32xf32>
    %64 = vector.extract_strided_slice %51 {offsets = [0, 64], sizes = [8, 32], strides = [1, 1]} : vector<8x128xf32> to vector<8x32xf32>
    %65 = math.tanh %64 : vector<8x32xf32>
    %66 = vector.extract_strided_slice %51 {offsets = [0, 96], sizes = [8, 32], strides = [1, 1]} : vector<8x128xf32> to vector<8x32xf32>
    %67 = arith.negf %66 : vector<8x32xf32>
    %68 = math.exp %67 : vector<8x32xf32>
    %cst_34 = arith.constant 1.000000e+00 : f32
    %69 = vector.broadcast %cst_34 : f32 to vector<8x32xf32>
    %70 = arith.addf %69, %68 : vector<8x32xf32>
    %71 = arith.divf %69, %70 : vector<8x32xf32>
    %72 = arith.mulf %63, %43 : vector<8x32xf32>
    %73 = arith.mulf %57, %65 : vector<8x32xf32>
    %74 = arith.addf %72, %73 : vector<8x32xf32>
    %75 = math.tanh %74 : vector<8x32xf32>
    %76 = arith.mulf %71, %75 : vector<8x32xf32>
    %c0_35 = arith.constant 0 : index
    %c0_36 = arith.constant 0 : index
    %77 = vector.load %arg19[%c0_35, %c0_36] : memref<8x32xf32, #tpu.memory_space<vmem>>, vector<8x32xf32>
    tpu.vector_store %arg19[%c0_35, %c0_36], %39 {strides = array<i32>} : memref<8x32xf32, #tpu.memory_space<vmem>>, vector<8x32xf32>,
    %c0_37 = arith.constant 0 : index
    %c0_38 = arith.constant 0 : index
    %78 = vector.load %arg20[%c0_37, %c0_38] : memref<8x32xf32, #tpu.memory_space<vmem>>, vector<8x32xf32>
    tpu.vector_store %arg20[%c0_37, %c0_38], %37 {strides = array<i32>} : memref<8x32xf32, #tpu.memory_space<vmem>>, vector<8x32xf32>,
    %c0_39 = arith.constant 0 : index
    %c0_40 = arith.constant 0 : index
    %79 = vector.load %arg21[%c0_39, %c0_40] : memref<8x32xf32, #tpu.memory_space<vmem>>, vector<8x32xf32>
    tpu.vector_store %arg21[%c0_39, %c0_40], %76 {strides = array<i32>} : memref<8x32xf32, #tpu.memory_space<vmem>>, vector<8x32xf32>,
    %c0_41 = arith.constant 0 : index
    %c0_42 = arith.constant 0 : index
    %80 = vector.load %arg22[%c0_41, %c0_42] : memref<8x32xf32, #tpu.memory_space<vmem>>, vector<8x32xf32>
    tpu.vector_store %arg22[%c0_41, %c0_42], %74 {strides = array<i32>} : memref<8x32xf32, #tpu.memory_space<vmem>>, vector<8x32xf32>,
    %c0_43 = arith.constant 0 : index
    %c0_44 = arith.constant 0 : index
    %c0_45 = arith.constant 0 : index
    %81 = vector.load %arg15[%c0_43, %c0_44, %c0_45] : memref<1x8x32xf32, #tpu.memory_space<vmem>>, vector<1x8x32xf32>
    %82 = vector.shape_cast %81 : vector<1x8x32xf32> to vector<8x32xf32>
    %83 = vector.shape_cast %39 : vector<8x32xf32> to vector<1x8x32xf32>
    tpu.vector_store %arg15[%c0_43, %c0_44, %c0_45], %83 {strides = array<i32>} : memref<1x8x32xf32, #tpu.memory_space<vmem>>, vector<1x8x32xf32>,
    %c0_46 = arith.constant 0 : index
    %c0_47 = arith.constant 0 : index
    %c0_48 = arith.constant 0 : index
    %84 = vector.load %arg16[%c0_46, %c0_47, %c0_48] : memref<1x8x32xf32, #tpu.memory_space<vmem>>, vector<1x8x32xf32>
    %85 = vector.shape_cast %84 : vector<1x8x32xf32> to vector<8x32xf32>
    %86 = vector.shape_cast %76 : vector<8x32xf32> to vector<1x8x32xf32>
    tpu.vector_store %arg16[%c0_46, %c0_47, %c0_48], %86 {strides = array<i32>} : memref<1x8x32xf32, #tpu.memory_space<vmem>>, vector<1x8x32xf32>,
    %c7_i32 = arith.constant 7 : i32
    %87 = arith.cmpi eq, %arg0, %c7_i32 : i32
    %88 = arith.extui %87 : i1 to i32
    %c0_i32_49 = arith.constant 0 : i32
    %89 = arith.cmpi ne, %88, %c0_i32_49 : i32
    scf.if %89 {
      %c0_50 = arith.constant 0 : index
      %c0_51 = arith.constant 0 : index
      %90 = vector.load %arg9[%c0_50, %c0_51] : memref<32x32xf32, #tpu.memory_space<vmem>>, vector<32x32xf32>
      %cst_52 = arith.constant dense<0.000000e+00> : vector<8x32xf32>
      %91 = tpu.matmul %39, %90, %cst_52 {dimension_numbers = #tpu.dot_dimension_numbers<[1], [0], [0], [1], [0, 0, 1, 1], [], []>} : vector<8x32xf32>, vector<32x32xf32>, vector<8x32xf32> -> vector<8x32xf32>
      %c0_53 = arith.constant 0 : index
      %c0_54 = arith.constant 0 : index
      %92 = vector.load %arg10[%c0_53, %c0_54] : memref<32x32xf32, #tpu.memory_space<vmem>>, vector<32x32xf32>
      %cst_55 = arith.constant dense<0.000000e+00> : vector<8x32xf32>
      %93 = tpu.matmul %76, %92, %cst_55 {dimension_numbers = #tpu.dot_dimension_numbers<[1], [0], [0], [1], [0, 0, 1, 1], [], []>} : vector<8x32xf32>, vector<32x32xf32>, vector<8x32xf32> -> vector<8x32xf32>
      %94 = arith.addf %91, %93 : vector<8x32xf32>
      %c0_56 = arith.constant 0 : index
      %c0_57 = arith.constant 0 : index
      %95 = vector.load %arg11[%c0_56, %c0_57] : memref<1x32xf32, #tpu.memory_space<vmem>>, vector<1x32xf32>
      %96 = vector.broadcast %95 : vector<1x32xf32> to vector<8x32xf32>
      %97 = arith.addf %94, %96 : vector<8x32xf32>
      %c0_58 = arith.constant 0 : index
      %c0_59 = arith.constant 0 : index
      %98 = vector.load %arg17[%c0_58, %c0_59] : memref<8x32xf32, #tpu.memory_space<vmem>>, vector<8x32xf32>
      tpu.vector_store %arg17[%c0_58, %c0_59], %97 {strides = array<i32>} : memref<8x32xf32, #tpu.memory_space<vmem>>, vector<8x32xf32>,
      %c0_60 = arith.constant 0 : index
      %c0_61 = arith.constant 0 : index
      %99 = vector.load %arg12[%c0_60, %c0_61] : memref<32x32xf32, #tpu.memory_space<vmem>>, vector<32x32xf32>
      %cst_62 = arith.constant dense<0.000000e+00> : vector<8x32xf32>
      %100 = tpu.matmul %37, %99, %cst_62 {dimension_numbers = #tpu.dot_dimension_numbers<[1], [0], [0], [1], [0, 0, 1, 1], [], []>} : vector<8x32xf32>, vector<32x32xf32>, vector<8x32xf32> -> vector<8x32xf32>
      %c0_63 = arith.constant 0 : index
      %c0_64 = arith.constant 0 : index
      %101 = vector.load %arg13[%c0_63, %c0_64] : memref<32x32xf32, #tpu.memory_space<vmem>>, vector<32x32xf32>
      %cst_65 = arith.constant dense<0.000000e+00> : vector<8x32xf32>
      %102 = tpu.matmul %74, %101, %cst_65 {dimension_numbers = #tpu.dot_dimension_numbers<[1], [0], [0], [1], [0, 0, 1, 1], [], []>} : vector<8x32xf32>, vector<32x32xf32>, vector<8x32xf32> -> vector<8x32xf32>
      %103 = arith.addf %100, %102 : vector<8x32xf32>
      %c0_66 = arith.constant 0 : index
      %c0_67 = arith.constant 0 : index
      %104 = vector.load %arg14[%c0_66, %c0_67] : memref<1x32xf32, #tpu.memory_space<vmem>>, vector<1x32xf32>
      %105 = vector.broadcast %104 : vector<1x32xf32> to vector<8x32xf32>
      %106 = arith.addf %103, %105 : vector<8x32xf32>
      %c0_68 = arith.constant 0 : index
      %c0_69 = arith.constant 0 : index
      %107 = vector.load %arg18[%c0_68, %c0_69] : memref<8x32xf32, #tpu.memory_space<vmem>>, vector<8x32xf32>
      tpu.vector_store %arg18[%c0_68, %c0_69], %106 {strides = array<i32>} : memref<8x32xf32, #tpu.memory_space<vmem>>, vector<8x32xf32>,
    } else {
    }
    return
  }
  func.func @transform_0(%arg0: i32) -> (i32, i32, i32) {
    %c0_i32 = arith.constant 0 : i32
    %c0_i32_0 = arith.constant 0 : i32
    %c0_i32_1 = arith.constant 0 : i32
    return %arg0, %c0_i32, %c0_i32_0 : i32, i32, i32
  }
  func.func @transform_1(%arg0: i32) -> (i32, i32, i32) {
    %c7_i32 = arith.constant 7 : i32
    %0 = arith.subi %c7_i32, %arg0 : i32
    %c0_i32 = arith.constant 0 : i32
    %c0_i32_0 = arith.constant 0 : i32
    %c0_i32_1 = arith.constant 0 : i32
    return %0, %c0_i32, %c0_i32_0 : i32, i32, i32
  }
  func.func @transform_2(%arg0: i32) -> (i32, i32) {
    %c0_i32 = arith.constant 0 : i32
    %c0_i32_0 = arith.constant 0 : i32
    %c0_i32_1 = arith.constant 0 : i32
    return %c0_i32, %c0_i32_0 : i32, i32
  }
  func.func @transform_3(%arg0: i32) -> (i32, i32) {
    %c0_i32 = arith.constant 0 : i32
    %c0_i32_0 = arith.constant 0 : i32
    %c0_i32_1 = arith.constant 0 : i32
    return %c0_i32, %c0_i32_0 : i32, i32
  }
  func.func @transform_4(%arg0: i32) -> (i32, i32) {
    %c0_i32 = arith.constant 0 : i32
    %c0_i32_0 = arith.constant 0 : i32
    %c0_i32_1 = arith.constant 0 : i32
    return %c0_i32, %c0_i32_0 : i32, i32
  }
  func.func @transform_5(%arg0: i32) -> (i32, i32) {
    %c0_i32 = arith.constant 0 : i32
    %c0_i32_0 = arith.constant 0 : i32
    %c0_i32_1 = arith.constant 0 : i32
    return %c0_i32, %c0_i32_0 : i32, i32
  }
  func.func @transform_6(%arg0: i32) -> (i32, i32) {
    %c0_i32 = arith.constant 0 : i32
    %c0_i32_0 = arith.constant 0 : i32
    %c0_i32_1 = arith.constant 0 : i32
    return %c0_i32, %c0_i32_0 : i32, i32
  }
  func.func @transform_7(%arg0: i32) -> (i32, i32) {
    %c0_i32 = arith.constant 0 : i32
    %c0_i32_0 = arith.constant 0 : i32
    %c0_i32_1 = arith.constant 0 : i32
    return %c0_i32, %c0_i32_0 : i32, i32
  }
  func.func @transform_8(%arg0: i32) -> (i32, i32) {
    %c0_i32 = arith.constant 0 : i32
    %c0_i32_0 = arith.constant 0 : i32
    %c0_i32_1 = arith.constant 0 : i32
    return %c0_i32, %c0_i32_0 : i32, i32
  }
  func.func @transform_9(%arg0: i32) -> (i32, i32) {
    %c0_i32 = arith.constant 0 : i32
    %c0_i32_0 = arith.constant 0 : i32
    %c0_i32_1 = arith.constant 0 : i32
    return %c0_i32, %c0_i32_0 : i32, i32
  }
  func.func @transform_10(%arg0: i32) -> (i32, i32) {
    %c0_i32 = arith.constant 0 : i32
    %c0_i32_0 = arith.constant 0 : i32
    %c0_i32_1 = arith.constant 0 : i32
    return %c0_i32, %c0_i32_0 : i32, i32
  }
  func.func @transform_11(%arg0: i32) -> (i32, i32) {
    %c0_i32 = arith.constant 0 : i32
    %c0_i32_0 = arith.constant 0 : i32
    %c0_i32_1 = arith.constant 0 : i32
    return %c0_i32, %c0_i32_0 : i32, i32
  }
  func.func @transform_12(%arg0: i32) -> (i32, i32) {
    %c0_i32 = arith.constant 0 : i32
    %c0_i32_0 = arith.constant 0 : i32
    %c0_i32_1 = arith.constant 0 : i32
    return %c0_i32, %c0_i32_0 : i32, i32
  }
  func.func @transform_13(%arg0: i32) -> (i32, i32) {
    %c0_i32 = arith.constant 0 : i32
    %c0_i32_0 = arith.constant 0 : i32
    %c0_i32_1 = arith.constant 0 : i32
    return %c0_i32, %c0_i32_0 : i32, i32
  }
  func.func @transform_14(%arg0: i32) -> (i32, i32, i32) {
    %c0_i32 = arith.constant 0 : i32
    %c0_i32_0 = arith.constant 0 : i32
    %c0_i32_1 = arith.constant 0 : i32
    return %arg0, %c0_i32, %c0_i32_0 : i32, i32, i32
  }
  func.func @transform_15(%arg0: i32) -> (i32, i32, i32) {
    %c7_i32 = arith.constant 7 : i32
    %0 = arith.subi %c7_i32, %arg0 : i32
    %c0_i32 = arith.constant 0 : i32
    %c0_i32_0 = arith.constant 0 : i32
    %c0_i32_1 = arith.constant 0 : i32
    return %0, %c0_i32, %c0_i32_0 : i32, i32, i32
  }
  func.func @transform_16(%arg0: i32) -> (i32, i32) {
    %c0_i32 = arith.constant 0 : i32
    %c0_i32_0 = arith.constant 0 : i32
    %c0_i32_1 = arith.constant 0 : i32
    return %c0_i32, %c0_i32_0 : i32, i32
  }
  func.func @transform_17(%arg0: i32) -> (i32, i32) {
    %c0_i32 = arith.constant 0 : i32
    %c0_i32_0 = arith.constant 0 : i32
    %c0_i32_1 = arith.constant 0 : i32
    return %c0_i32, %c0_i32_0 : i32, i32
  }
}

module attributes {stable_mosaic.version = 11 : i64} {
  func.func @_decoder_kernel(%arg0: i32, %arg1: memref<7xi32, #tpu.memory_space<smem>>, %arg2: memref<1x8x128xf32, #tpu.memory_space<vmem>>, %arg3: memref<8x8xf32, #tpu.memory_space<vmem>>, %arg4: memref<8x8x64xf32, #tpu.memory_space<vmem>>, %arg5: memref<8x32xf32, #tpu.memory_space<vmem>>, %arg6: memref<8x32xf32, #tpu.memory_space<vmem>>, %arg7: memref<128x16xf32, #tpu.memory_space<vmem>>, %arg8: memref<1x32xf32, #tpu.memory_space<vmem>>, %arg9: memref<64x128xf32, #tpu.memory_space<vmem>>, %arg10: memref<16x128xf32, #tpu.memory_space<vmem>>, %arg11: memref<32x128xf32, #tpu.memory_space<vmem>>, %arg12: memref<1x128xf32, #tpu.memory_space<vmem>>, %arg13: memref<32x128xf32, #tpu.memory_space<vmem>>, %arg14: memref<1x128xf32, #tpu.memory_space<vmem>>, %arg15: memref<1x8x128xf32, #tpu.memory_space<vmem>>, %arg16: memref<8x32xf32, #tpu.memory_space<vmem>>, %arg17: memref<8x32xf32, #tpu.memory_space<vmem>>, %arg18: memref<8x128xf32, #tpu.memory_space<vmem>>) attributes {dimension_semantics = [#tpu.dimension_semantics<arbitrary>], iteration_bounds = array<i64: 7>, scalar_prefetch = 1 : i64, scratch_operands = 3 : i64, tpu.core_type = #tpu.core_type<tc>, window_params = [{transform_indices = @transform_0, window_bounds = array<i64: 1, 8, 128>}, {pipeline_mode = #tpu.pipeline_mode<synchronous>, transform_indices = @transform_1, window_bounds = array<i64: 8, 8>}, {pipeline_mode = #tpu.pipeline_mode<synchronous>, transform_indices = @transform_2, window_bounds = array<i64: 8, 8, 64>}, {pipeline_mode = #tpu.pipeline_mode<synchronous>, transform_indices = @transform_3, window_bounds = array<i64: 8, 32>}, {pipeline_mode = #tpu.pipeline_mode<synchronous>, transform_indices = @transform_4, window_bounds = array<i64: 8, 32>}, {pipeline_mode = #tpu.pipeline_mode<synchronous>, transform_indices = @transform_5, window_bounds = array<i64: 128, 16>}, {pipeline_mode = #tpu.pipeline_mode<synchronous>, transform_indices = @transform_6, window_bounds = array<i64: 1, 32>}, {pipeline_mode = #tpu.pipeline_mode<synchronous>, transform_indices = @transform_7, window_bounds = array<i64: 64, 128>}, {pipeline_mode = #tpu.pipeline_mode<synchronous>, transform_indices = @transform_8, window_bounds = array<i64: 16, 128>}, {pipeline_mode = #tpu.pipeline_mode<synchronous>, transform_indices = @transform_9, window_bounds = array<i64: 32, 128>}, {pipeline_mode = #tpu.pipeline_mode<synchronous>, transform_indices = @transform_10, window_bounds = array<i64: 1, 128>}, {pipeline_mode = #tpu.pipeline_mode<synchronous>, transform_indices = @transform_11, window_bounds = array<i64: 32, 128>}, {pipeline_mode = #tpu.pipeline_mode<synchronous>, transform_indices = @transform_12, window_bounds = array<i64: 1, 128>}, {transform_indices = @transform_13, window_bounds = array<i64: 1, 8, 128>}]} {
    %c0_i32 = arith.constant 0 : i32
    %0 = arith.cmpi eq, %arg0, %c0_i32 : i32
    %1 = arith.extui %0 : i1 to i32
    %c0_i32_0 = arith.constant 0 : i32
    %2 = arith.cmpi ne, %1, %c0_i32_0 : i32
    scf.if %2 {
      %c0_55 = arith.constant 0 : index
      %c0_56 = arith.constant 0 : index
      %105 = vector.load %arg5[%c0_55, %c0_56] : memref<8x32xf32, #tpu.memory_space<vmem>>, vector<8x32xf32>
      %c0_57 = arith.constant 0 : index
      %c0_58 = arith.constant 0 : index
      %106 = vector.load %arg16[%c0_57, %c0_58] : memref<8x32xf32, #tpu.memory_space<vmem>>, vector<8x32xf32>
      tpu.vector_store %arg16[%c0_57, %c0_58], %105 {strides = array<i32>} : memref<8x32xf32, #tpu.memory_space<vmem>>, vector<8x32xf32>,
      %c0_59 = arith.constant 0 : index
      %c0_60 = arith.constant 0 : index
      %107 = vector.load %arg6[%c0_59, %c0_60] : memref<8x32xf32, #tpu.memory_space<vmem>>, vector<8x32xf32>
      %c0_61 = arith.constant 0 : index
      %c0_62 = arith.constant 0 : index
      %108 = vector.load %arg17[%c0_61, %c0_62] : memref<8x32xf32, #tpu.memory_space<vmem>>, vector<8x32xf32>
      tpu.vector_store %arg17[%c0_61, %c0_62], %107 {strides = array<i32>} : memref<8x32xf32, #tpu.memory_space<vmem>>, vector<8x32xf32>,
      %cst_63 = arith.constant 0.000000e+00 : f32
      %109 = vector.broadcast %cst_63 : f32 to vector<8x128xf32>
      %c0_64 = arith.constant 0 : index
      %c0_65 = arith.constant 0 : index
      %110 = vector.load %arg18[%c0_64, %c0_65] : memref<8x128xf32, #tpu.memory_space<vmem>>, vector<8x128xf32>
      tpu.vector_store %arg18[%c0_64, %c0_65], %109 {strides = array<i32>} : memref<8x128xf32, #tpu.memory_space<vmem>>, vector<8x128xf32>,
    } else {
    }
    %3 = arith.index_cast %arg0 : i32 to index
    %4 = memref.load %arg1[%3] : memref<7xi32, #tpu.memory_space<smem>>
    %c0_i32_1 = arith.constant 0 : i32
    %5 = arith.cmpi sgt, %4, %c0_i32_1 : i32
    %6 = arith.extui %5 : i1 to i32
    %7 = arith.sitofp %6 : i32 to f32
    %c0 = arith.constant 0 : index
    %c0_2 = arith.constant 0 : index
    %c0_3 = arith.constant 0 : index
    %8 = vector.load %arg2[%c0, %c0_2, %c0_3] : memref<1x8x128xf32, #tpu.memory_space<vmem>>, vector<1x8x128xf32>
    %9 = vector.shape_cast %8 : vector<1x8x128xf32> to vector<8x128xf32>
    %10 = vector.broadcast %7 : f32 to vector<8x128xf32>
    %11 = arith.mulf %10, %9 : vector<8x128xf32>
    %cst = arith.constant 1.000000e+00 : f32
    %12 = arith.subf %cst, %7 : f32
    %c0_4 = arith.constant 0 : index
    %c0_5 = arith.constant 0 : index
    %13 = vector.load %arg18[%c0_4, %c0_5] : memref<8x128xf32, #tpu.memory_space<vmem>>, vector<8x128xf32>
    %14 = vector.broadcast %12 : f32 to vector<8x128xf32>
    %15 = arith.mulf %14, %13 : vector<8x128xf32>
    %16 = arith.addf %11, %15 : vector<8x128xf32>
    %c0_6 = arith.constant 0 : index
    %c0_7 = arith.constant 0 : index
    %17 = vector.load %arg7[%c0_6, %c0_7] : memref<128x16xf32, #tpu.memory_space<vmem>>, vector<128x16xf32>
    %cst_8 = arith.constant dense<0.000000e+00> : vector<8x16xf32>
    %18 = tpu.matmul %16, %17, %cst_8 {dimension_numbers = #tpu.dot_dimension_numbers<[1], [0], [0], [1], [0, 0, 1, 1], [], []>} : vector<8x128xf32>, vector<128x16xf32>, vector<8x16xf32> -> vector<8x16xf32>
    %c0_9 = arith.constant 0 : index
    %c0_10 = arith.constant 0 : index
    %19 = vector.load %arg16[%c0_9, %c0_10] : memref<8x32xf32, #tpu.memory_space<vmem>>, vector<8x32xf32>
    %c0_11 = arith.constant 0 : index
    %c0_12 = arith.constant 0 : index
    %20 = vector.load %arg17[%c0_11, %c0_12] : memref<8x32xf32, #tpu.memory_space<vmem>>, vector<8x32xf32>
    %c0_13 = arith.constant 0 : index
    %c0_14 = arith.constant 0 : index
    %21 = vector.load %arg8[%c0_13, %c0_14] : memref<1x32xf32, #tpu.memory_space<vmem>>, vector<1x32xf32>
    %22 = vector.broadcast %21 : vector<1x32xf32> to vector<8x32xf32>
    %23 = arith.mulf %19, %22 : vector<8x32xf32>
    %cst_15 = arith.constant dense<0.000000e+00> : vector<8xf32>
    %24 = vector.multi_reduction <add>, %23, %cst_15 [1] : vector<8x32xf32> to vector<8xf32>
    %25 = vector.shape_cast %24 : vector<8xf32> to vector<8x1xf32>
    %c0_16 = arith.constant 0 : index
    %c0_17 = arith.constant 0 : index
    %26 = vector.load %arg3[%c0_16, %c0_17] : memref<8x8xf32, #tpu.memory_space<vmem>>, vector<8x8xf32>
    %27 = vector.broadcast %25 : vector<8x1xf32> to vector<8x8xf32>
    %28 = arith.addf %26, %27 : vector<8x8xf32>
    %cst_18 = arith.constant 0.000000e+00 : f32
    %29 = vector.broadcast %cst_18 : f32 to vector<8x8xf32>
    %30 = arith.maximumf %28, %29 : vector<8x8xf32>
    %cst_19 = arith.constant dense<0xFF800000> : vector<8xf32>
    %31 = vector.multi_reduction <maximumf>, %30, %cst_19 [1] : vector<8x8xf32> to vector<8xf32>
    %32 = vector.shape_cast %31 : vector<8xf32> to vector<8x1xf32>
    %33 = vector.broadcast %32 : vector<8x1xf32> to vector<8x8xf32>
    %34 = arith.subf %30, %33 : vector<8x8xf32>
    %35 = math.exp %34 : vector<8x8xf32>
    %cst_20 = arith.constant dense<0.000000e+00> : vector<8xf32>
    %36 = vector.multi_reduction <add>, %35, %cst_20 [1] : vector<8x8xf32> to vector<8xf32>
    %37 = vector.shape_cast %36 : vector<8xf32> to vector<8x1xf32>
    %38 = vector.broadcast %37 : vector<8x1xf32> to vector<8x8xf32>
    %39 = arith.divf %35, %38 : vector<8x8xf32>
    %40 = vector.shape_cast %39 : vector<8x8xf32> to vector<8x8x1xf32>
    %c0_21 = arith.constant 0 : index
    %c0_22 = arith.constant 0 : index
    %c0_23 = arith.constant 0 : index
    %41 = vector.load %arg4[%c0_21, %c0_22, %c0_23] : memref<8x8x64xf32, #tpu.memory_space<vmem>>, vector<8x8x64xf32>
    %42 = vector.broadcast %40 : vector<8x8x1xf32> to vector<8x8x64xf32>
    %43 = arith.mulf %42, %41 : vector<8x8x64xf32>
    %cst_24 = arith.constant dense<0.000000e+00> : vector<8x64xf32>
    %44 = vector.multi_reduction <add>, %43, %cst_24 [1] : vector<8x8x64xf32> to vector<8x64xf32>
    %c0_25 = arith.constant 0 : index
    %c0_26 = arith.constant 0 : index
    %45 = vector.load %arg9[%c0_25, %c0_26] : memref<64x128xf32, #tpu.memory_space<vmem>>, vector<64x128xf32>
    %cst_27 = arith.constant dense<0.000000e+00> : vector<8x128xf32>
    %46 = tpu.matmul %44, %45, %cst_27 {dimension_numbers = #tpu.dot_dimension_numbers<[1], [0], [0], [1], [0, 0, 1, 1], [], []>} : vector<8x64xf32>, vector<64x128xf32>, vector<8x128xf32> -> vector<8x128xf32>
    %c0_28 = arith.constant 0 : index
    %c0_29 = arith.constant 0 : index
    %47 = vector.load %arg10[%c0_28, %c0_29] : memref<16x128xf32, #tpu.memory_space<vmem>>, vector<16x128xf32>
    %cst_30 = arith.constant dense<0.000000e+00> : vector<8x128xf32>
    %48 = tpu.matmul %18, %47, %cst_30 {dimension_numbers = #tpu.dot_dimension_numbers<[1], [0], [0], [1], [0, 0, 1, 1], [], []>} : vector<8x16xf32>, vector<16x128xf32>, vector<8x128xf32> -> vector<8x128xf32>
    %49 = arith.addf %46, %48 : vector<8x128xf32>
    %c0_31 = arith.constant 0 : index
    %c0_32 = arith.constant 0 : index
    %50 = vector.load %arg11[%c0_31, %c0_32] : memref<32x128xf32, #tpu.memory_space<vmem>>, vector<32x128xf32>
    %cst_33 = arith.constant dense<0.000000e+00> : vector<8x128xf32>
    %51 = tpu.matmul %19, %50, %cst_33 {dimension_numbers = #tpu.dot_dimension_numbers<[1], [0], [0], [1], [0, 0, 1, 1], [], []>} : vector<8x32xf32>, vector<32x128xf32>, vector<8x128xf32> -> vector<8x128xf32>
    %52 = arith.addf %49, %51 : vector<8x128xf32>
    %c0_34 = arith.constant 0 : index
    %c0_35 = arith.constant 0 : index
    %53 = vector.load %arg12[%c0_34, %c0_35] : memref<1x128xf32, #tpu.memory_space<vmem>>, vector<1x128xf32>
    %54 = vector.broadcast %53 : vector<1x128xf32> to vector<8x128xf32>
    %55 = arith.addf %52, %54 : vector<8x128xf32>
    %56 = vector.extract_strided_slice %55 {offsets = [0, 0], sizes = [8, 32], strides = [1, 1]} : vector<8x128xf32> to vector<8x32xf32>
    %57 = arith.negf %56 : vector<8x32xf32>
    %58 = math.exp %57 : vector<8x32xf32>
    %cst_36 = arith.constant 1.000000e+00 : f32
    %59 = vector.broadcast %cst_36 : f32 to vector<8x32xf32>
    %60 = arith.addf %59, %58 : vector<8x32xf32>
    %61 = arith.divf %59, %60 : vector<8x32xf32>
    %62 = vector.extract_strided_slice %55 {offsets = [0, 32], sizes = [8, 32], strides = [1, 1]} : vector<8x128xf32> to vector<8x32xf32>
    %63 = arith.negf %62 : vector<8x32xf32>
    %64 = math.exp %63 : vector<8x32xf32>
    %cst_37 = arith.constant 1.000000e+00 : f32
    %65 = vector.broadcast %cst_37 : f32 to vector<8x32xf32>
    %66 = arith.addf %65, %64 : vector<8x32xf32>
    %67 = arith.divf %65, %66 : vector<8x32xf32>
    %68 = vector.extract_strided_slice %55 {offsets = [0, 64], sizes = [8, 32], strides = [1, 1]} : vector<8x128xf32> to vector<8x32xf32>
    %69 = math.tanh %68 : vector<8x32xf32>
    %70 = vector.extract_strided_slice %55 {offsets = [0, 96], sizes = [8, 32], strides = [1, 1]} : vector<8x128xf32> to vector<8x32xf32>
    %71 = arith.negf %70 : vector<8x32xf32>
    %72 = math.exp %71 : vector<8x32xf32>
    %cst_38 = arith.constant 1.000000e+00 : f32
    %73 = vector.broadcast %cst_38 : f32 to vector<8x32xf32>
    %74 = arith.addf %73, %72 : vector<8x32xf32>
    %75 = arith.divf %73, %74 : vector<8x32xf32>
    %76 = arith.mulf %67, %20 : vector<8x32xf32>
    %77 = arith.mulf %61, %69 : vector<8x32xf32>
    %78 = arith.addf %76, %77 : vector<8x32xf32>
    %79 = math.tanh %78 : vector<8x32xf32>
    %80 = arith.mulf %75, %79 : vector<8x32xf32>
    %c0_39 = arith.constant 0 : index
    %c0_40 = arith.constant 0 : index
    %81 = vector.load %arg16[%c0_39, %c0_40] : memref<8x32xf32, #tpu.memory_space<vmem>>, vector<8x32xf32>
    tpu.vector_store %arg16[%c0_39, %c0_40], %80 {strides = array<i32>} : memref<8x32xf32, #tpu.memory_space<vmem>>, vector<8x32xf32>,
    %c0_41 = arith.constant 0 : index
    %c0_42 = arith.constant 0 : index
    %82 = vector.load %arg17[%c0_41, %c0_42] : memref<8x32xf32, #tpu.memory_space<vmem>>, vector<8x32xf32>
    tpu.vector_store %arg17[%c0_41, %c0_42], %78 {strides = array<i32>} : memref<8x32xf32, #tpu.memory_space<vmem>>, vector<8x32xf32>,
    %c0_43 = arith.constant 0 : index
    %c0_44 = arith.constant 0 : index
    %83 = vector.load %arg13[%c0_43, %c0_44] : memref<32x128xf32, #tpu.memory_space<vmem>>, vector<32x128xf32>
    %cst_45 = arith.constant dense<0.000000e+00> : vector<8x128xf32>
    %84 = tpu.matmul %80, %83, %cst_45 {dimension_numbers = #tpu.dot_dimension_numbers<[1], [0], [0], [1], [0, 0, 1, 1], [], []>} : vector<8x32xf32>, vector<32x128xf32>, vector<8x128xf32> -> vector<8x128xf32>
    %c0_46 = arith.constant 0 : index
    %c0_47 = arith.constant 0 : index
    %85 = vector.load %arg14[%c0_46, %c0_47] : memref<1x128xf32, #tpu.memory_space<vmem>>, vector<1x128xf32>
    %86 = vector.broadcast %85 : vector<1x128xf32> to vector<8x128xf32>
    %87 = arith.addf %84, %86 : vector<8x128xf32>
    %c0_48 = arith.constant 0 : index
    %c0_49 = arith.constant 0 : index
    %c0_50 = arith.constant 0 : index
    %88 = vector.load %arg15[%c0_48, %c0_49, %c0_50] : memref<1x8x128xf32, #tpu.memory_space<vmem>>, vector<1x8x128xf32>
    %89 = vector.shape_cast %88 : vector<1x8x128xf32> to vector<8x128xf32>
    %90 = vector.shape_cast %87 : vector<8x128xf32> to vector<1x8x128xf32>
    tpu.vector_store %arg15[%c0_48, %c0_49, %c0_50], %90 {strides = array<i32>} : memref<1x8x128xf32, #tpu.memory_space<vmem>>, vector<1x8x128xf32>,
    %cst_51 = arith.constant dense<0xFF800000> : vector<8xf32>
    %91 = vector.multi_reduction <maximumf>, %87, %cst_51 [1] : vector<8x128xf32> to vector<8xf32>
    %92 = vector.shape_cast %91 : vector<8xf32> to vector<8x1xf32>
    %93 = tpu.iota {dimensions = array<i32: 1>} : vector<8x128xi32>
    %94 = vector.broadcast %92 : vector<8x1xf32> to vector<8x128xf32>
    %95 = arith.cmpf oeq, %87, %94 : vector<8x128xf32>
    %c128_i32 = arith.constant 128 : i32
    %96 = vector.broadcast %c128_i32 : i32 to vector<8x128xi32>
    %97 = arith.select %95, %93, %96 : vector<8x128xi1>, vector<8x128xi32>
    %cst_52 = arith.constant dense<2147483647> : vector<8xi32>
    %98 = vector.multi_reduction <minsi>, %97, %cst_52 [1] : vector<8x128xi32> to vector<8xi32>
    %99 = vector.shape_cast %98 : vector<8xi32> to vector<8x1xi32>
    %100 = vector.broadcast %99 : vector<8x1xi32> to vector<8x128xi32>
    %101 = arith.cmpi eq, %93, %100 : vector<8x128xi32>
    %102 = arith.extui %101 : vector<8x128xi1> to vector<8x128xi32>
    %103 = arith.sitofp %102 : vector<8x128xi32> to vector<8x128xf32>
    %c0_53 = arith.constant 0 : index
    %c0_54 = arith.constant 0 : index
    %104 = vector.load %arg18[%c0_53, %c0_54] : memref<8x128xf32, #tpu.memory_space<vmem>>, vector<8x128xf32>
    tpu.vector_store %arg18[%c0_53, %c0_54], %103 {strides = array<i32>} : memref<8x128xf32, #tpu.memory_space<vmem>>, vector<8x128xf32>,
    return
  }
  func.func @transform_0(%arg0: i32, %arg1: memref<7xi32, #tpu.memory_space<smem>>) -> (i32, i32, i32) {
    %c0_i32 = arith.constant 0 : i32
    %c0_i32_0 = arith.constant 0 : i32
    %c0_i32_1 = arith.constant 0 : i32
    return %arg0, %c0_i32, %c0_i32_0 : i32, i32, i32
  }
  func.func @transform_1(%arg0: i32, %arg1: memref<7xi32, #tpu.memory_space<smem>>) -> (i32, i32) {
    %c0_i32 = arith.constant 0 : i32
    %c0_i32_0 = arith.constant 0 : i32
    %c0_i32_1 = arith.constant 0 : i32
    return %c0_i32, %c0_i32_0 : i32, i32
  }
  func.func @transform_2(%arg0: i32, %arg1: memref<7xi32, #tpu.memory_space<smem>>) -> (i32, i32, i32) {
    %c0_i32 = arith.constant 0 : i32
    %c0_i32_0 = arith.constant 0 : i32
    %c0_i32_1 = arith.constant 0 : i32
    %c0_i32_2 = arith.constant 0 : i32
    return %c0_i32, %c0_i32_0, %c0_i32_1 : i32, i32, i32
  }
  func.func @transform_3(%arg0: i32, %arg1: memref<7xi32, #tpu.memory_space<smem>>) -> (i32, i32) {
    %c0_i32 = arith.constant 0 : i32
    %c0_i32_0 = arith.constant 0 : i32
    %c0_i32_1 = arith.constant 0 : i32
    return %c0_i32, %c0_i32_0 : i32, i32
  }
  func.func @transform_4(%arg0: i32, %arg1: memref<7xi32, #tpu.memory_space<smem>>) -> (i32, i32) {
    %c0_i32 = arith.constant 0 : i32
    %c0_i32_0 = arith.constant 0 : i32
    %c0_i32_1 = arith.constant 0 : i32
    return %c0_i32, %c0_i32_0 : i32, i32
  }
  func.func @transform_5(%arg0: i32, %arg1: memref<7xi32, #tpu.memory_space<smem>>) -> (i32, i32) {
    %c0_i32 = arith.constant 0 : i32
    %c0_i32_0 = arith.constant 0 : i32
    %c0_i32_1 = arith.constant 0 : i32
    return %c0_i32, %c0_i32_0 : i32, i32
  }
  func.func @transform_6(%arg0: i32, %arg1: memref<7xi32, #tpu.memory_space<smem>>) -> (i32, i32) {
    %c0_i32 = arith.constant 0 : i32
    %c0_i32_0 = arith.constant 0 : i32
    %c0_i32_1 = arith.constant 0 : i32
    return %c0_i32, %c0_i32_0 : i32, i32
  }
  func.func @transform_7(%arg0: i32, %arg1: memref<7xi32, #tpu.memory_space<smem>>) -> (i32, i32) {
    %c0_i32 = arith.constant 0 : i32
    %c0_i32_0 = arith.constant 0 : i32
    %c0_i32_1 = arith.constant 0 : i32
    return %c0_i32, %c0_i32_0 : i32, i32
  }
  func.func @transform_8(%arg0: i32, %arg1: memref<7xi32, #tpu.memory_space<smem>>) -> (i32, i32) {
    %c0_i32 = arith.constant 0 : i32
    %c0_i32_0 = arith.constant 0 : i32
    %c0_i32_1 = arith.constant 0 : i32
    return %c0_i32, %c0_i32_0 : i32, i32
  }
  func.func @transform_9(%arg0: i32, %arg1: memref<7xi32, #tpu.memory_space<smem>>) -> (i32, i32) {
    %c0_i32 = arith.constant 0 : i32
    %c0_i32_0 = arith.constant 0 : i32
    %c0_i32_1 = arith.constant 0 : i32
    return %c0_i32, %c0_i32_0 : i32, i32
  }
  func.func @transform_10(%arg0: i32, %arg1: memref<7xi32, #tpu.memory_space<smem>>) -> (i32, i32) {
    %c0_i32 = arith.constant 0 : i32
    %c0_i32_0 = arith.constant 0 : i32
    %c0_i32_1 = arith.constant 0 : i32
    return %c0_i32, %c0_i32_0 : i32, i32
  }
  func.func @transform_11(%arg0: i32, %arg1: memref<7xi32, #tpu.memory_space<smem>>) -> (i32, i32) {
    %c0_i32 = arith.constant 0 : i32
    %c0_i32_0 = arith.constant 0 : i32
    %c0_i32_1 = arith.constant 0 : i32
    return %c0_i32, %c0_i32_0 : i32, i32
  }
  func.func @transform_12(%arg0: i32, %arg1: memref<7xi32, #tpu.memory_space<smem>>) -> (i32, i32) {
    %c0_i32 = arith.constant 0 : i32
    %c0_i32_0 = arith.constant 0 : i32
    %c0_i32_1 = arith.constant 0 : i32
    return %c0_i32, %c0_i32_0 : i32, i32
  }
  func.func @transform_13(%arg0: i32, %arg1: memref<7xi32, #tpu.memory_space<smem>>) -> (i32, i32, i32) {
    %c0_i32 = arith.constant 0 : i32
    %c0_i32_0 = arith.constant 0 : i32
    %c0_i32_1 = arith.constant 0 : i32
    return %arg0, %c0_i32, %c0_i32_0 : i32, i32, i32
  }
}

</mosaic_0001>

<llo_original>
// kernel: seq2seq_forward.2
$region0: #{seq2seq_forward.2}
  #allocation0 [shape = 'u32[]', space=smem, size = 0x4, offset = 0x4, fixed_abs, tag = 'smem constant byte address 0x4 - core index']
  #allocation1 [shape = 'u32[144,128]{1,0:T(1,128)}', space=vmem, size = 0x12000, scoped, tag = 'internal scratch']
  #allocation2 [shape = 'f32[8,32]{1,0:T(8,128)}', space=vmem, size = 0x1000, scoped, tag = 'scratch operand']
  #allocation3 [shape = 'f32[8,32]{1,0:T(8,128)}', space=vmem, size = 0x1000, scoped, tag = 'scratch operand']
  #allocation4 [shape = 'f32[8,32]{1,0:T(8,128)}', space=vmem, size = 0x1000, scoped, tag = 'scratch operand']
  #allocation5 [shape = 'f32[8,32]{1,0:T(8,128)}', space=vmem, size = 0x1000, scoped, tag = 'scratch operand']
  %s0 = inlined_call_operand.vmem [shape: f32[8,8,16], index: 0, kind: input, shape index: {}, may-alias: {0,1}]
  %s1 = inlined_call_operand.vmem [shape: f32[8,8,16], index: 1, kind: input, shape index: {}, may-alias: {0,1}]
  %s2 = inlined_call_operand.vmem [shape: f32[16,128], index: 2, kind: input, shape index: {}]
  %s3 = inlined_call_operand.vmem [shape: f32[32,128], index: 3, kind: input, shape index: {}]
  %s4 = inlined_call_operand.vmem [shape: f32[1,128], index: 4, kind: input, shape index: {}]
  %s5 = inlined_call_operand.vmem [shape: f32[16,128], index: 5, kind: input, shape index: {}]
  %s6 = inlined_call_operand.vmem [shape: f32[32,128], index: 6, kind: input, shape index: {}]
  %s7 = inlined_call_operand.vmem [shape: f32[1,128], index: 7, kind: input, shape index: {}]
  %s8 = inlined_call_operand.vmem [shape: f32[32,32], index: 8, kind: input, shape index: {}]
  %s9 = inlined_call_operand.vmem [shape: f32[32,32], index: 9, kind: input, shape index: {}]
  %s10 = inlined_call_operand.vmem [shape: f32[1,32], index: 10, kind: input, shape index: {}]
  %s11 = inlined_call_operand.vmem [shape: f32[32,32], index: 11, kind: input, shape index: {}]
  %s12 = inlined_call_operand.vmem [shape: f32[32,32], index: 12, kind: input, shape index: {}]
  %s13 = inlined_call_operand.vmem [shape: f32[1,32], index: 13, kind: input, shape index: {}]
  %s14 = inlined_call_operand.vmem [shape: f32[8,8,32], index: 14, kind: output, shape index: {0}]
  %s15 = inlined_call_operand.vmem [shape: f32[8,8,32], index: 15, kind: output, shape index: {1}]
  %s16 = inlined_call_operand.vmem [shape: f32[8,32], index: 16, kind: output, shape index: {2}]
  %s17 = inlined_call_operand.vmem [shape: f32[8,32], index: 17, kind: output, shape index: {3}]
  %18 = xla_tuple %s14, %s15, %s16, %s17
  %s19 = sld [smem:[#allocation0]]
  $region121: #{seq2seq_forward.2} parent=0
    _
  %s21 = ssub.s32 1, %s19
  %s22 = scalar_select 0, %s21, %s19
  loop: start=0, step=1, limit=10
  $region2: #{seq2seq_forward.2} parent=0 // loop_pre_header
    _
  $region3: #{seq2seq_forward.2} parent=0 // loop_header
    %s24 = sphi 0, %s28
    %p25 = scmp.ge.s32.totalorder %s24, 10
    %s34 = sphi 0, %s36
    %s37 = sphi 0, %s34
    %s38 = sphi 0, %s37
    %s54 = sphi 0, %s38
    %s62 = sphi 0, %s64
    %s65 = sphi 0, %s62
    %s66 = sphi 0, %s65
    %s82 = sphi 0, %s66
    %s86 = sphi 0, %s86
    %s88 = sphi 0, %s86
    %s89 = sphi 0, %s88
    %s103 = sphi 0, %s89
    %s107 = sphi 0, %s107
    %s109 = sphi 0, %s107
    %s110 = sphi 0, %s109
    %s124 = sphi 0, %s110
    %s128 = sphi 0, %s128
    %s130 = sphi 0, %s128
    %s131 = sphi 0, %s130
    %s145 = sphi 0, %s131
    %s149 = sphi 0, %s149
    %s151 = sphi 0, %s149
    %s152 = sphi 0, %s151
    %s166 = sphi 0, %s152
    %s170 = sphi 0, %s170
    %s172 = sphi 0, %s170
    %s173 = sphi 0, %s172
    %s187 = sphi 0, %s173
    %s191 = sphi 0, %s191
    %s193 = sphi 0, %s191
    %s194 = sphi 0, %s193
    %s208 = sphi 0, %s194
    %s212 = sphi 0, %s212
    %s214 = sphi 0, %s212
    %s215 = sphi 0, %s214
    %s229 = sphi 0, %s215
    %s233 = sphi 0, %s233
    %s235 = sphi 0, %s233
    %s236 = sphi 0, %s235
    %s250 = sphi 0, %s236
    %s254 = sphi 0, %s254
    %s256 = sphi 0, %s254
    %s257 = sphi 0, %s256
    %s271 = sphi 0, %s257
    %s275 = sphi 0, %s275
    %s277 = sphi 0, %s275
    %s278 = sphi 0, %s277
    %s292 = sphi 0, %s278
    %s296 = sphi 0, %s296
    %s298 = sphi 0, %s296
    %s299 = sphi 0, %s298
    %s313 = sphi 0, %s299
    %s317 = sphi 0, %s317
    %s319 = sphi 0, %s317
    %s320 = sphi 0, %s319
    %s334 = sphi 0, %s320
    %s340 = sphi 0, %s342
    %s343 = sphi 0, %s340
    %s344 = sphi 0, %s343
    %s360 = sphi 0, %s344
    %s368 = sphi 0, %s370
    %s371 = sphi 0, %s368
    %s372 = sphi 0, %s371
    %s388 = sphi 0, %s372
    %s392 = sphi 0, %s392
    %s394 = sphi 0, %s392
    %s395 = sphi 0, %s394
    %s409 = sphi 0, %s395
    %s413 = sphi 0, %s413
    %s415 = sphi 0, %s413
    %s416 = sphi 0, %s415
    %s430 = sphi 0, %s416
  $region4: #{seq2seq_forward.2} parent=0 // loop_header_branch
    %27 = sbr.rel (%p25) target = $region8
  $region5: #{seq2seq_forward.2} parent=0 // loop_body
    %s29 = ssub.s32 %s24, 1
    %s30 = ssub.s32 %s24, 2
    %s31 = sadd.s32 %s24, 1
    %s32 = ssub.s32 %s24, %s31
    %p33 = scmp.eq.s32.totalorder %s32, 0
    %s35 = sadd.s32 %s34, 1
    %s36 = scalar_select %p33, %s34, %s35
    %p39 = pneg %p33
    %p40 = scmp.eq.s32.totalorder %s24, 7
    %p41 = por %p39, %p40
    %p42 = scmp.ne.s32.totalorder %s34, %s37
    %p43 = scmp.eq.s32.totalorder %s24, 0
    %p44 = por %p42, %p43
    %p45 = scmp.ne.s32.totalorder %s34, %s37
    %p46 = scmp.eq.s32.totalorder %s29, 7
    %p47 = por %p45, %p46
    %p48 = scmp.ne.s32.totalorder %s37, %s38
    %p49 = scmp.eq.s32.totalorder %s29, 0
    %p50 = por %p48, %p49
    %p51 = scmp.ne.s32.totalorder %s37, %s38
    %p52 = scmp.eq.s32.totalorder %s30, 7
    %p53 = por %p51, %p52
    %p55 = scmp.ne.s32.totalorder %s38, %s54
    %p56 = scmp.eq.s32.totalorder %s30, 0
    %p57 = por %p55, %p56
    %s58 = ssub.s32 7, %s24
    %s59 = ssub.s32 7, %s31
    %s60 = ssub.s32 %s58, %s59
    %p61 = scmp.eq.s32.totalorder %s60, 0
    %s63 = sadd.s32 %s62, 1
    %s64 = scalar_select %p61, %s62, %s63
    %p67 = pneg %p61
    %p68 = scmp.eq.s32.totalorder %s24, 7
    %p69 = por %p67, %p68
    %p70 = scmp.ne.s32.totalorder %s62, %s65
    %p71 = scmp.eq.s32.totalorder %s24, 0
    %p72 = por %p70, %p71
    %p73 = scmp.ne.s32.totalorder %s62, %s65
    %p74 = scmp.eq.s32.totalorder %s29, 7
    %p75 = por %p73, %p74
    %p76 = scmp.ne.s32.totalorder %s65, %s66
    %p77 = scmp.eq.s32.totalorder %s29, 0
    %p78 = por %p76, %p77
    %p79 = scmp.ne.s32.totalorder %s65, %s66
    %p80 = scmp.eq.s32.totalorder %s30, 7
    %p81 = por %p79, %p80
    %p83 = scmp.ne.s32.totalorder %s66, %s82
    %p84 = scmp.eq.s32.totalorder %s30, 0
    %p85 = por %p83, %p84
    %s87 = sadd.s32 %s86, 1
    %p90 = scmp.eq.s32.totalorder %s24, 7
    %p91 = scmp.ne.s32.totalorder %s86, %s88
    %p92 = scmp.eq.s32.totalorder %s24, 0
    %p93 = por %p91, %p92
    %p94 = scmp.ne.s32.totalorder %s86, %s88
    %p95 = scmp.eq.s32.totalorder %s29, 7
    %p96 = por %p94, %p95
    %p97 = scmp.ne.s32.totalorder %s88, %s89
    %p98 = scmp.eq.s32.totalorder %s29, 0
    %p99 = por %p97, %p98
    %p100 = scmp.ne.s32.totalorder %s88, %s89
    %p101 = scmp.eq.s32.totalorder %s30, 7
    %p102 = por %p100, %p101
    %p104 = scmp.ne.s32.totalorder %s89, %s103
    %p105 = scmp.eq.s32.totalorder %s30, 0
    %p106 = por %p104, %p105
    %s108 = sadd.s32 %s107, 1
    %p111 = scmp.eq.s32.totalorder %s24, 7
    %p112 = scmp.ne.s32.totalorder %s107, %s109
    %p113 = scmp.eq.s32.totalorder %s24, 0
    %p114 = por %p112, %p113
    %p115 = scmp.ne.s32.totalorder %s107, %s109
    %p116 = scmp.eq.s32.totalorder %s29, 7
    %p117 = por %p115, %p116
    %p118 = scmp.ne.s32.totalorder %s109, %s110
    %p119 = scmp.eq.s32.totalorder %s29, 0
    %p120 = por %p118, %p119
    %p121 = scmp.ne.s32.totalorder %s109, %s110
    %p122 = scmp.eq.s32.totalorder %s30, 7
    %p123 = por %p121, %p122
    %p125 = scmp.ne.s32.totalorder %s110, %s124
    %p126 = scmp.eq.s32.totalorder %s30, 0
    %p127 = por %p125, %p126
    %s129 = sadd.s32 %s128, 1
    %p132 = scmp.eq.s32.totalorder %s24, 7
    %p133 = scmp.ne.s32.totalorder %s128, %s130
    %p134 = scmp.eq.s32.totalorder %s24, 0
    %p135 = por %p133, %p134
    %p136 = scmp.ne.s32.totalorder %s128, %s130
    %p137 = scmp.eq.s32.totalorder %s29, 7
    %p138 = por %p136, %p137
    %p139 = scmp.ne.s32.totalorder %s130, %s131
    %p140 = scmp.eq.s32.totalorder %s29, 0
    %p141 = por %p139, %p140
    %p142 = scmp.ne.s32.totalorder %s130, %s131
    %p143 = scmp.eq.s32.totalorder %s30, 7
    %p144 = por %p142, %p143
    %p146 = scmp.ne.s32.totalorder %s131, %s145
    %p147 = scmp.eq.s32.totalorder %s30, 0
    %p148 = por %p146, %p147
    %s150 = sadd.s32 %s149, 1
    %p153 = scmp.eq.s32.totalorder %s24, 7
    %p154 = scmp.ne.s32.totalorder %s149, %s151
    %p155 = scmp.eq.s32.totalorder %s24, 0
    %p156 = por %p154, %p155
    %p157 = scmp.ne.s32.totalorder %s149, %s151
    %p158 = scmp.eq.s32.totalorder %s29, 7
    %p159 = por %p157, %p158
    %p160 = scmp.ne.s32.totalorder %s151, %s152
    %p161 = scmp.eq.s32.totalorder %s29, 0
    %p162 = por %p160, %p161
    %p163 = scmp.ne.s32.totalorder %s151, %s152
    %p164 = scmp.eq.s32.totalorder %s30, 7
    %p165 = por %p163, %p164
    %p167 = scmp.ne.s32.totalorder %s152, %s166
    %p168 = scmp.eq.s32.totalorder %s30, 0
    %p169 = por %p167, %p168
    %s171 = sadd.s32 %s170, 1
    %p174 = scmp.eq.s32.totalorder %s24, 7
    %p175 = scmp.ne.s32.totalorder %s170, %s172
    %p176 = scmp.eq.s32.totalorder %s24, 0
    %p177 = por %p175, %p176
    %p178 = scmp.ne.s32.totalorder %s170, %s172
    %p179 = scmp.eq.s32.totalorder %s29, 7
    %p180 = por %p178, %p179
    %p181 = scmp.ne.s32.totalorder %s172, %s173
    %p182 = scmp.eq.s32.totalorder %s29, 0
    %p183 = por %p181, %p182
    %p184 = scmp.ne.s32.totalorder %s172, %s173
    %p185 = scmp.eq.s32.totalorder %s30, 7
    %p186 = por %p184, %p185
    %p188 = scmp.ne.s32.totalorder %s173, %s187
    %p189 = scmp.eq.s32.totalorder %s30, 0
    %p190 = por %p188, %p189
    %s192 = sadd.s32 %s191, 1
    %p195 = scmp.eq.s32.totalorder %s24, 7
    %p196 = scmp.ne.s32.totalorder %s191, %s193
    %p197 = scmp.eq.s32.totalorder %s24, 0
    %p198 = por %p196, %p197
    %p199 = scmp.ne.s32.totalorder %s191, %s193
    %p200 = scmp.eq.s32.totalorder %s29, 7
    %p201 = por %p199, %p200
    %p202 = scmp.ne.s32.totalorder %s193, %s194
    %p203 = scmp.eq.s32.totalorder %s29, 0
    %p204 = por %p202, %p203
    %p205 = scmp.ne.s32.totalorder %s193, %s194
    %p206 = scmp.eq.s32.totalorder %s30, 7
    %p207 = por %p205, %p206
    %p209 = scmp.ne.s32.totalorder %s194, %s208
    %p210 = scmp.eq.s32.totalorder %s30, 0
    %p211 = por %p209, %p210
    %s213 = sadd.s32 %s212, 1
    %p216 = scmp.eq.s32.totalorder %s24, 7
    %p217 = scmp.ne.s32.totalorder %s212, %s214
    %p218 = scmp.eq.s32.totalorder %s24, 0
    %p219 = por %p217, %p218
    %p220 = scmp.ne.s32.totalorder %s212, %s214
    %p221 = scmp.eq.s32.totalorder %s29, 7
    %p222 = por %p220, %p221
    %p223 = scmp.ne.s32.totalorder %s214, %s215
    %p224 = scmp.eq.s32.totalorder %s29, 0
    %p225 = por %p223, %p224
    %p226 = scmp.ne.s32.totalorder %s214, %s215
    %p227 = scmp.eq.s32.totalorder %s30, 7
    %p228 = por %p226, %p227
    %p230 = scmp.ne.s32.totalorder %s215, %s229
    %p231 = scmp.eq.s32.totalorder %s30, 0
    %p232 = por %p230, %p231
    %s234 = sadd.s32 %s233, 1
    %p237 = scmp.eq.s32.totalorder %s24, 7
    %p238 = scmp.ne.s32.totalorder %s233, %s235
    %p239 = scmp.eq.s32.totalorder %s24, 0
    %p240 = por %p238, %p239
    %p241 = scmp.ne.s32.totalorder %s233, %s235
    %p242 = scmp.eq.s32.totalorder %s29, 7
    %p243 = por %p241, %p242
    %p244 = scmp.ne.s32.totalorder %s235, %s236
    %p245 = scmp.eq.s32.totalorder %s29, 0
    %p246 = por %p244, %p245
    %p247 = scmp.ne.s32.totalorder %s235, %s236
    %p248 = scmp.eq.s32.totalorder %s30, 7
    %p249 = por %p247, %p248
    %p251 = scmp.ne.s32.totalorder %s236, %s250
    %p252 = scmp.eq.s32.totalorder %s30, 0
    %p253 = por %p251, %p252
    %s255 = sadd.s32 %s254, 1
    %p258 = scmp.eq.s32.totalorder %s24, 7
    %p259 = scmp.ne.s32.totalorder %s254, %s256
    %p260 = scmp.eq.s32.totalorder %s24, 0
    %p261 = por %p259, %p260
    %p262 = scmp.ne.s32.totalorder %s254, %s256
    %p263 = scmp.eq.s32.totalorder %s29, 7
    %p264 = por %p262, %p263
    %p265 = scmp.ne.s32.totalorder %s256, %s257
    %p266 = scmp.eq.s32.totalorder %s29, 0
    %p267 = por %p265, %p266
    %p268 = scmp.ne.s32.totalorder %s256, %s257
    %p269 = scmp.eq.s32.totalorder %s30, 7
    %p270 = por %p268, %p269
    %p272 = scmp.ne.s32.totalorder %s257, %s271
    %p273 = scmp.eq.s32.totalorder %s30, 0
    %p274 = por %p272, %p273
    %s276 = sadd.s32 %s275, 1
    %p279 = scmp.eq.s32.totalorder %s24, 7
    %p280 = scmp.ne.s32.totalorder %s275, %s277
    %p281 = scmp.eq.s32.totalorder %s24, 0
    %p282 = por %p280, %p281
    %p283 = scmp.ne.s32.totalorder %s275, %s277
    %p284 = scmp.eq.s32.totalorder %s29, 7
    %p285 = por %p283, %p284
    %p286 = scmp.ne.s32.totalorder %s277, %s278
    %p287 = scmp.eq.s32.totalorder %s29, 0
    %p288 = por %p286, %p287
    %p289 = scmp.ne.s32.totalorder %s277, %s278
    %p290 = scmp.eq.s32.totalorder %s30, 7
    %p291 = por %p289, %p290
    %p293 = scmp.ne.s32.totalorder %s278, %s292
    %p294 = scmp.eq.s32.totalorder %s30, 0
    %p295 = por %p293, %p294
    %s297 = sadd.s32 %s296, 1
    %p300 = scmp.eq.s32.totalorder %s24, 7
    %p301 = scmp.ne.s32.totalorder %s296, %s298
    %p302 = scmp.eq.s32.totalorder %s24, 0
    %p303 = por %p301, %p302
    %p304 = scmp.ne.s32.totalorder %s296, %s298
    %p305 = scmp.eq.s32.totalorder %s29, 7
    %p306 = por %p304, %p305
    %p307 = scmp.ne.s32.totalorder %s298, %s299
    %p308 = scmp.eq.s32.totalorder %s29, 0
    %p309 = por %p307, %p308
    %p310 = scmp.ne.s32.totalorder %s298, %s299
    %p311 = scmp.eq.s32.totalorder %s30, 7
    %p312 = por %p310, %p311
    %p314 = scmp.ne.s32.totalorder %s299, %s313
    %p315 = scmp.eq.s32.totalorder %s30, 0
    %p316 = por %p314, %p315
    %s318 = sadd.s32 %s317, 1
    %p321 = scmp.eq.s32.totalorder %s24, 7
    %p322 = scmp.ne.s32.totalorder %s317, %s319
    %p323 = scmp.eq.s32.totalorder %s24, 0
    %p324 = por %p322, %p323
    %p325 = scmp.ne.s32.totalorder %s317, %s319
    %p326 = scmp.eq.s32.totalorder %s29, 7
    %p327 = por %p325, %p326
    %p328 = scmp.ne.s32.totalorder %s319, %s320
    %p329 = scmp.eq.s32.totalorder %s29, 0
    %p330 = por %p328, %p329
    %p331 = scmp.ne.s32.totalorder %s319, %s320
    %p332 = scmp.eq.s32.totalorder %s30, 7
    %p333 = por %p331, %p332
    %p335 = scmp.ne.s32.totalorder %s320, %s334
    %p336 = scmp.eq.s32.totalorder %s30, 0
    %p337 = por %p335, %p336
    %s338 = ssub.s32 %s24, %s31
    %p339 = scmp.eq.s32.totalorder %s338, 0
    %s341 = sadd.s32 %s340, 1
    %s342 = scalar_select %p339, %s340, %s341
    %p345 = pneg %p339
    %p346 = scmp.eq.s32.totalorder %s24, 7
    %p347 = por %p345, %p346
    %p348 = scmp.ne.s32.totalorder %s340, %s343
    %p349 = scmp.eq.s32.totalorder %s24, 0
    %p350 = por %p348, %p349
    %p351 = scmp.ne.s32.totalorder %s340, %s343
    %p352 = scmp.eq.s32.totalorder %s29, 7
    %p353 = por %p351, %p352
    %p354 = scmp.ne.s32.totalorder %s343, %s344
    %p355 = scmp.eq.s32.totalorder %s29, 0
    %p356 = por %p354, %p355
    %p357 = scmp.ne.s32.totalorder %s343, %s344
    %p358 = scmp.eq.s32.totalorder %s30, 7
    %p359 = por %p357, %p358
    %p361 = scmp.ne.s32.totalorder %s344, %s360
    %p362 = scmp.eq.s32.totalorder %s30, 0
    %p363 = por %p361, %p362
    %s364 = ssub.s32 7, %s24
    %s365 = ssub.s32 7, %s31
    %s366 = ssub.s32 %s364, %s365
    %p367 = scmp.eq.s32.totalorder %s366, 0
    %s369 = sadd.s32 %s368, 1
    %s370 = scalar_select %p367, %s368, %s369
    %p373 = pneg %p367
    %p374 = scmp.eq.s32.totalorder %s24, 7
    %p375 = por %p373, %p374
    %p376 = scmp.ne.s32.totalorder %s368, %s371
    %p377 = scmp.eq.s32.totalorder %s24, 0
    %p378 = por %p376, %p377
    %p379 = scmp.ne.s32.totalorder %s368, %s371
    %p380 = scmp.eq.s32.totalorder %s29, 7
    %p381 = por %p379, %p380
    %p382 = scmp.ne.s32.totalorder %s371, %s372
    %p383 = scmp.eq.s32.totalorder %s29, 0
    %p384 = por %p382, %p383
    %p385 = scmp.ne.s32.totalorder %s371, %s372
    %p386 = scmp.eq.s32.totalorder %s30, 7
    %p387 = por %p385, %p386
    %p389 = scmp.ne.s32.totalorder %s372, %s388
    %p390 = scmp.eq.s32.totalorder %s30, 0
    %p391 = por %p389, %p390
    %s393 = sadd.s32 %s392, 1
    %p396 = scmp.eq.s32.totalorder %s24, 7
    %p397 = scmp.ne.s32.totalorder %s392, %s394
    %p398 = scmp.eq.s32.totalorder %s24, 0
    %p399 = por %p397, %p398
    %p400 = scmp.ne.s32.totalorder %s392, %s394
    %p401 = scmp.eq.s32.totalorder %s29, 7
    %p402 = por %p400, %p401
    %p403 = scmp.ne.s32.totalorder %s394, %s395
    %p404 = scmp.eq.s32.totalorder %s29, 0
    %p405 = por %p403, %p404
    %p406 = scmp.ne.s32.totalorder %s394, %s395
    %p407 = scmp.eq.s32.totalorder %s30, 7
    %p408 = por %p406, %p407
    %p410 = scmp.ne.s32.totalorder %s395, %s409
    %p411 = scmp.eq.s32.totalorder %s30, 0
    %p412 = por %p410, %p411
    %s414 = sadd.s32 %s413, 1
    %p417 = scmp.eq.s32.totalorder %s24, 7
    %p418 = scmp.ne.s32.totalorder %s413, %s415
    %p419 = scmp.eq.s32.totalorder %s24, 0
    %p420 = por %p418, %p419
    %p421 = scmp.ne.s32.totalorder %s413, %s415
    %p422 = scmp.eq.s32.totalorder %s29, 7
    %p423 = por %p421, %p422
    %p424 = scmp.ne.s32.totalorder %s415, %s416
    %p425 = scmp.eq.s32.totalorder %s29, 0
    %p426 = por %p424, %p425
    %p427 = scmp.ne.s32.totalorder %s415, %s416
    %p428 = scmp.eq.s32.totalorder %s30, 7
    %p429 = por %p427, %p428
    %p431 = scmp.ne.s32.totalorder %s416, %s430
    %p432 = scmp.eq.s32.totalorder %s30, 0
    %p433 = por %p431, %p432
    %p434 = scmp.le.s32.totalorder 1, %s24
    %p435 = scmp.lt.s32.totalorder %s24, 9
    %p436 = pnand %p434, %p435
    %p437 = pneg %p436
    // Predicated region
    $region9: #{seq2seq_forward.2} parent=5 // pred_check
      _
    $region10: #{seq2seq_forward.2} parent=5 // pred_check_branch
      %439 = sbr.rel (%p436) target = $region12
    $region11: #{seq2seq_forward.2} parent=5 // pred_region
      %s440 = ssub.s32 %s24, 1
      // Predicated region
      $region13: #{seq2seq_forward.2} parent=11 // pred_check
        %p441 = pneg %p99
      $region14: #{seq2seq_forward.2} parent=11 // pred_check_branch
        %443 = sbr.rel (%p441) target = $region16
      $region15: #{seq2seq_forward.2} parent=11 // pred_region
        _
      $region16: #{seq2seq_forward.2} parent=11 // pred_fallthru
        _
      // Predicated region
      $region17: #{seq2seq_forward.2} parent=11 // pred_check
        %p444 = pneg %p120
      $region18: #{seq2seq_forward.2} parent=11 // pred_check_branch
        %446 = sbr.rel (%p444) target = $region20
      $region19: #{seq2seq_forward.2} parent=11 // pred_region
        _
      $region20: #{seq2seq_forward.2} parent=11 // pred_fallthru
        _
      // Predicated region
      $region21: #{seq2seq_forward.2} parent=11 // pred_check
        %p447 = pneg %p141
      $region22: #{seq2seq_forward.2} parent=11 // pred_check_branch
        %449 = sbr.rel (%p447) target = $region24
      $region23: #{seq2seq_forward.2} parent=11 // pred_region
        _
      $region24: #{seq2seq_forward.2} parent=11 // pred_fallthru
        _
      // Predicated region
      $region25: #{seq2seq_forward.2} parent=11 // pred_check
        %p450 = pneg %p162
      $region26: #{seq2seq_forward.2} parent=11 // pred_check_branch
        %452 = sbr.rel (%p450) target = $region28
      $region27: #{seq2seq_forward.2} parent=11 // pred_region
        _
      $region28: #{seq2seq_forward.2} parent=11 // pred_fallthru
        _
      // Predicated region
      $region29: #{seq2seq_forward.2} parent=11 // pred_check
        %p453 = pneg %p183
      $region30: #{seq2seq_forward.2} parent=11 // pred_check_branch
        %455 = sbr.rel (%p453) target = $region32
      $region31: #{seq2seq_forward.2} parent=11 // pred_region
        _
      $region32: #{seq2seq_forward.2} parent=11 // pred_fallthru
        _
      // Predicated region
      $region33: #{seq2seq_forward.2} parent=11 // pred_check
        %p456 = pneg %p204
      $region34: #{seq2seq_forward.2} parent=11 // pred_check_branch
        %458 = sbr.rel (%p456) target = $region36
      $region35: #{seq2seq_forward.2} parent=11 // pred_region
        _
      $region36: #{seq2seq_forward.2} parent=11 // pred_fallthru
        _
      // Predicated region
      $region37: #{seq2seq_forward.2} parent=11 // pred_check
        %p459 = pneg %p225
      $region38: #{seq2seq_forward.2} parent=11 // pred_check_branch
        %461 = sbr.rel (%p459) target = $region40
      $region39: #{seq2seq_forward.2} parent=11 // pred_region
        _
      $region40: #{seq2seq_forward.2} parent=11 // pred_fallthru
        _
      // Predicated region
      $region41: #{seq2seq_forward.2} parent=11 // pred_check
        %p462 = pneg %p246
      $region42: #{seq2seq_forward.2} parent=11 // pred_check_branch
        %464 = sbr.rel (%p462) target = $region44
      $region43: #{seq2seq_forward.2} parent=11 // pred_region
        _
      $region44: #{seq2seq_forward.2} parent=11 // pred_fallthru
        _
      // Predicated region
      $region45: #{seq2seq_forward.2} parent=11 // pred_check
        %p465 = pneg %p267
      $region46: #{seq2seq_forward.2} parent=11 // pred_check_branch
        %467 = sbr.rel (%p465) target = $region48
      $region47: #{seq2seq_forward.2} parent=11 // pred_region
        _
      $region48: #{seq2seq_forward.2} parent=11 // pred_fallthru
        _
      // Predicated region
      $region49: #{seq2seq_forward.2} parent=11 // pred_check
        %p468 = pneg %p288
      $region50: #{seq2seq_forward.2} parent=11 // pred_check_branch
        %470 = sbr.rel (%p468) target = $region52
      $region51: #{seq2seq_forward.2} parent=11 // pred_region
        _
      $region52: #{seq2seq_forward.2} parent=11 // pred_fallthru
        _
      // Predicated region
      $region53: #{seq2seq_forward.2} parent=11 // pred_check
        %p471 = pneg %p309
      $region54: #{seq2seq_forward.2} parent=11 // pred_check_branch
        %473 = sbr.rel (%p471) target = $region56
      $region55: #{seq2seq_forward.2} parent=11 // pred_region
        _
      $region56: #{seq2seq_forward.2} parent=11 // pred_fallthru
        _
      // Predicated region
      $region57: #{seq2seq_forward.2} parent=11 // pred_check
        %p474 = pneg %p330
      $region58: #{seq2seq_forward.2} parent=11 // pred_check_branch
        %476 = sbr.rel (%p474) target = $region60
      $region59: #{seq2seq_forward.2} parent=11 // pred_region
        _
      $region60: #{seq2seq_forward.2} parent=11 // pred_fallthru
        _
    $region12: #{seq2seq_forward.2} parent=5 // pred_fallthru
      _
    %p477 = scmp.lt.s32.totalorder %s24, 8
    // Predicated region
    $region61: #{seq2seq_forward.2} parent=5 // pred_check
      %p478 = pneg %p477
    $region62: #{seq2seq_forward.2} parent=5 // pred_check_branch
      %480 = sbr.rel (%p478) target = $region64
    $region63: #{seq2seq_forward.2} parent=5 // pred_region
      // Predicated region
      $region65: #{seq2seq_forward.2} parent=63 // pred_check
        %p481 = pneg %p44
      $region66: #{seq2seq_forward.2} parent=63 // pred_check_branch
        %483 = sbr.rel (%p481) target = $region68
      $region67: #{seq2seq_forward.2} parent=63 // pred_region
        %p484 = scmp.lt.s32.totalorder %s24, 7
        %s485 = scalar_select %p484, %s24, 7
        %s486 = smul.addr %s485, 8
        %s487 = scalar_lea.vmem %s0, %s486
      $region68: #{seq2seq_forward.2} parent=63 // pred_fallthru
        _
      // Predicated region
      $region69: #{seq2seq_forward.2} parent=63 // pred_check
        %p488 = pneg %p72
      $region70: #{seq2seq_forward.2} parent=63 // pred_check_branch
        %490 = sbr.rel (%p488) target = $region72
      $region71: #{seq2seq_forward.2} parent=63 // pred_region
        %s491 = ssub.s32 7, %s24
        %p492 = scmp.lt.s32.totalorder %s491, 7
        %s493 = scalar_select %p492, %s491, 7
        %s494 = smul.addr %s493, 8
        %s495 = scalar_lea.vmem %s1, %s494
        %s496 = ssub.s32 7, %s24
      $region72: #{seq2seq_forward.2} parent=63 // pred_fallthru
        _
    $region64: #{seq2seq_forward.2} parent=5 // pred_fallthru
      _
    %p497 = scmp.le.s32.totalorder 1, %s24
    %p498 = scmp.lt.s32.totalorder %s24, 9
    %p499 = pnand %p497, %p498
    %p500 = pneg %p499
    // Predicated region
    $region73: #{seq2seq_forward.2} parent=5 // pred_check
      _
    $region74: #{seq2seq_forward.2} parent=5 // pred_check_branch
      %502 = sbr.rel (%p499) target = $region76
    $region75: #{seq2seq_forward.2} parent=5 // pred_region
      %s503 = ssub.s32 %s24, 1
      %p504 = scmp.lt.s32.totalorder %s29, 7
      %s505 = scalar_select %p504, %s29, 7
      %s506 = smul.addr %s505, 8
      %s507 = scalar_lea.vmem %s0, %s506
      %p508 = pneg %p50
      %p509 = pneg %p47
      %s510 = ssub.s32 7, %s29
      %p511 = scmp.lt.s32.totalorder %s510, 7
      %s512 = scalar_select %p511, %s510, 7
      %s513 = smul.addr %s512, 8
      %s514 = scalar_lea.vmem %s1, %s513
      %p515 = pneg %p78
      %p516 = pneg %p75
      %p517 = pneg %p99
      %p518 = pneg %p96
      %p519 = pneg %p120
      %p520 = pneg %p117
      %p521 = pneg %p141
      %p522 = pneg %p138
      %p523 = pneg %p162
      %p524 = pneg %p159
      %p525 = pneg %p183
      %p526 = pneg %p180
      %p527 = pneg %p204
      %p528 = pneg %p201
      %p529 = pneg %p225
      %p530 = pneg %p222
      %p531 = pneg %p246
      %p532 = pneg %p243
      %p533 = pneg %p267
      %p534 = pneg %p264
      %p535 = pneg %p288
      %p536 = pneg %p285
      %p537 = pneg %p309
      %p538 = pneg %p306
      %p539 = pneg %p330
      %p540 = pneg %p327
      %p541 = pneg %p356
      %p542 = pneg %p353
      %p543 = scmp.lt.s32.totalorder %s29, 7
      %s544 = scalar_select %p543, %s29, 7
      %s545 = smul.addr %s544, 8
      %s546 = scalar_lea.vmem %s14, %s545
      %p547 = pneg %p384
      %p548 = pneg %p381
      %s549 = ssub.s32 7, %s29
      %p550 = scmp.lt.s32.totalorder %s549, 7
      %s551 = scalar_select %p550, %s549, 7
      %s552 = smul.addr %s551, 8
      %s553 = scalar_lea.vmem %s15, %s552
      %p554 = pneg %p405
      %p555 = pneg %p402
      %p556 = pneg %p426
      %p557 = pneg %p423
      %p558 = scmp.lt.s32.totalorder %s29, 7
      %s559 = scalar_select %p558, %s29, 7
      %s560 = smul.addr %s559, 8
      %s561 = scalar_lea.vmem %s0, %s560
      %s562 = ssub.s32 7, %s29
      %p563 = scmp.lt.s32.totalorder %s562, 7
      %s564 = scalar_select %p563, %s562, 7
      %s565 = smul.addr %s564, 8
      %s566 = scalar_lea.vmem %s1, %s565
      %s567 = ssub.s32 7, %s29
      %p568 = scmp.lt.s32.totalorder %s29, 7
      %s569 = scalar_select %p568, %s29, 7
      %s570 = smul.addr %s569, 8
      %s571 = scalar_lea.vmem %s14, %s570
      %s572 = ssub.s32 7, %s29
      %p573 = scmp.lt.s32.totalorder %s572, 7
      %s574 = scalar_select %p573, %s572, 7
      %s575 = smul.addr %s574, 8
      %s576 = scalar_lea.vmem %s15, %s575
      %s577 = ssub.s32 7, %s29
      %p578 = scmp.eq.s32.totalorder %s29, 0
      // Predicated region
      $region77: #{seq2seq_forward.2} parent=75 // pred_check
        %p579 = pneg %p578
      $region78: #{seq2seq_forward.2} parent=75 // pred_check_branch
        %581 = sbr.rel (%p579) target = $region80
      $region79: #{seq2seq_forward.2} parent=75 // pred_region
        %vm582 = vcmask 261120
        %583 = vst.msk [vmem:[#allocation2] sm:$0xff] %vm582, 0.0
        %584 = vst.msk [vmem:[#allocation3] sm:$0xff] %vm582, 0.0
        %585 = vst.msk [vmem:[#allocation4] sm:$0xff] %vm582, 0.0
        %586 = vst.msk [vmem:[#allocation5] sm:$0xff] %vm582, 0.0
      $region80: #{seq2seq_forward.2} parent=75 // pred_fallthru
        _
      %v587 = vld [vmem:[%s561] sm:$0xff]
      %v588 = vld [vmem:[#allocation2] sm:$0xff]
      %v589 = vld [vmem:[#allocation3] sm:$0xff]
      %v590 = vld [vmem:[%s2] sm:$0xff]
      %v591 = vld [vmem:[%s2 + $0x8] sm:$0xff]
      %v592 = vld [vmem:[%s3] sm:$0xff]
      %v593 = vld [vmem:[%s3 + $0x8] sm:$0xff]
      %v594 = vld [vmem:[%s3 + $0x10] sm:$0xff]
      %v595 = vld [vmem:[%s3 + $0x18] sm:$0xff]
      %v596 = vld [vmem:[%s4] sm:$0x1]
      %vm597 = vcmask 261120
      %v599 = vsel %vm597, %v588, 0
      %601 = vmatprep.subr.mxu0 0.0
      %602 = vmatpush1.msra.mxu0 %v592
      %603 = vmatprep.subr.mxu0 0.0
      %604 = vmatpush1.msra.mxu0 %v593
      %605 = vmatprep.subr.mxu0 0.0
      %606 = vmatpush1.msra.mxu0 %v594
      %607 = vmatprep.subr.mxu0 0.0
      %608 = vmatpush1.msra.mxu0 %v595
      %609 = vmatprep.subr.mxu0 0.0
      %610 = vmatpush1.msra.mxu0 0.0
      %611 = vmatprep.subr.mxu0 0.0
      %612 = vmatpush1.msra.mxu0 0.0
      %613 = vmatprep.subr.mxu0 0.0
      %614 = vmatpush1.msra.mxu0 0.0
      %615 = vmatprep.subr.mxu0 0.0
      %616 = vmatpush1.msra.mxu0 0.0
      %617 = vmatprep.subr.mxu0 0.0
      %618 = vmatpush1.msra.mxu0 0.0
      %619 = vmatprep.subr.mxu0 0.0
      %620 = vmatpush1.msra.mxu0 0.0
      %621 = vmatprep.subr.mxu0 0.0
      %622 = vmatpush1.msra.mxu0 0.0
      %623 = vmatprep.subr.mxu0 0.0
      %624 = vmatpush1.msra.mxu0 0.0
      %625 = vmatprep.subr.mxu0 0.0
      %626 = vmatpush1.msra.mxu0 0.0
      %627 = vmatprep.subr.mxu0 0.0
      %628 = vmatpush1.msra.mxu0 0.0
      %629 = vmatprep.subr.mxu0 0.0
      %630 = vmatpush1.msra.mxu0 0.0
      %631 = vmatprep.subr.mxu0 0.0
      %632 = vmatpush1.msra.mxu0 0.0
      %633 = vmatprep.subr.mxu0 0.0
      %634 = vmatpush1.msra.mxu0 0.0
      %635 = vmatprep.subr.mxu0 0.0
      %636 = vmatpush1.msra.mxu0 0.0
      %637 = vmatprep.subr.mxu0 0.0
      %638 = vmatpush1.msra.mxu0 0.0
      %639 = vmatprep.subr.mxu0 0.0
      %640 = vmatpush1.msra.mxu0 0.0
      %641 = vmatprep.subr.mxu0 0.0
      %642 = vmatpush1.msra.mxu0 0.0
      %643 = vmatprep.subr.mxu0 0.0
      %644 = vmatpush1.msra.mxu0 0.0
      %645 = vmatprep.subr.mxu0 0.0
      %646 = vmatpush1.msra.mxu0 0.0
      %647 = vmatprep.subr.mxu0 0.0
      %648 = vmatpush1.msra.mxu0 0.0
      %649 = vmatprep.subr.mxu0 0.0
      %650 = vmatpush1.msra.mxu0 0.0
      %651 = vmatprep.subr.mxu0 0.0
      %652 = vmatpush1.msra.mxu0 0.0
      %653 = vmatprep.subr.mxu0 0.0
      %654 = vmatpush1.msra.mxu0 0.0
      %655 = vmatprep.subr.mxu0 0.0
      %656 = vmatpush1.msra.mxu0 0.0
      %657 = vmatprep.subr.mxu0 0.0
      %658 = vmatpush1.msra.mxu0 0.0
      %659 = vmatprep.subr.mxu0 0.0
      %660 = vmatpush1.msra.mxu0 0.0
      %661 = vmatprep.subr.mxu0 0.0
      %662 = vmatpush1.msra.mxu0 0.0
      %663 = vmatprep.subr.mxu0 0.0
      %664 = vmatpush1.msra.mxu0 0.0
      %665 = vmatprep.mubr.f32.mxu0 0.0
      %666 = vmatmul.mubr.f32.gmra.mrb[0].mxu0 %v599
      %v667 = vpop.f32.mrb[0].mxu0
      %v668 = vadd.f32 0.0, %v667
      %v669 = vpop.f32.mrb[0].mxu0
      %670 = vdwg.mxu0
      %vm671 = vcmask 130048
      %v673 = vsel %vm671, %v587, 0
      %675 = vmatprep.subr.mxu0 0.0
      %676 = vmatpush1.msra.mxu0 %v590
      %677 = vmatprep.subr.mxu0 0.0
      %678 = vmatpush1.msra.mxu0 %v591
      %679 = vmatprep.subr.mxu0 0.0
      %680 = vmatpush1.msra.mxu0 0.0
      %681 = vmatprep.subr.mxu0 0.0
      %682 = vmatpush1.msra.mxu0 0.0
      %683 = vmatprep.subr.mxu0 0.0
      %684 = vmatpush1.msra.mxu0 0.0
      %685 = vmatprep.subr.mxu0 0.0
      %686 = vmatpush1.msra.mxu0 0.0
      %687 = vmatprep.subr.mxu0 0.0
      %688 = vmatpush1.msra.mxu0 0.0
      %689 = vmatprep.subr.mxu0 0.0
      %690 = vmatpush1.msra.mxu0 0.0
      %691 = vmatprep.subr.mxu0 0.0
      %692 = vmatpush1.msra.mxu0 0.0
      %693 = vmatprep.subr.mxu0 0.0
      %694 = vmatpush1.msra.mxu0 0.0
      %695 = vmatprep.subr.mxu0 0.0
      %696 = vmatpush1.msra.mxu0 0.0
      %697 = vmatprep.subr.mxu0 0.0
      %698 = vmatpush1.msra.mxu0 0.0
      %699 = vmatprep.subr.mxu0 0.0
      %700 = vmatpush1.msra.mxu0 0.0
      %701 = vmatprep.subr.mxu0 0.0
      %702 = vmatpush1.msra.mxu0 0.0
      %703 = vmatprep.subr.mxu0 0.0
      %704 = vmatpush1.msra.mxu0 0.0
      %705 = vmatprep.subr.mxu0 0.0
      %706 = vmatpush1.msra.mxu0 0.0
      %707 = vmatprep.subr.mxu0 0.0
      %708 = vmatpush1.msra.mxu0 0.0
      %709 = vmatprep.subr.mxu0 0.0
      %710 = vmatpush1.msra.mxu0 0.0
      %711 = vmatprep.subr.mxu0 0.0
      %712 = vmatpush1.msra.mxu0 0.0
      %713 = vmatprep.subr.mxu0 0.0
      %714 = vmatpush1.msra.mxu0 0.0
      %715 = vmatprep.subr.mxu0 0.0
      %716 = vmatpush1.msra.mxu0 0.0
      %717 = vmatprep.subr.mxu0 0.0
      %718 = vmatpush1.msra.mxu0 0.0
      %719 = vmatprep.subr.mxu0 0.0
      %720 = vmatpush1.msra.mxu0 0.0
      %721 = vmatprep.subr.mxu0 0.0
      %722 = vmatpush1.msra.mxu0 0.0
      %723 = vmatprep.subr.mxu0 0.0
      %724 = vmatpush1.msra.mxu0 0.0
      %725 = vmatprep.subr.mxu0 0.0
      %726 = vmatpush1.msra.mxu0 0.0
      %727 = vmatprep.subr.mxu0 0.0
      %728 = vmatpush1.msra.mxu0 0.0
      %729 = vmatprep.subr.mxu0 0.0
      %730 = vmatpush1.msra.mxu0 0.0
      %731 = vmatprep.subr.mxu0 0.0
      %732 = vmatpush1.msra.mxu0 0.0
      %733 = vmatprep.subr.mxu0 0.0
      %734 = vmatpush1.msra.mxu0 0.0
      %735 = vmatprep.subr.mxu0 0.0
      %736 = vmatpush1.msra.mxu0 0.0
      %737 = vmatprep.subr.mxu0 0.0
      %738 = vmatpush1.msra.mxu0 0.0
      %739 = vmatprep.mubr.f32.mxu0 0.0
      %740 = vmatmul.mubr.f32.gmra.mrb[0].mxu0 %v673
      %v741 = vpop.f32.mrb[0].mxu0
      %v742 = vadd.f32 %v668, %v741
      %v743 = vpop.f32.mrb[0].mxu0
      %744 = vdwg.mxu0
      %v746 = vlaneseq
      %v747 = vshrl.u32 %v746, 7
      %v748 = vsub.s32 0, %v747
      %v749 = vrot.slane %v596, %v748
      %v751 = vadd.f32 %v742, %v749
      %v752 = vxor.u32 %v751, 2147483648
      %v753 = vmul.f32 %v752, 1.442695
      %v754 = vpow.pop %v753
      %v755 = vadd.f32 %v754, 1.0
      %v756 = vrcp.pop %v755
      %v757 = vmul.f32 1.0, %v756
      %v758 = vtanh.pop %v751
      %760 = vrot.lane.b32.xlu0 %v589, 32
      %v761 = vpop.permute.xlu0 %760
      %v763 = vmul.f32 %v757, %v761
      %765 = vrot.lane.b32.xlu0 %v758, 64
      %v766 = vpop.permute.xlu0 %765
      %v768 = vmul.f32 %v757, %v766
      %770 = vrot.lane.b32.xlu0 %v768, 32
      %v771 = vpop.permute.xlu0 %770
      %v773 = vadd.f32 %v763, %v771
      %v774 = vtanh.pop %v773
      %776 = vrot.lane.b32.xlu0 %v774, 64
      %v777 = vpop.permute.xlu0 %776
      %v779 = vmul.f32 %v757, %v777
      %v780 = vld [vmem:[%s566] sm:$0xff]
      %v781 = vld [vmem:[#allocation4] sm:$0xff]
      %v782 = vld [vmem:[#allocation5] sm:$0xff]
      %v783 = vld [vmem:[%s5] sm:$0xff]
      %v784 = vld [vmem:[%s5 + $0x8] sm:$0xff]
      %v785 = vld [vmem:[%s6] sm:$0xff]
      %v786 = vld [vmem:[%s6 + $0x8] sm:$0xff]
      %v787 = vld [vmem:[%s6 + $0x10] sm:$0xff]
      %v788 = vld [vmem:[%s6 + $0x18] sm:$0xff]
      %v789 = vld [vmem:[%s7] sm:$0x1]
      %v791 = vsel %vm597, %v781, 0
      %793 = vmatprep.subr.mxu0 0.0
      %794 = vmatpush1.msra.mxu0 %v785
      %795 = vmatprep.subr.mxu0 0.0
      %796 = vmatpush1.msra.mxu0 %v786
      %797 = vmatprep.subr.mxu0 0.0
      %798 = vmatpush1.msra.mxu0 %v787
      %799 = vmatprep.subr.mxu0 0.0
      %800 = vmatpush1.msra.mxu0 %v788
      %801 = vmatprep.subr.mxu0 0.0
      %802 = vmatpush1.msra.mxu0 0.0
      %803 = vmatprep.subr.mxu0 0.0
      %804 = vmatpush1.msra.mxu0 0.0
      %805 = vmatprep.subr.mxu0 0.0
      %806 = vmatpush1.msra.mxu0 0.0
      %807 = vmatprep.subr.mxu0 0.0
      %808 = vmatpush1.msra.mxu0 0.0
      %809 = vmatprep.subr.mxu0 0.0
      %810 = vmatpush1.msra.mxu0 0.0
      %811 = vmatprep.subr.mxu0 0.0
      %812 = vmatpush1.msra.mxu0 0.0
      %813 = vmatprep.subr.mxu0 0.0
      %814 = vmatpush1.msra.mxu0 0.0
      %815 = vmatprep.subr.mxu0 0.0
      %816 = vmatpush1.msra.mxu0 0.0
      %817 = vmatprep.subr.mxu0 0.0
      %818 = vmatpush1.msra.mxu0 0.0
      %819 = vmatprep.subr.mxu0 0.0
      %820 = vmatpush1.msra.mxu0 0.0
      %821 = vmatprep.subr.mxu0 0.0
      %822 = vmatpush1.msra.mxu0 0.0
      %823 = vmatprep.subr.mxu0 0.0
      %824 = vmatpush1.msra.mxu0 0.0
      %825 = vmatprep.subr.mxu0 0.0
      %826 = vmatpush1.msra.mxu0 0.0
      %827 = vmatprep.subr.mxu0 0.0
      %828 = vmatpush1.msra.mxu0 0.0
      %829 = vmatprep.subr.mxu0 0.0
      %830 = vmatpush1.msra.mxu0 0.0
      %831 = vmatprep.subr.mxu0 0.0
      %832 = vmatpush1.msra.mxu0 0.0
      %833 = vmatprep.subr.mxu0 0.0
      %834 = vmatpush1.msra.mxu0 0.0
      %835 = vmatprep.subr.mxu0 0.0
      %836 = vmatpush1.msra.mxu0 0.0
      %837 = vmatprep.subr.mxu0 0.0
      %838 = vmatpush1.msra.mxu0 0.0
      %839 = vmatprep.subr.mxu0 0.0
      %840 = vmatpush1.msra.mxu0 0.0
      %841 = vmatprep.subr.mxu0 0.0
      %842 = vmatpush1.msra.mxu0 0.0
      %843 = vmatprep.subr.mxu0 0.0
      %844 = vmatpush1.msra.mxu0 0.0
      %845 = vmatprep.subr.mxu0 0.0
      %846 = vmatpush1.msra.mxu0 0.0
      %847 = vmatprep.subr.mxu0 0.0
      %848 = vmatpush1.msra.mxu0 0.0
      %849 = vmatprep.subr.mxu0 0.0
      %850 = vmatpush1.msra.mxu0 0.0
      %851 = vmatprep.subr.mxu0 0.0
      %852 = vmatpush1.msra.mxu0 0.0
      %853 = vmatprep.subr.mxu0 0.0
      %854 = vmatpush1.msra.mxu0 0.0
      %855 = vmatprep.subr.mxu0 0.0
      %856 = vmatpush1.msra.mxu0 0.0
      %857 = vmatprep.mubr.f32.mxu0 0.0
      %858 = vmatmul.mubr.f32.gmra.mrb[0].mxu0 %v791
      %v859 = vpop.f32.mrb[0].mxu0
      %v860 = vadd.f32 0.0, %v859
      %v861 = vpop.f32.mrb[0].mxu0
      %862 = vdwg.mxu0
      %v864 = vsel %vm671, %v780, 0
      %866 = vmatprep.subr.mxu0 0.0
      %867 = vmatpush1.msra.mxu0 %v783
      %868 = vmatprep.subr.mxu0 0.0
      %869 = vmatpush1.msra.mxu0 %v784
      %870 = vmatprep.subr.mxu0 0.0
      %871 = vmatpush1.msra.mxu0 0.0
      %872 = vmatprep.subr.mxu0 0.0
      %873 = vmatpush1.msra.mxu0 0.0
      %874 = vmatprep.subr.mxu0 0.0
      %875 = vmatpush1.msra.mxu0 0.0
      %876 = vmatprep.subr.mxu0 0.0
      %877 = vmatpush1.msra.mxu0 0.0
      %878 = vmatprep.subr.mxu0 0.0
      %879 = vmatpush1.msra.mxu0 0.0
      %880 = vmatprep.subr.mxu0 0.0
      %881 = vmatpush1.msra.mxu0 0.0
      %882 = vmatprep.subr.mxu0 0.0
      %883 = vmatpush1.msra.mxu0 0.0
      %884 = vmatprep.subr.mxu0 0.0
      %885 = vmatpush1.msra.mxu0 0.0
      %886 = vmatprep.subr.mxu0 0.0
      %887 = vmatpush1.msra.mxu0 0.0
      %888 = vmatprep.subr.mxu0 0.0
      %889 = vmatpush1.msra.mxu0 0.0
      %890 = vmatprep.subr.mxu0 0.0
      %891 = vmatpush1.msra.mxu0 0.0
      %892 = vmatprep.subr.mxu0 0.0
      %893 = vmatpush1.msra.mxu0 0.0
      %894 = vmatprep.subr.mxu0 0.0
      %895 = vmatpush1.msra.mxu0 0.0
      %896 = vmatprep.subr.mxu0 0.0
      %897 = vmatpush1.msra.mxu0 0.0
      %898 = vmatprep.subr.mxu0 0.0
      %899 = vmatpush1.msra.mxu0 0.0
      %900 = vmatprep.subr.mxu0 0.0
      %901 = vmatpush1.msra.mxu0 0.0
      %902 = vmatprep.subr.mxu0 0.0
      %903 = vmatpush1.msra.mxu0 0.0
      %904 = vmatprep.subr.mxu0 0.0
      %905 = vmatpush1.msra.mxu0 0.0
      %906 = vmatprep.subr.mxu0 0.0
      %907 = vmatpush1.msra.mxu0 0.0
      %908 = vmatprep.subr.mxu0 0.0
      %909 = vmatpush1.msra.mxu0 0.0
      %910 = vmatprep.subr.mxu0 0.0
      %911 = vmatpush1.msra.mxu0 0.0
      %912 = vmatprep.subr.mxu0 0.0
      %913 = vmatpush1.msra.mxu0 0.0
      %914 = vmatprep.subr.mxu0 0.0
      %915 = vmatpush1.msra.mxu0 0.0
      %916 = vmatprep.subr.mxu0 0.0
      %917 = vmatpush1.msra.mxu0 0.0
      %918 = vmatprep.subr.mxu0 0.0
      %919 = vmatpush1.msra.mxu0 0.0
      %920 = vmatprep.subr.mxu0 0.0
      %921 = vmatpush1.msra.mxu0 0.0
      %922 = vmatprep.subr.mxu0 0.0
      %923 = vmatpush1.msra.mxu0 0.0
      %924 = vmatprep.subr.mxu0 0.0
      %925 = vmatpush1.msra.mxu0 0.0
      %926 = vmatprep.subr.mxu0 0.0
      %927 = vmatpush1.msra.mxu0 0.0
      %928 = vmatprep.subr.mxu0 0.0
      %929 = vmatpush1.msra.mxu0 0.0
      %930 = vmatprep.mubr.f32.mxu0 0.0
      %931 = vmatmul.mubr.f32.gmra.mrb[0].mxu0 %v864
      %v932 = vpop.f32.mrb[0].mxu0
      %v933 = vadd.f32 %v860, %v932
      %v934 = vpop.f32.mrb[0].mxu0
      %935 = vdwg.mxu0
      %v937 = vlaneseq
      %v938 = vshrl.u32 %v937, 7
      %v939 = vsub.s32 0, %v938
      %v940 = vrot.slane %v789, %v939
      %v942 = vadd.f32 %v933, %v940
      %v943 = vxor.u32 %v942, 2147483648
      %v944 = vmul.f32 %v943, 1.442695
      %v945 = vpow.pop %v944
      %v946 = vadd.f32 %v945, 1.0
      %v947 = vrcp.pop %v946
      %v948 = vmul.f32 1.0, %v947
      %v949 = vtanh.pop %v942
      %951 = vrot.lane.b32.xlu0 %v782, 32
      %v952 = vpop.permute.xlu0 %951
      %v954 = vmul.f32 %v948, %v952
      %956 = vrot.lane.b32.xlu0 %v949, 64
      %v957 = vpop.permute.xlu0 %956
      %v959 = vmul.f32 %v948, %v957
      %961 = vrot.lane.b32.xlu0 %v959, 32
      %v962 = vpop.permute.xlu0 %961
      %v964 = vadd.f32 %v954, %v962
      %v965 = vtanh.pop %v964
      %967 = vrot.lane.b32.xlu0 %v965, 64
      %v968 = vpop.permute.xlu0 %967
      %v970 = vmul.f32 %v948, %v968
      %972 = vrot.lane.b32.xlu0 %v779, 32
      %v973 = vpop.permute.xlu0 %972
      %975 = vst.msk [vmem:[#allocation2] sm:$0xff] %vm597, %v973
      %977 = vrot.lane.b32.xlu0 %v773, 96
      %v978 = vpop.permute.xlu0 %977
      %980 = vst.msk [vmem:[#allocation3] sm:$0xff] %vm597, %v978
      %982 = vrot.lane.b32.xlu0 %v970, 32
      %v983 = vpop.permute.xlu0 %982
      %985 = vst.msk [vmem:[#allocation4] sm:$0xff] %vm597, %v983
      %987 = vrot.lane.b32.xlu0 %v964, 96
      %v988 = vpop.permute.xlu0 %987
      %990 = vst.msk [vmem:[#allocation5] sm:$0xff] %vm597, %v988
      %991 = vst.msk [vmem:[%s571] sm:$0xff] %vm597, %v973
      %992 = vst.msk [vmem:[%s576] sm:$0xff] %vm597, %v983
      %p993 = scmp.eq.s32.totalorder %s29, 7
      // Predicated region
      $region81: #{seq2seq_forward.2} parent=75 // pred_check
        %p994 = pneg %p993
      $region82: #{seq2seq_forward.2} parent=75 // pred_check_branch
        %996 = sbr.rel (%p994) target = $region84
      $region83: #{seq2seq_forward.2} parent=75 // pred_region
        %v997 = vld [vmem:[%s8] sm:$0xff]
        %v998 = vld [vmem:[%s8 + $0x8] sm:$0xff]
        %v999 = vld [vmem:[%s8 + $0x10] sm:$0xff]
        %v1000 = vld [vmem:[%s8 + $0x18] sm:$0xff]
        %v1001 = vld [vmem:[%s9] sm:$0xff]
        %v1002 = vld [vmem:[%s9 + $0x8] sm:$0xff]
        %v1003 = vld [vmem:[%s9 + $0x10] sm:$0xff]
        %v1004 = vld [vmem:[%s9 + $0x18] sm:$0xff]
        %v1005 = vsel %vm597, %v983, 0
        %1007 = vmatprep.subr.mxu0 0.0
        %1008 = vmatpush1.msra.mxu0 %v1001
        %1009 = vmatprep.subr.mxu0 0.0
        %1010 = vmatpush1.msra.mxu0 %v1002
        %1011 = vmatprep.subr.mxu0 0.0
        %1012 = vmatpush1.msra.mxu0 %v1003
        %1013 = vmatprep.subr.mxu0 0.0
        %1014 = vmatpush1.msra.mxu0 %v1004
        %1015 = vmatprep.subr.mxu0 0.0
        %1016 = vmatpush1.msra.mxu0 0.0
        %1017 = vmatprep.subr.mxu0 0.0
        %1018 = vmatpush1.msra.mxu0 0.0
        %1019 = vmatprep.subr.mxu0 0.0
        %1020 = vmatpush1.msra.mxu0 0.0
        %1021 = vmatprep.subr.mxu0 0.0
        %1022 = vmatpush1.msra.mxu0 0.0
        %1023 = vmatprep.subr.mxu0 0.0
        %1024 = vmatpush1.msra.mxu0 0.0
        %1025 = vmatprep.subr.mxu0 0.0
        %1026 = vmatpush1.msra.mxu0 0.0
        %1027 = vmatprep.subr.mxu0 0.0
        %1028 = vmatpush1.msra.mxu0 0.0
        %1029 = vmatprep.subr.mxu0 0.0
        %1030 = vmatpush1.msra.mxu0 0.0
        %1031 = vmatprep.subr.mxu0 0.0
        %1032 = vmatpush1.msra.mxu0 0.0
        %1033 = vmatprep.subr.mxu0 0.0
        %1034 = vmatpush1.msra.mxu0 0.0
        %1035 = vmatprep.subr.mxu0 0.0
        %1036 = vmatpush1.msra.mxu0 0.0
        %1037 = vmatprep.subr.mxu0 0.0
        %1038 = vmatpush1.msra.mxu0 0.0
        %1039 = vmatprep.subr.mxu0 0.0
        %1040 = vmatpush1.msra.mxu0 0.0
        %1041 = vmatprep.subr.mxu0 0.0
        %1042 = vmatpush1.msra.mxu0 0.0
        %1043 = vmatprep.subr.mxu0 0.0
        %1044 = vmatpush1.msra.mxu0 0.0
        %1045 = vmatprep.subr.mxu0 0.0
        %1046 = vmatpush1.msra.mxu0 0.0
        %1047 = vmatprep.subr.mxu0 0.0
        %1048 = vmatpush1.msra.mxu0 0.0
        %1049 = vmatprep.subr.mxu0 0.0
        %1050 = vmatpush1.msra.mxu0 0.0
        %1051 = vmatprep.subr.mxu0 0.0
        %1052 = vmatpush1.msra.mxu0 0.0
        %1053 = vmatprep.subr.mxu0 0.0
        %1054 = vmatpush1.msra.mxu0 0.0
        %1055 = vmatprep.subr.mxu0 0.0
        %1056 = vmatpush1.msra.mxu0 0.0
        %1057 = vmatprep.subr.mxu0 0.0
        %1058 = vmatpush1.msra.mxu0 0.0
        %1059 = vmatprep.subr.mxu0 0.0
        %1060 = vmatpush1.msra.mxu0 0.0
        %1061 = vmatprep.subr.mxu0 0.0
        %1062 = vmatpush1.msra.mxu0 0.0
        %1063 = vmatprep.subr.mxu0 0.0
        %1064 = vmatpush1.msra.mxu0 0.0
        %1065 = vmatprep.subr.mxu0 0.0
        %1066 = vmatpush1.msra.mxu0 0.0
        %1067 = vmatprep.subr.mxu0 0.0
        %1068 = vmatpush1.msra.mxu0 0.0
        %1069 = vmatprep.subr.mxu0 0.0
        %1070 = vmatpush1.msra.mxu0 0.0
        %1071 = vmatprep.mubr.f32.mxu0 0.0
        %1072 = vmatmul.mubr.f32.gmra.mrb[0].mxu0 %v1005
        %v1073 = vpop.f32.mrb[0].mxu0
        %v1074 = vadd.f32 0.0, %v1073
        %v1075 = vpop.f32.mrb[0].mxu0
        %1076 = vdwg.mxu0
        %v1077 = vsel %vm597, %v973, 0
        %1079 = vmatprep.subr.mxu0 0.0
        %1080 = vmatpush1.msra.mxu0 %v997
        %1081 = vmatprep.subr.mxu0 0.0
        %1082 = vmatpush1.msra.mxu0 %v998
        %1083 = vmatprep.subr.mxu0 0.0
        %1084 = vmatpush1.msra.mxu0 %v999
        %1085 = vmatprep.subr.mxu0 0.0
        %1086 = vmatpush1.msra.mxu0 %v1000
        %1087 = vmatprep.subr.mxu0 0.0
        %1088 = vmatpush1.msra.mxu0 0.0
        %1089 = vmatprep.subr.mxu0 0.0
        %1090 = vmatpush1.msra.mxu0 0.0
        %1091 = vmatprep.subr.mxu0 0.0
        %1092 = vmatpush1.msra.mxu0 0.0
        %1093 = vmatprep.subr.mxu0 0.0
        %1094 = vmatpush1.msra.mxu0 0.0
        %1095 = vmatprep.subr.mxu0 0.0
        %1096 = vmatpush1.msra.mxu0 0.0
        %1097 = vmatprep.subr.mxu0 0.0
        %1098 = vmatpush1.msra.mxu0 0.0
        %1099 = vmatprep.subr.mxu0 0.0
        %1100 = vmatpush1.msra.mxu0 0.0
        %1101 = vmatprep.subr.mxu0 0.0
        %1102 = vmatpush1.msra.mxu0 0.0
        %1103 = vmatprep.subr.mxu0 0.0
        %1104 = vmatpush1.msra.mxu0 0.0
        %1105 = vmatprep.subr.mxu0 0.0
        %1106 = vmatpush1.msra.mxu0 0.0
        %1107 = vmatprep.subr.mxu0 0.0
        %1108 = vmatpush1.msra.mxu0 0.0
        %1109 = vmatprep.subr.mxu0 0.0
        %1110 = vmatpush1.msra.mxu0 0.0
        %1111 = vmatprep.subr.mxu0 0.0
        %1112 = vmatpush1.msra.mxu0 0.0
        %1113 = vmatprep.subr.mxu0 0.0
        %1114 = vmatpush1.msra.mxu0 0.0
        %1115 = vmatprep.subr.mxu0 0.0
        %1116 = vmatpush1.msra.mxu0 0.0
        %1117 = vmatprep.subr.mxu0 0.0
        %1118 = vmatpush1.msra.mxu0 0.0
        %1119 = vmatprep.subr.mxu0 0.0
        %1120 = vmatpush1.msra.mxu0 0.0
        %1121 = vmatprep.subr.mxu0 0.0
        %1122 = vmatpush1.msra.mxu0 0.0
        %1123 = vmatprep.subr.mxu0 0.0
        %1124 = vmatpush1.msra.mxu0 0.0
        %1125 = vmatprep.subr.mxu0 0.0
        %1126 = vmatpush1.msra.mxu0 0.0
        %1127 = vmatprep.subr.mxu0 0.0
        %1128 = vmatpush1.msra.mxu0 0.0
        %1129 = vmatprep.subr.mxu0 0.0
        %1130 = vmatpush1.msra.mxu0 0.0
        %1131 = vmatprep.subr.mxu0 0.0
        %1132 = vmatpush1.msra.mxu0 0.0
        %1133 = vmatprep.subr.mxu0 0.0
        %1134 = vmatpush1.msra.mxu0 0.0
        %1135 = vmatprep.subr.mxu0 0.0
        %1136 = vmatpush1.msra.mxu0 0.0
        %1137 = vmatprep.subr.mxu0 0.0
        %1138 = vmatpush1.msra.mxu0 0.0
        %1139 = vmatprep.subr.mxu0 0.0
        %1140 = vmatpush1.msra.mxu0 0.0
        %1141 = vmatprep.subr.mxu0 0.0
        %1142 = vmatpush1.msra.mxu0 0.0
        %1143 = vmatprep.mubr.f32.mxu0 0.0
        %1144 = vmatmul.mubr.f32.gmra.mrb[0].mxu0 %v1077
        %v1145 = vpop.f32.mrb[0].mxu0
        %v1146 = vadd.f32 %v1074, %v1145
        %v1147 = vpop.f32.mrb[0].mxu0
        %1148 = vdwg.mxu0
        %v1149 = vld [vmem:[%s10] sm:$0x1]
        %v1151 = vlaneseq
        %v1152 = vshrl.u32 %v1151, 7
        %v1153 = vsub.s32 0, %v1152
        %v1154 = vrot.slane %v1149, %v1153
        %v1156 = vadd.f32 %v1146, %v1154
        %1157 = vst.msk [vmem:[%s16] sm:$0xff] %vm597, %v1156
        %v1158 = vld [vmem:[%s11] sm:$0xff]
        %v1159 = vld [vmem:[%s11 + $0x8] sm:$0xff]
        %v1160 = vld [vmem:[%s11 + $0x10] sm:$0xff]
        %v1161 = vld [vmem:[%s11 + $0x18] sm:$0xff]
        %v1162 = vld [vmem:[%s12] sm:$0xff]
        %v1163 = vld [vmem:[%s12 + $0x8] sm:$0xff]
        %v1164 = vld [vmem:[%s12 + $0x10] sm:$0xff]
        %v1165 = vld [vmem:[%s12 + $0x18] sm:$0xff]
        %v1166 = vsel %vm597, %v988, 0
        %1168 = vmatprep.subr.mxu0 0.0
        %1169 = vmatpush1.msra.mxu0 %v1162
        %1170 = vmatprep.subr.mxu0 0.0
        %1171 = vmatpush1.msra.mxu0 %v1163
        %1172 = vmatprep.subr.mxu0 0.0
        %1173 = vmatpush1.msra.mxu0 %v1164
        %1174 = vmatprep.subr.mxu0 0.0
        %1175 = vmatpush1.msra.mxu0 %v1165
        %1176 = vmatprep.subr.mxu0 0.0
        %1177 = vmatpush1.msra.mxu0 0.0
        %1178 = vmatprep.subr.mxu0 0.0
        %1179 = vmatpush1.msra.mxu0 0.0
        %1180 = vmatprep.subr.mxu0 0.0
        %1181 = vmatpush1.msra.mxu0 0.0
        %1182 = vmatprep.subr.mxu0 0.0
        %1183 = vmatpush1.msra.mxu0 0.0
        %1184 = vmatprep.subr.mxu0 0.0
        %1185 = vmatpush1.msra.mxu0 0.0
        %1186 = vmatprep.subr.mxu0 0.0
        %1187 = vmatpush1.msra.mxu0 0.0
        %1188 = vmatprep.subr.mxu0 0.0
        %1189 = vmatpush1.msra.mxu0 0.0
        %1190 = vmatprep.subr.mxu0 0.0
        %1191 = vmatpush1.msra.mxu0 0.0
        %1192 = vmatprep.subr.mxu0 0.0
        %1193 = vmatpush1.msra.mxu0 0.0
        %1194 = vmatprep.subr.mxu0 0.0
        %1195 = vmatpush1.msra.mxu0 0.0
        %1196 = vmatprep.subr.mxu0 0.0
        %1197 = vmatpush1.msra.mxu0 0.0
        %1198 = vmatprep.subr.mxu0 0.0
        %1199 = vmatpush1.msra.mxu0 0.0
        %1200 = vmatprep.subr.mxu0 0.0
        %1201 = vmatpush1.msra.mxu0 0.0
        %1202 = vmatprep.subr.mxu0 0.0
        %1203 = vmatpush1.msra.mxu0 0.0
        %1204 = vmatprep.subr.mxu0 0.0
        %1205 = vmatpush1.msra.mxu0 0.0
        %1206 = vmatprep.subr.mxu0 0.0
        %1207 = vmatpush1.msra.mxu0 0.0
        %1208 = vmatprep.subr.mxu0 0.0
        %1209 = vmatpush1.msra.mxu0 0.0
        %1210 = vmatprep.subr.mxu0 0.0
        %1211 = vmatpush1.msra.mxu0 0.0
        %1212 = vmatprep.subr.mxu0 0.0
        %1213 = vmatpush1.msra.mxu0 0.0
        %1214 = vmatprep.subr.mxu0 0.0
        %1215 = vmatpush1.msra.mxu0 0.0
        %1216 = vmatprep.subr.mxu0 0.0
        %1217 = vmatpush1.msra.mxu0 0.0
        %1218 = vmatprep.subr.mxu0 0.0
        %1219 = vmatpush1.msra.mxu0 0.0
        %1220 = vmatprep.subr.mxu0 0.0
        %1221 = vmatpush1.msra.mxu0 0.0
        %1222 = vmatprep.subr.mxu0 0.0
        %1223 = vmatpush1.msra.mxu0 0.0
        %1224 = vmatprep.subr.mxu0 0.0
        %1225 = vmatpush1.msra.mxu0 0.0
        %1226 = vmatprep.subr.mxu0 0.0
        %1227 = vmatpush1.msra.mxu0 0.0
        %1228 = vmatprep.subr.mxu0 0.0
        %1229 = vmatpush1.msra.mxu0 0.0
        %1230 = vmatprep.subr.mxu0 0.0
        %1231 = vmatpush1.msra.mxu0 0.0
        %1232 = vmatprep.mubr.f32.mxu0 0.0
        %1233 = vmatmul.mubr.f32.gmra.mrb[0].mxu0 %v1166
        %v1234 = vpop.f32.mrb[0].mxu0
        %v1235 = vadd.f32 0.0, %v1234
        %v1236 = vpop.f32.mrb[0].mxu0
        %1237 = vdwg.mxu0
        %v1238 = vsel %vm597, %v978, 0
        %1240 = vmatprep.subr.mxu0 0.0
        %1241 = vmatpush1.msra.mxu0 %v1158
        %1242 = vmatprep.subr.mxu0 0.0
        %1243 = vmatpush1.msra.mxu0 %v1159
        %1244 = vmatprep.subr.mxu0 0.0
        %1245 = vmatpush1.msra.mxu0 %v1160
        %1246 = vmatprep.subr.mxu0 0.0
        %1247 = vmatpush1.msra.mxu0 %v1161
        %1248 = vmatprep.subr.mxu0 0.0
        %1249 = vmatpush1.msra.mxu0 0.0
        %1250 = vmatprep.subr.mxu0 0.0
        %1251 = vmatpush1.msra.mxu0 0.0
        %1252 = vmatprep.subr.mxu0 0.0
        %1253 = vmatpush1.msra.mxu0 0.0
        %1254 = vmatprep.subr.mxu0 0.0
        %1255 = vmatpush1.msra.mxu0 0.0
        %1256 = vmatprep.subr.mxu0 0.0
        %1257 = vmatpush1.msra.mxu0 0.0
        %1258 = vmatprep.subr.mxu0 0.0
        %1259 = vmatpush1.msra.mxu0 0.0
        %1260 = vmatprep.subr.mxu0 0.0
        %1261 = vmatpush1.msra.mxu0 0.0
        %1262 = vmatprep.subr.mxu0 0.0
        %1263 = vmatpush1.msra.mxu0 0.0
        %1264 = vmatprep.subr.mxu0 0.0
        %1265 = vmatpush1.msra.mxu0 0.0
        %1266 = vmatprep.subr.mxu0 0.0
        %1267 = vmatpush1.msra.mxu0 0.0
        %1268 = vmatprep.subr.mxu0 0.0
        %1269 = vmatpush1.msra.mxu0 0.0
        %1270 = vmatprep.subr.mxu0 0.0
        %1271 = vmatpush1.msra.mxu0 0.0
        %1272 = vmatprep.subr.mxu0 0.0
        %1273 = vmatpush1.msra.mxu0 0.0
        %1274 = vmatprep.subr.mxu0 0.0
        %1275 = vmatpush1.msra.mxu0 0.0
        %1276 = vmatprep.subr.mxu0 0.0
        %1277 = vmatpush1.msra.mxu0 0.0
        %1278 = vmatprep.subr.mxu0 0.0
        %1279 = vmatpush1.msra.mxu0 0.0
        %1280 = vmatprep.subr.mxu0 0.0
        %1281 = vmatpush1.msra.mxu0 0.0
        %1282 = vmatprep.subr.mxu0 0.0
        %1283 = vmatpush1.msra.mxu0 0.0
        %1284 = vmatprep.subr.mxu0 0.0
        %1285 = vmatpush1.msra.mxu0 0.0
        %1286 = vmatprep.subr.mxu0 0.0
        %1287 = vmatpush1.msra.mxu0 0.0
        %1288 = vmatprep.subr.mxu0 0.0
        %1289 = vmatpush1.msra.mxu0 0.0
        %1290 = vmatprep.subr.mxu0 0.0
        %1291 = vmatpush1.msra.mxu0 0.0
        %1292 = vmatprep.subr.mxu0 0.0
        %1293 = vmatpush1.msra.mxu0 0.0
        %1294 = vmatprep.subr.mxu0 0.0
        %1295 = vmatpush1.msra.mxu0 0.0
        %1296 = vmatprep.subr.mxu0 0.0
        %1297 = vmatpush1.msra.mxu0 0.0
        %1298 = vmatprep.subr.mxu0 0.0
        %1299 = vmatpush1.msra.mxu0 0.0
        %1300 = vmatprep.subr.mxu0 0.0
        %1301 = vmatpush1.msra.mxu0 0.0
        %1302 = vmatprep.subr.mxu0 0.0
        %1303 = vmatpush1.msra.mxu0 0.0
        %1304 = vmatprep.mubr.f32.mxu0 0.0
        %1305 = vmatmul.mubr.f32.gmra.mrb[0].mxu0 %v1238
        %v1306 = vpop.f32.mrb[0].mxu0
        %v1307 = vadd.f32 %v1235, %v1306
        %v1308 = vpop.f32.mrb[0].mxu0
        %1309 = vdwg.mxu0
        %v1310 = vld [vmem:[%s13] sm:$0x1]
        %v1312 = vlaneseq
        %v1313 = vshrl.u32 %v1312, 7
        %v1314 = vsub.s32 0, %v1313
        %v1315 = vrot.slane %v1310, %v1314
        %v1317 = vadd.f32 %v1307, %v1315
        %1318 = vst.msk [vmem:[%s17] sm:$0xff] %vm597, %v1317
      $region84: #{seq2seq_forward.2} parent=75 // pred_fallthru
        _
      %p1319 = scmp.lt.s32.totalorder %s29, 7
      %s1320 = scalar_select %p1319, %s29, 7
      %s1321 = smul.addr %s1320, 8
      %s1322 = scalar_lea.vmem %s14, %s1321
      %s1323 = ssub.s32 7, %s29
      %p1324 = scmp.lt.s32.totalorder %s1323, 7
      %s1325 = scalar_select %p1324, %s1323, 7
      %s1326 = smul.addr %s1325, 8
      %s1327 = scalar_lea.vmem %s15, %s1326
      // Predicated region
      $region85: #{seq2seq_forward.2} parent=75 // pred_check
        %p1328 = pneg %p353
      $region86: #{seq2seq_forward.2} parent=75 // pred_check_branch
        %1330 = sbr.rel (%p1328) target = $region88
      $region87: #{seq2seq_forward.2} parent=75 // pred_region
        _
      $region88: #{seq2seq_forward.2} parent=75 // pred_fallthru
        _
      // Predicated region
      $region89: #{seq2seq_forward.2} parent=75 // pred_check
        %p1331 = pneg %p381
      $region90: #{seq2seq_forward.2} parent=75 // pred_check_branch
        %1333 = sbr.rel (%p1331) target = $region92
      $region91: #{seq2seq_forward.2} parent=75 // pred_region
        %s1334 = ssub.s32 7, %s29
      $region92: #{seq2seq_forward.2} parent=75 // pred_fallthru
        _
      // Predicated region
      $region93: #{seq2seq_forward.2} parent=75 // pred_check
        %p1335 = pneg %p402
      $region94: #{seq2seq_forward.2} parent=75 // pred_check_branch
        %1337 = sbr.rel (%p1335) target = $region96
      $region95: #{seq2seq_forward.2} parent=75 // pred_region
        _
      $region96: #{seq2seq_forward.2} parent=75 // pred_fallthru
        _
      // Predicated region
      $region97: #{seq2seq_forward.2} parent=75 // pred_check
        %p1338 = pneg %p423
      $region98: #{seq2seq_forward.2} parent=75 // pred_check_branch
        %1340 = sbr.rel (%p1338) target = $region100
      $region99: #{seq2seq_forward.2} parent=75 // pred_region
        _
      $region100: #{seq2seq_forward.2} parent=75 // pred_fallthru
        _
      // Predicated region
      $region101: #{seq2seq_forward.2} parent=75 // pred_check
        %p1341 = pneg %p402
      $region102: #{seq2seq_forward.2} parent=75 // pred_check_branch
        %1343 = sbr.rel (%p1341) target = $region104
      $region103: #{seq2seq_forward.2} parent=75 // pred_region
        _
      $region104: #{seq2seq_forward.2} parent=75 // pred_fallthru
        _
      // Predicated region
      $region105: #{seq2seq_forward.2} parent=75 // pred_check
        %p1344 = pneg %p423
      $region106: #{seq2seq_forward.2} parent=75 // pred_check_branch
        %1346 = sbr.rel (%p1344) target = $region108
      $region107: #{seq2seq_forward.2} parent=75 // pred_region
        _
      $region108: #{seq2seq_forward.2} parent=75 // pred_fallthru
        _
    $region76: #{seq2seq_forward.2} parent=5 // pred_fallthru
      _
    %p1347 = scmp.le.s32.totalorder 2, %s24
    // Predicated region
    $region109: #{seq2seq_forward.2} parent=5 // pred_check
      %p1348 = pneg %p1347
    $region110: #{seq2seq_forward.2} parent=5 // pred_check_branch
      %1350 = sbr.rel (%p1348) target = $region112
    $region111: #{seq2seq_forward.2} parent=5 // pred_region
      %s1351 = ssub.s32 %s24, 2
      // Predicated region
      $region113: #{seq2seq_forward.2} parent=111 // pred_check
        %p1352 = pneg %p359
      $region114: #{seq2seq_forward.2} parent=111 // pred_check_branch
        %1354 = sbr.rel (%p1352) target = $region116
      $region115: #{seq2seq_forward.2} parent=111 // pred_region
        %p1355 = scmp.lt.s32.totalorder %s30, 7
        %s1356 = scalar_select %p1355, %s30, 7
        %s1357 = smul.addr %s1356, 8
        %s1358 = scalar_lea.vmem %s14, %s1357
      $region116: #{seq2seq_forward.2} parent=111 // pred_fallthru
        _
      // Predicated region
      $region117: #{seq2seq_forward.2} parent=111 // pred_check
        %p1359 = pneg %p387
      $region118: #{seq2seq_forward.2} parent=111 // pred_check_branch
        %1361 = sbr.rel (%p1359) target = $region120
      $region119: #{seq2seq_forward.2} parent=111 // pred_region
        %s1362 = ssub.s32 7, %s30
        %p1363 = scmp.lt.s32.totalorder %s1362, 7
        %s1364 = scalar_select %p1363, %s1362, 7
        %s1365 = smul.addr %s1364, 8
        %s1366 = scalar_lea.vmem %s15, %s1365
      $region120: #{seq2seq_forward.2} parent=111 // pred_fallthru
        _
    $region112: #{seq2seq_forward.2} parent=5 // pred_fallthru
      _
  $region6: #{seq2seq_forward.2} parent=0 // loop_footer
    %s28 = sadd.s32 1, %s24
  $region7: #{seq2seq_forward.2} parent=0 // loop_footer_branch
    %23 = sbr.rel target = $region3
  $region8: #{seq2seq_forward.2} parent=0 // loop_exit
    _

// kernel: seq2seq_forward.3
$region0: #{seq2seq_forward.3}
  #allocation0 [shape = 'u32[]', space=smem, size = 0x4, offset = 0x4, fixed_abs, tag = 'smem constant byte address 0x4 - core index']
  #allocation1 [shape = 'u32[144,128]{1,0:T(1,128)}', space=vmem, size = 0x12000, scoped, tag = 'internal scratch']
  #allocation2 [shape = 'f32[8,32]{1,0:T(8,128)}', space=vmem, size = 0x1000, scoped, tag = 'scratch operand']
  #allocation3 [shape = 'f32[8,32]{1,0:T(8,128)}', space=vmem, size = 0x1000, scoped, tag = 'scratch operand']
  #allocation4 [shape = 'f32[8,128]{1,0:T(8,128)}', space=vmem, size = 0x1000, scoped, tag = 'scratch operand']
  #allocation5 [shape = 's32[1]{0}', space=sflag, size = 0x4, scoped, tag = 'scoped memory for seq2seq_forward.3']
  #allocation6 [shape = 'u8[512]{0}', space=smem, size = 0x200, scoped, tag = 'prefetched SMEM operand 0']
  %s0 = inlined_call_operand.vmem [shape: s32[7], index: 0, kind: input, shape index: {}]
  %s1 = inlined_call_operand.vmem [shape: f32[7,8,128], index: 1, kind: input, shape index: {}]
  %s2 = inlined_call_operand.vmem [shape: f32[8,8], index: 2, kind: input, shape index: {}]
  %s3 = inlined_call_operand.vmem [shape: f32[8,8,64], index: 3, kind: input, shape index: {}]
  %s4 = inlined_call_operand.vmem [shape: f32[8,32], index: 4, kind: input, shape index: {}]
  %s5 = inlined_call_operand.vmem [shape: f32[8,32], index: 5, kind: input, shape index: {}]
  %s6 = inlined_call_operand.vmem [shape: f32[128,16], index: 6, kind: input, shape index: {}]
  %s7 = inlined_call_operand.vmem [shape: f32[1,32], index: 7, kind: input, shape index: {}]
  %s8 = inlined_call_operand.vmem [shape: f32[64,128], index: 8, kind: input, shape index: {}]
  %s9 = inlined_call_operand.vmem [shape: f32[16,128], index: 9, kind: input, shape index: {}]
  %s10 = inlined_call_operand.vmem [shape: f32[32,128], index: 10, kind: input, shape index: {}]
  %s11 = inlined_call_operand.vmem [shape: f32[1,128], index: 11, kind: input, shape index: {}]
  %s12 = inlined_call_operand.vmem [shape: f32[32,128], index: 12, kind: input, shape index: {}]
  %s13 = inlined_call_operand.vmem [shape: f32[1,128], index: 13, kind: input, shape index: {}]
  %s14 = inlined_call_operand.vmem [shape: f32[7,8,128], index: 14, kind: output, shape index: {}]
  %s15 = sld [smem:[#allocation0]]
  $region89: #{seq2seq_forward.3} parent=0
    _
  %s17 = ssub.s32 1, %s15
  %s18 = scalar_select 0, %s17, %s15
  %s19 = sshll.u32 %s0, 4
  %s20 = int_to_ptr.vmem [resolvable:$true] %s19
  %22 = dma.vmem_to_smem %s20, 16, [#allocation6], [#allocation5]
  %23 = dma.done [#allocation5], 16
  %24 = sfence
  loop: start=0, step=1, limit=9
  $region2: #{seq2seq_forward.3} parent=0 // loop_pre_header
    _
  $region3: #{seq2seq_forward.3} parent=0 // loop_header
    %s26 = sphi 0, %s30
    %p27 = scmp.ge.s32.totalorder %s26, 9
    %s36 = sphi 0, %s38
    %s39 = sphi 0, %s36
    %s40 = sphi 0, %s39
    %s56 = sphi 0, %s40
    %s60 = sphi 0, %s60
    %s62 = sphi 0, %s60
    %s63 = sphi 0, %s62
    %s77 = sphi 0, %s63
    %s81 = sphi 0, %s81
    %s83 = sphi 0, %s81
    %s84 = sphi 0, %s83
    %s98 = sphi 0, %s84
    %s102 = sphi 0, %s102
    %s104 = sphi 0, %s102
    %s105 = sphi 0, %s104
    %s119 = sphi 0, %s105
    %s123 = sphi 0, %s123
    %s125 = sphi 0, %s123
    %s126 = sphi 0, %s125
    %s140 = sphi 0, %s126
    %s144 = sphi 0, %s144
    %s146 = sphi 0, %s144
    %s147 = sphi 0, %s146
    %s161 = sphi 0, %s147
    %s165 = sphi 0, %s165
    %s167 = sphi 0, %s165
    %s168 = sphi 0, %s167
    %s182 = sphi 0, %s168
    %s186 = sphi 0, %s186
    %s188 = sphi 0, %s186
    %s189 = sphi 0, %s188
    %s203 = sphi 0, %s189
    %s207 = sphi 0, %s207
    %s209 = sphi 0, %s207
    %s210 = sphi 0, %s209
    %s224 = sphi 0, %s210
    %s228 = sphi 0, %s228
    %s230 = sphi 0, %s228
    %s231 = sphi 0, %s230
    %s245 = sphi 0, %s231
    %s249 = sphi 0, %s249
    %s251 = sphi 0, %s249
    %s252 = sphi 0, %s251
    %s266 = sphi 0, %s252
    %s270 = sphi 0, %s270
    %s272 = sphi 0, %s270
    %s273 = sphi 0, %s272
    %s287 = sphi 0, %s273
    %s291 = sphi 0, %s291
    %s293 = sphi 0, %s291
    %s294 = sphi 0, %s293
    %s308 = sphi 0, %s294
    %s314 = sphi 0, %s316
    %s317 = sphi 0, %s314
    %s318 = sphi 0, %s317
    %s334 = sphi 0, %s318
  $region4: #{seq2seq_forward.3} parent=0 // loop_header_branch
    %29 = sbr.rel (%p27) target = $region8
  $region5: #{seq2seq_forward.3} parent=0 // loop_body
    %s31 = ssub.s32 %s26, 1
    %s32 = ssub.s32 %s26, 2
    %s33 = sadd.s32 %s26, 1
    %s34 = ssub.s32 %s26, %s33
    %p35 = scmp.eq.s32.totalorder %s34, 0
    %s37 = sadd.s32 %s36, 1
    %s38 = scalar_select %p35, %s36, %s37
    %p41 = pneg %p35
    %p42 = scmp.eq.s32.totalorder %s26, 6
    %p43 = por %p41, %p42
    %p44 = scmp.ne.s32.totalorder %s36, %s39
    %p45 = scmp.eq.s32.totalorder %s26, 0
    %p46 = por %p44, %p45
    %p47 = scmp.ne.s32.totalorder %s36, %s39
    %p48 = scmp.eq.s32.totalorder %s31, 6
    %p49 = por %p47, %p48
    %p50 = scmp.ne.s32.totalorder %s39, %s40
    %p51 = scmp.eq.s32.totalorder %s31, 0
    %p52 = por %p50, %p51
    %p53 = scmp.ne.s32.totalorder %s39, %s40
    %p54 = scmp.eq.s32.totalorder %s32, 6
    %p55 = por %p53, %p54
    %p57 = scmp.ne.s32.totalorder %s40, %s56
    %p58 = scmp.eq.s32.totalorder %s32, 0
    %p59 = por %p57, %p58
    %s61 = sadd.s32 %s60, 1
    %p64 = scmp.eq.s32.totalorder %s26, 6
    %p65 = scmp.ne.s32.totalorder %s60, %s62
    %p66 = scmp.eq.s32.totalorder %s26, 0
    %p67 = por %p65, %p66
    %p68 = scmp.ne.s32.totalorder %s60, %s62
    %p69 = scmp.eq.s32.totalorder %s31, 6
    %p70 = por %p68, %p69
    %p71 = scmp.ne.s32.totalorder %s62, %s63
    %p72 = scmp.eq.s32.totalorder %s31, 0
    %p73 = por %p71, %p72
    %p74 = scmp.ne.s32.totalorder %s62, %s63
    %p75 = scmp.eq.s32.totalorder %s32, 6
    %p76 = por %p74, %p75
    %p78 = scmp.ne.s32.totalorder %s63, %s77
    %p79 = scmp.eq.s32.totalorder %s32, 0
    %p80 = por %p78, %p79
    %s82 = sadd.s32 %s81, 1
    %p85 = scmp.eq.s32.totalorder %s26, 6
    %p86 = scmp.ne.s32.totalorder %s81, %s83
    %p87 = scmp.eq.s32.totalorder %s26, 0
    %p88 = por %p86, %p87
    %p89 = scmp.ne.s32.totalorder %s81, %s83
    %p90 = scmp.eq.s32.totalorder %s31, 6
    %p91 = por %p89, %p90
    %p92 = scmp.ne.s32.totalorder %s83, %s84
    %p93 = scmp.eq.s32.totalorder %s31, 0
    %p94 = por %p92, %p93
    %p95 = scmp.ne.s32.totalorder %s83, %s84
    %p96 = scmp.eq.s32.totalorder %s32, 6
    %p97 = por %p95, %p96
    %p99 = scmp.ne.s32.totalorder %s84, %s98
    %p100 = scmp.eq.s32.totalorder %s32, 0
    %p101 = por %p99, %p100
    %s103 = sadd.s32 %s102, 1
    %p106 = scmp.eq.s32.totalorder %s26, 6
    %p107 = scmp.ne.s32.totalorder %s102, %s104
    %p108 = scmp.eq.s32.totalorder %s26, 0
    %p109 = por %p107, %p108
    %p110 = scmp.ne.s32.totalorder %s102, %s104
    %p111 = scmp.eq.s32.totalorder %s31, 6
    %p112 = por %p110, %p111
    %p113 = scmp.ne.s32.totalorder %s104, %s105
    %p114 = scmp.eq.s32.totalorder %s31, 0
    %p115 = por %p113, %p114
    %p116 = scmp.ne.s32.totalorder %s104, %s105
    %p117 = scmp.eq.s32.totalorder %s32, 6
    %p118 = por %p116, %p117
    %p120 = scmp.ne.s32.totalorder %s105, %s119
    %p121 = scmp.eq.s32.totalorder %s32, 0
    %p122 = por %p120, %p121
    %s124 = sadd.s32 %s123, 1
    %p127 = scmp.eq.s32.totalorder %s26, 6
    %p128 = scmp.ne.s32.totalorder %s123, %s125
    %p129 = scmp.eq.s32.totalorder %s26, 0
    %p130 = por %p128, %p129
    %p131 = scmp.ne.s32.totalorder %s123, %s125
    %p132 = scmp.eq.s32.totalorder %s31, 6
    %p133 = por %p131, %p132
    %p134 = scmp.ne.s32.totalorder %s125, %s126
    %p135 = scmp.eq.s32.totalorder %s31, 0
    %p136 = por %p134, %p135
    %p137 = scmp.ne.s32.totalorder %s125, %s126
    %p138 = scmp.eq.s32.totalorder %s32, 6
    %p139 = por %p137, %p138
    %p141 = scmp.ne.s32.totalorder %s126, %s140
    %p142 = scmp.eq.s32.totalorder %s32, 0
    %p143 = por %p141, %p142
    %s145 = sadd.s32 %s144, 1
    %p148 = scmp.eq.s32.totalorder %s26, 6
    %p149 = scmp.ne.s32.totalorder %s144, %s146
    %p150 = scmp.eq.s32.totalorder %s26, 0
    %p151 = por %p149, %p150
    %p152 = scmp.ne.s32.totalorder %s144, %s146
    %p153 = scmp.eq.s32.totalorder %s31, 6
    %p154 = por %p152, %p153
    %p155 = scmp.ne.s32.totalorder %s146, %s147
    %p156 = scmp.eq.s32.totalorder %s31, 0
    %p157 = por %p155, %p156
    %p158 = scmp.ne.s32.totalorder %s146, %s147
    %p159 = scmp.eq.s32.totalorder %s32, 6
    %p160 = por %p158, %p159
    %p162 = scmp.ne.s32.totalorder %s147, %s161
    %p163 = scmp.eq.s32.totalorder %s32, 0
    %p164 = por %p162, %p163
    %s166 = sadd.s32 %s165, 1
    %p169 = scmp.eq.s32.totalorder %s26, 6
    %p170 = scmp.ne.s32.totalorder %s165, %s167
    %p171 = scmp.eq.s32.totalorder %s26, 0
    %p172 = por %p170, %p171
    %p173 = scmp.ne.s32.totalorder %s165, %s167
    %p174 = scmp.eq.s32.totalorder %s31, 6
    %p175 = por %p173, %p174
    %p176 = scmp.ne.s32.totalorder %s167, %s168
    %p177 = scmp.eq.s32.totalorder %s31, 0
    %p178 = por %p176, %p177
    %p179 = scmp.ne.s32.totalorder %s167, %s168
    %p180 = scmp.eq.s32.totalorder %s32, 6
    %p181 = por %p179, %p180
    %p183 = scmp.ne.s32.totalorder %s168, %s182
    %p184 = scmp.eq.s32.totalorder %s32, 0
    %p185 = por %p183, %p184
    %s187 = sadd.s32 %s186, 1
    %p190 = scmp.eq.s32.totalorder %s26, 6
    %p191 = scmp.ne.s32.totalorder %s186, %s188
    %p192 = scmp.eq.s32.totalorder %s26, 0
    %p193 = por %p191, %p192
    %p194 = scmp.ne.s32.totalorder %s186, %s188
    %p195 = scmp.eq.s32.totalorder %s31, 6
    %p196 = por %p194, %p195
    %p197 = scmp.ne.s32.totalorder %s188, %s189
    %p198 = scmp.eq.s32.totalorder %s31, 0
    %p199 = por %p197, %p198
    %p200 = scmp.ne.s32.totalorder %s188, %s189
    %p201 = scmp.eq.s32.totalorder %s32, 6
    %p202 = por %p200, %p201
    %p204 = scmp.ne.s32.totalorder %s189, %s203
    %p205 = scmp.eq.s32.totalorder %s32, 0
    %p206 = por %p204, %p205
    %s208 = sadd.s32 %s207, 1
    %p211 = scmp.eq.s32.totalorder %s26, 6
    %p212 = scmp.ne.s32.totalorder %s207, %s209
    %p213 = scmp.eq.s32.totalorder %s26, 0
    %p214 = por %p212, %p213
    %p215 = scmp.ne.s32.totalorder %s207, %s209
    %p216 = scmp.eq.s32.totalorder %s31, 6
    %p217 = por %p215, %p216
    %p218 = scmp.ne.s32.totalorder %s209, %s210
    %p219 = scmp.eq.s32.totalorder %s31, 0
    %p220 = por %p218, %p219
    %p221 = scmp.ne.s32.totalorder %s209, %s210
    %p222 = scmp.eq.s32.totalorder %s32, 6
    %p223 = por %p221, %p222
    %p225 = scmp.ne.s32.totalorder %s210, %s224
    %p226 = scmp.eq.s32.totalorder %s32, 0
    %p227 = por %p225, %p226
    %s229 = sadd.s32 %s228, 1
    %p232 = scmp.eq.s32.totalorder %s26, 6
    %p233 = scmp.ne.s32.totalorder %s228, %s230
    %p234 = scmp.eq.s32.totalorder %s26, 0
    %p235 = por %p233, %p234
    %p236 = scmp.ne.s32.totalorder %s228, %s230
    %p237 = scmp.eq.s32.totalorder %s31, 6
    %p238 = por %p236, %p237
    %p239 = scmp.ne.s32.totalorder %s230, %s231
    %p240 = scmp.eq.s32.totalorder %s31, 0
    %p241 = por %p239, %p240
    %p242 = scmp.ne.s32.totalorder %s230, %s231
    %p243 = scmp.eq.s32.totalorder %s32, 6
    %p244 = por %p242, %p243
    %p246 = scmp.ne.s32.totalorder %s231, %s245
    %p247 = scmp.eq.s32.totalorder %s32, 0
    %p248 = por %p246, %p247
    %s250 = sadd.s32 %s249, 1
    %p253 = scmp.eq.s32.totalorder %s26, 6
    %p254 = scmp.ne.s32.totalorder %s249, %s251
    %p255 = scmp.eq.s32.totalorder %s26, 0
    %p256 = por %p254, %p255
    %p257 = scmp.ne.s32.totalorder %s249, %s251
    %p258 = scmp.eq.s32.totalorder %s31, 6
    %p259 = por %p257, %p258
    %p260 = scmp.ne.s32.totalorder %s251, %s252
    %p261 = scmp.eq.s32.totalorder %s31, 0
    %p262 = por %p260, %p261
    %p263 = scmp.ne.s32.totalorder %s251, %s252
    %p264 = scmp.eq.s32.totalorder %s32, 6
    %p265 = por %p263, %p264
    %p267 = scmp.ne.s32.totalorder %s252, %s266
    %p268 = scmp.eq.s32.totalorder %s32, 0
    %p269 = por %p267, %p268
    %s271 = sadd.s32 %s270, 1
    %p274 = scmp.eq.s32.totalorder %s26, 6
    %p275 = scmp.ne.s32.totalorder %s270, %s272
    %p276 = scmp.eq.s32.totalorder %s26, 0
    %p277 = por %p275, %p276
    %p278 = scmp.ne.s32.totalorder %s270, %s272
    %p279 = scmp.eq.s32.totalorder %s31, 6
    %p280 = por %p278, %p279
    %p281 = scmp.ne.s32.totalorder %s272, %s273
    %p282 = scmp.eq.s32.totalorder %s31, 0
    %p283 = por %p281, %p282
    %p284 = scmp.ne.s32.totalorder %s272, %s273
    %p285 = scmp.eq.s32.totalorder %s32, 6
    %p286 = por %p284, %p285
    %p288 = scmp.ne.s32.totalorder %s273, %s287
    %p289 = scmp.eq.s32.totalorder %s32, 0
    %p290 = por %p288, %p289
    %s292 = sadd.s32 %s291, 1
    %p295 = scmp.eq.s32.totalorder %s26, 6
    %p296 = scmp.ne.s32.totalorder %s291, %s293
    %p297 = scmp.eq.s32.totalorder %s26, 0
    %p298 = por %p296, %p297
    %p299 = scmp.ne.s32.totalorder %s291, %s293
    %p300 = scmp.eq.s32.totalorder %s31, 6
    %p301 = por %p299, %p300
    %p302 = scmp.ne.s32.totalorder %s293, %s294
    %p303 = scmp.eq.s32.totalorder %s31, 0
    %p304 = por %p302, %p303
    %p305 = scmp.ne.s32.totalorder %s293, %s294
    %p306 = scmp.eq.s32.totalorder %s32, 6
    %p307 = por %p305, %p306
    %p309 = scmp.ne.s32.totalorder %s294, %s308
    %p310 = scmp.eq.s32.totalorder %s32, 0
    %p311 = por %p309, %p310
    %s312 = ssub.s32 %s26, %s33
    %p313 = scmp.eq.s32.totalorder %s312, 0
    %s315 = sadd.s32 %s314, 1
    %s316 = scalar_select %p313, %s314, %s315
    %p319 = pneg %p313
    %p320 = scmp.eq.s32.totalorder %s26, 6
    %p321 = por %p319, %p320
    %p322 = scmp.ne.s32.totalorder %s314, %s317
    %p323 = scmp.eq.s32.totalorder %s26, 0
    %p324 = por %p322, %p323
    %p325 = scmp.ne.s32.totalorder %s314, %s317
    %p326 = scmp.eq.s32.totalorder %s31, 6
    %p327 = por %p325, %p326
    %p328 = scmp.ne.s32.totalorder %s317, %s318
    %p329 = scmp.eq.s32.totalorder %s31, 0
    %p330 = por %p328, %p329
    %p331 = scmp.ne.s32.totalorder %s317, %s318
    %p332 = scmp.eq.s32.totalorder %s32, 6
    %p333 = por %p331, %p332
    %p335 = scmp.ne.s32.totalorder %s318, %s334
    %p336 = scmp.eq.s32.totalorder %s32, 0
    %p337 = por %p335, %p336
    %p338 = scmp.le.s32.totalorder 1, %s26
    %p339 = scmp.lt.s32.totalorder %s26, 8
    %p340 = pnand %p338, %p339
    %p341 = pneg %p340
    // Predicated region
    $region9: #{seq2seq_forward.3} parent=5 // pred_check
      _
    $region10: #{seq2seq_forward.3} parent=5 // pred_check_branch
      %343 = sbr.rel (%p340) target = $region12
    $region11: #{seq2seq_forward.3} parent=5 // pred_region
      %s344 = ssub.s32 %s26, 1
      // Predicated region
      $region13: #{seq2seq_forward.3} parent=11 // pred_check
        %p345 = pneg %p73
      $region14: #{seq2seq_forward.3} parent=11 // pred_check_branch
        %347 = sbr.rel (%p345) target = $region16
      $region15: #{seq2seq_forward.3} parent=11 // pred_region
        _
      $region16: #{seq2seq_forward.3} parent=11 // pred_fallthru
        _
      // Predicated region
      $region17: #{seq2seq_forward.3} parent=11 // pred_check
        %p348 = pneg %p94
      $region18: #{seq2seq_forward.3} parent=11 // pred_check_branch
        %350 = sbr.rel (%p348) target = $region20
      $region19: #{seq2seq_forward.3} parent=11 // pred_region
        _
      $region20: #{seq2seq_forward.3} parent=11 // pred_fallthru
        _
      // Predicated region
      $region21: #{seq2seq_forward.3} parent=11 // pred_check
        %p351 = pneg %p115
      $region22: #{seq2seq_forward.3} parent=11 // pred_check_branch
        %353 = sbr.rel (%p351) target = $region24
      $region23: #{seq2seq_forward.3} parent=11 // pred_region
        _
      $region24: #{seq2seq_forward.3} parent=11 // pred_fallthru
        _
      // Predicated region
      $region25: #{seq2seq_forward.3} parent=11 // pred_check
        %p354 = pneg %p136
      $region26: #{seq2seq_forward.3} parent=11 // pred_check_branch
        %356 = sbr.rel (%p354) target = $region28
      $region27: #{seq2seq_forward.3} parent=11 // pred_region
        _
      $region28: #{seq2seq_forward.3} parent=11 // pred_fallthru
        _
      // Predicated region
      $region29: #{seq2seq_forward.3} parent=11 // pred_check
        %p357 = pneg %p157
      $region30: #{seq2seq_forward.3} parent=11 // pred_check_branch
        %359 = sbr.rel (%p357) target = $region32
      $region31: #{seq2seq_forward.3} parent=11 // pred_region
        _
      $region32: #{seq2seq_forward.3} parent=11 // pred_fallthru
        _
      // Predicated region
      $region33: #{seq2seq_forward.3} parent=11 // pred_check
        %p360 = pneg %p178
      $region34: #{seq2seq_forward.3} parent=11 // pred_check_branch
        %362 = sbr.rel (%p360) target = $region36
      $region35: #{seq2seq_forward.3} parent=11 // pred_region
        _
      $region36: #{seq2seq_forward.3} parent=11 // pred_fallthru
        _
      // Predicated region
      $region37: #{seq2seq_forward.3} parent=11 // pred_check
        %p363 = pneg %p199
      $region38: #{seq2seq_forward.3} parent=11 // pred_check_branch
        %365 = sbr.rel (%p363) target = $region40
      $region39: #{seq2seq_forward.3} parent=11 // pred_region
        _
      $region40: #{seq2seq_forward.3} parent=11 // pred_fallthru
        _
      // Predicated region
      $region41: #{seq2seq_forward.3} parent=11 // pred_check
        %p366 = pneg %p220
      $region42: #{seq2seq_forward.3} parent=11 // pred_check_branch
        %368 = sbr.rel (%p366) target = $region44
      $region43: #{seq2seq_forward.3} parent=11 // pred_region
        _
      $region44: #{seq2seq_forward.3} parent=11 // pred_fallthru
        _
      // Predicated region
      $region45: #{seq2seq_forward.3} parent=11 // pred_check
        %p369 = pneg %p241
      $region46: #{seq2seq_forward.3} parent=11 // pred_check_branch
        %371 = sbr.rel (%p369) target = $region48
      $region47: #{seq2seq_forward.3} parent=11 // pred_region
        _
      $region48: #{seq2seq_forward.3} parent=11 // pred_fallthru
        _
      // Predicated region
      $region49: #{seq2seq_forward.3} parent=11 // pred_check
        %p372 = pneg %p262
      $region50: #{seq2seq_forward.3} parent=11 // pred_check_branch
        %374 = sbr.rel (%p372) target = $region52
      $region51: #{seq2seq_forward.3} parent=11 // pred_region
        _
      $region52: #{seq2seq_forward.3} parent=11 // pred_fallthru
        _
      // Predicated region
      $region53: #{seq2seq_forward.3} parent=11 // pred_check
        %p375 = pneg %p283
      $region54: #{seq2seq_forward.3} parent=11 // pred_check_branch
        %377 = sbr.rel (%p375) target = $region56
      $region55: #{seq2seq_forward.3} parent=11 // pred_region
        _
      $region56: #{seq2seq_forward.3} parent=11 // pred_fallthru
        _
      // Predicated region
      $region57: #{seq2seq_forward.3} parent=11 // pred_check
        %p378 = pneg %p304
      $region58: #{seq2seq_forward.3} parent=11 // pred_check_branch
        %380 = sbr.rel (%p378) target = $region60
      $region59: #{seq2seq_forward.3} parent=11 // pred_region
        _
      $region60: #{seq2seq_forward.3} parent=11 // pred_fallthru
        _
    $region12: #{seq2seq_forward.3} parent=5 // pred_fallthru
      _
    %p381 = scmp.lt.s32.totalorder %s26, 7
    // Predicated region
    $region61: #{seq2seq_forward.3} parent=5 // pred_check
      %p382 = pneg %p381
    $region62: #{seq2seq_forward.3} parent=5 // pred_check_branch
      %384 = sbr.rel (%p382) target = $region64
    $region63: #{seq2seq_forward.3} parent=5 // pred_region
      // Predicated region
      $region65: #{seq2seq_forward.3} parent=63 // pred_check
        %p385 = pneg %p46
      $region66: #{seq2seq_forward.3} parent=63 // pred_check_branch
        %387 = sbr.rel (%p385) target = $region68
      $region67: #{seq2seq_forward.3} parent=63 // pred_region
        %p388 = scmp.lt.s32.totalorder %s26, 6
        %s389 = scalar_select %p388, %s26, 6
        %s390 = smul.addr %s389, 8
        %s391 = scalar_lea.vmem %s1, %s390
      $region68: #{seq2seq_forward.3} parent=63 // pred_fallthru
        _
    $region64: #{seq2seq_forward.3} parent=5 // pred_fallthru
      _
    %p392 = scmp.le.s32.totalorder 1, %s26
    %p393 = scmp.lt.s32.totalorder %s26, 8
    %p394 = pnand %p392, %p393
    %p395 = pneg %p394
    // Predicated region
    $region69: #{seq2seq_forward.3} parent=5 // pred_check
      _
    $region70: #{seq2seq_forward.3} parent=5 // pred_check_branch
      %397 = sbr.rel (%p394) target = $region72
    $region71: #{seq2seq_forward.3} parent=5 // pred_region
      %s398 = ssub.s32 %s26, 1
      %p399 = scmp.lt.s32.totalorder %s31, 6
      %s400 = scalar_select %p399, %s31, 6
      %s401 = smul.addr %s400, 8
      %s402 = scalar_lea.vmem %s1, %s401
      %p403 = pneg %p52
      %p404 = pneg %p49
      %p405 = pneg %p73
      %p406 = pneg %p70
      %p407 = pneg %p94
      %p408 = pneg %p91
      %p409 = pneg %p115
      %p410 = pneg %p112
      %p411 = pneg %p136
      %p412 = pneg %p133
      %p413 = pneg %p157
      %p414 = pneg %p154
      %p415 = pneg %p178
      %p416 = pneg %p175
      %p417 = pneg %p199
      %p418 = pneg %p196
      %p419 = pneg %p220
      %p420 = pneg %p217
      %p421 = pneg %p241
      %p422 = pneg %p238
      %p423 = pneg %p262
      %p424 = pneg %p259
      %p425 = pneg %p283
      %p426 = pneg %p280
      %p427 = pneg %p304
      %p428 = pneg %p301
      %p429 = pneg %p330
      %p430 = pneg %p327
      %p431 = scmp.lt.s32.totalorder %s31, 6
      %s432 = scalar_select %p431, %s31, 6
      %s433 = smul.addr %s432, 8
      %s434 = scalar_lea.vmem %s14, %s433
      %p435 = scmp.lt.s32.totalorder %s31, 6
      %s436 = scalar_select %p435, %s31, 6
      %s437 = smul.addr %s436, 8
      %s438 = scalar_lea.vmem %s1, %s437
      %p439 = scmp.lt.s32.totalorder %s31, 6
      %s440 = scalar_select %p439, %s31, 6
      %s441 = smul.addr %s440, 8
      %s442 = scalar_lea.vmem %s14, %s441
      %p443 = scmp.eq.s32.totalorder %s31, 0
      // Predicated region
      $region73: #{seq2seq_forward.3} parent=71 // pred_check
        %p444 = pneg %p443
      $region74: #{seq2seq_forward.3} parent=71 // pred_check_branch
        %446 = sbr.rel (%p444) target = $region76
      $region75: #{seq2seq_forward.3} parent=71 // pred_region
        %v447 = vld [vmem:[%s4] sm:$0xff]
        %vm448 = vcmask 261120
        %449 = vst.msk [vmem:[#allocation2] sm:$0xff] %vm448, %v447
        %v450 = vld [vmem:[%s5] sm:$0xff]
        %451 = vst.msk [vmem:[#allocation3] sm:$0xff] %vm448, %v450
        %452 = vst [vmem:[#allocation4] sm:$0xff] 0.0
      $region76: #{seq2seq_forward.3} parent=71 // pred_fallthru
        _
      %s453 = sld [smem:[#allocation6 + %s31]]
      %p454 = scmp.gt.s32.totalorder %s453, 0
      %s455 = scalar_select %p454, 1, 0
      %s456 = scvt.s32.f32 %s455
      %v457 = vld [vmem:[%s438] sm:$0xff]
      %v458 = vstv %s456
      %v459 = vmul.f32 %v458, %v457
      %s460 = ssub.f32 1.0, %s456
      %v461 = vld [vmem:[#allocation4] sm:$0xff]
      %v462 = vstv %s460
      %v463 = vmul.f32 %v462, %v461
      %v464 = vadd.f32 %v459, %v463
      %v465 = vld [vmem:[%s6] sm:$0xff]
      %v466 = vld [vmem:[%s6 + $0x8] sm:$0xff]
      %v467 = vld [vmem:[%s6 + $0x10] sm:$0xff]
      %v468 = vld [vmem:[%s6 + $0x18] sm:$0xff]
      %v469 = vld [vmem:[%s6 + $0x20] sm:$0xff]
      %v470 = vld [vmem:[%s6 + $0x28] sm:$0xff]
      %v471 = vld [vmem:[%s6 + $0x30] sm:$0xff]
      %v472 = vld [vmem:[%s6 + $0x38] sm:$0xff]
      %v473 = vld [vmem:[%s6 + $0x40] sm:$0xff]
      %v474 = vld [vmem:[%s6 + $0x48] sm:$0xff]
      %v475 = vld [vmem:[%s6 + $0x50] sm:$0xff]
      %v476 = vld [vmem:[%s6 + $0x58] sm:$0xff]
      %v477 = vld [vmem:[%s6 + $0x60] sm:$0xff]
      %v478 = vld [vmem:[%s6 + $0x68] sm:$0xff]
      %v479 = vld [vmem:[%s6 + $0x70] sm:$0xff]
      %v480 = vld [vmem:[%s6 + $0x78] sm:$0xff]
      %481 = vmatprep.subr.mxu0 0.0
      %482 = vmatpush1.msra.mxu0 %v465
      %483 = vmatprep.subr.mxu0 0.0
      %484 = vmatpush1.msra.mxu0 %v466
      %485 = vmatprep.subr.mxu0 0.0
      %486 = vmatpush1.msra.mxu0 %v467
      %487 = vmatprep.subr.mxu0 0.0
      %488 = vmatpush1.msra.mxu0 %v468
      %489 = vmatprep.subr.mxu0 0.0
      %490 = vmatpush1.msra.mxu0 %v469
      %491 = vmatprep.subr.mxu0 0.0
      %492 = vmatpush1.msra.mxu0 %v470
      %493 = vmatprep.subr.mxu0 0.0
      %494 = vmatpush1.msra.mxu0 %v471
      %495 = vmatprep.subr.mxu0 0.0
      %496 = vmatpush1.msra.mxu0 %v472
      %497 = vmatprep.subr.mxu0 0.0
      %498 = vmatpush1.msra.mxu0 %v473
      %499 = vmatprep.subr.mxu0 0.0
      %500 = vmatpush1.msra.mxu0 %v474
      %501 = vmatprep.subr.mxu0 0.0
      %502 = vmatpush1.msra.mxu0 %v475
      %503 = vmatprep.subr.mxu0 0.0
      %504 = vmatpush1.msra.mxu0 %v476
      %505 = vmatprep.subr.mxu0 0.0
      %506 = vmatpush1.msra.mxu0 %v477
      %507 = vmatprep.subr.mxu0 0.0
      %508 = vmatpush1.msra.mxu0 %v478
      %509 = vmatprep.subr.mxu0 0.0
      %510 = vmatpush1.msra.mxu0 %v479
      %511 = vmatprep.subr.mxu0 0.0
      %512 = vmatpush1.msra.mxu0 %v480
      %513 = vmatprep.subr.mxu0 0.0
      %514 = vmatpush1.msra.mxu0 0.0
      %515 = vmatprep.subr.mxu0 0.0
      %516 = vmatpush1.msra.mxu0 0.0
      %517 = vmatprep.subr.mxu0 0.0
      %518 = vmatpush1.msra.mxu0 0.0
      %519 = vmatprep.subr.mxu0 0.0
      %520 = vmatpush1.msra.mxu0 0.0
      %521 = vmatprep.subr.mxu0 0.0
      %522 = vmatpush1.msra.mxu0 0.0
      %523 = vmatprep.subr.mxu0 0.0
      %524 = vmatpush1.msra.mxu0 0.0
      %525 = vmatprep.subr.mxu0 0.0
      %526 = vmatpush1.msra.mxu0 0.0
      %527 = vmatprep.subr.mxu0 0.0
      %528 = vmatpush1.msra.mxu0 0.0
      %529 = vmatprep.subr.mxu0 0.0
      %530 = vmatpush1.msra.mxu0 0.0
      %531 = vmatprep.subr.mxu0 0.0
      %532 = vmatpush1.msra.mxu0 0.0
      %533 = vmatprep.subr.mxu0 0.0
      %534 = vmatpush1.msra.mxu0 0.0
      %535 = vmatprep.subr.mxu0 0.0
      %536 = vmatpush1.msra.mxu0 0.0
      %537 = vmatprep.subr.mxu0 0.0
      %538 = vmatpush1.msra.mxu0 0.0
      %539 = vmatprep.subr.mxu0 0.0
      %540 = vmatpush1.msra.mxu0 0.0
      %541 = vmatprep.subr.mxu0 0.0
      %542 = vmatpush1.msra.mxu0 0.0
      %543 = vmatprep.subr.mxu0 0.0
      %544 = vmatpush1.msra.mxu0 0.0
      %545 = vmatprep.mubr.f32.mxu0 0.0
      %546 = vmatmul.mubr.f32.gmra.mrb[0].mxu0 %v464
      %v547 = vpop.f32.mrb[0].mxu0
      %v548 = vadd.f32 0.0, %v547
      %v549 = vpop.f32.mrb[0].mxu0
      %550 = vdwg.mxu0
      %v551 = vld [vmem:[#allocation2] sm:$0xff]
      %v552 = vld [vmem:[#allocation3] sm:$0xff]
      %v553 = vld [vmem:[%s7] sm:$0x1]
      %v555 = vlaneseq
      %v556 = vshrl.u32 %v555, 7
      %v557 = vsub.s32 0, %v556
      %v558 = vrot.slane %v553, %v557
      %v560 = vmul.f32 %v551, %v558
      %vm561 = vcmask 261120
      %v562 = vsel %vm561, %v560, 0.0
      %563 = vadd.xlane.f32.xlu0 %v562
      %v564 = vpop.xlane.xlu0 %563
      %v565 = vld [vmem:[%s2] sm:$0xff]
      %v566 = vadd.f32 %v565, %v564
      %v567 = vmax.f32 %v566, 0.0
      %vm568 = vcmask 64512
      %v569 = vsel %vm568, %v567, -inf
      %570 = vmax.xlane.f32.xlu0 %v569
      %v571 = vpop.xlane.xlu0 %570
      %v572 = vsub.f32 %v567, %v571
      %v573 = vmul.f32 %v572, 1.442695
      %v574 = vpow.pop %v573
      %v575 = vsel %vm568, %v574, 0.0
      %576 = vadd.xlane.f32.xlu0 %v575
      %v577 = vpop.xlane.xlu0 %576
      %v578 = vrcp.pop %v577
      %v579 = vmul.f32 %v574, %v578
      %v580 = vlaneseq
      %v581 = vshrl.u32 %v580, 7
      %v582 = vsub.s32 0, %v581
      %v583 = vrot.slane %v579, %v582
      %585 = vbcast.lane.b32.xlu0 %v583, 256
      %v586 = vpop.permute.xlu0 %585
      %v587 = vlaneseq
      %v588 = vshrl.u32 %v587, 7
      %v589 = vsub.s32 1, %v588
      %v590 = vrot.slane %v579, %v589
      %592 = vbcast.lane.b32.xlu0 %v590, 256
      %v593 = vpop.permute.xlu0 %592
      %v594 = vlaneseq
      %v595 = vshrl.u32 %v594, 7
      %v596 = vsub.s32 2, %v595
      %v597 = vrot.slane %v579, %v596
      %599 = vbcast.lane.b32.xlu0 %v597, 256
      %v600 = vpop.permute.xlu0 %599
      %v601 = vlaneseq
      %v602 = vshrl.u32 %v601, 7
      %v603 = vsub.s32 3, %v602
      %v604 = vrot.slane %v579, %v603
      %606 = vbcast.lane.b32.xlu0 %v604, 256
      %v607 = vpop.permute.xlu0 %606
      %v608 = vlaneseq
      %v609 = vshrl.u32 %v608, 7
      %v610 = vsub.s32 4, %v609
      %v611 = vrot.slane %v579, %v610
      %613 = vbcast.lane.b32.xlu0 %v611, 256
      %v614 = vpop.permute.xlu0 %613
      %v615 = vlaneseq
      %v616 = vshrl.u32 %v615, 7
      %v617 = vsub.s32 5, %v616
      %v618 = vrot.slane %v579, %v617
      %620 = vbcast.lane.b32.xlu0 %v618, 256
      %v621 = vpop.permute.xlu0 %620
      %v622 = vlaneseq
      %v623 = vshrl.u32 %v622, 7
      %v624 = vsub.s32 6, %v623
      %v625 = vrot.slane %v579, %v624
      %627 = vbcast.lane.b32.xlu0 %v625, 256
      %v628 = vpop.permute.xlu0 %627
      %v629 = vlaneseq
      %v630 = vshrl.u32 %v629, 7
      %v631 = vsub.s32 7, %v630
      %v632 = vrot.slane %v579, %v631
      %634 = vbcast.lane.b32.xlu0 %v632, 256
      %v635 = vpop.permute.xlu0 %634
      %v636 = vld [vmem:[%s3] sm:$0xff]
      %v637 = vld [vmem:[%s3 + $0x8] sm:$0xff]
      %v638 = vld [vmem:[%s3 + $0x10] sm:$0xff]
      %v639 = vld [vmem:[%s3 + $0x18] sm:$0xff]
      %v640 = vld [vmem:[%s3 + $0x20] sm:$0xff]
      %v641 = vld [vmem:[%s3 + $0x28] sm:$0xff]
      %v642 = vld [vmem:[%s3 + $0x30] sm:$0xff]
      %v643 = vld [vmem:[%s3 + $0x38] sm:$0xff]
      %v644 = vmul.f32 %v586, %v636
      %v645 = vmul.f32 %v593, %v637
      %v646 = vmul.f32 %v600, %v638
      %v647 = vmul.f32 %v607, %v639
      %v648 = vmul.f32 %v614, %v640
      %v649 = vmul.f32 %v621, %v641
      %v650 = vmul.f32 %v628, %v642
      %v651 = vmul.f32 %v635, %v643
      %vm652 = vcmask 523264
      %v653 = vsel %vm652, %v644, 0.0
      %v654 = vrot.slane %v653, 4
      %v655 = vadd.f32 %v653, %v654
      %v656 = vrot.slane %v655, 2
      %v657 = vadd.f32 %v655, %v656
      %v658 = vrot.slane %v657, 1
      %v659 = vadd.f32 %v657, %v658
      %v660 = vsel %vm652, %v645, 0.0
      %v661 = vrot.slane %v660, 4
      %v662 = vadd.f32 %v660, %v661
      %v663 = vrot.slane %v662, 2
      %v664 = vadd.f32 %v662, %v663
      %v665 = vrot.slane %v664, 1
      %v666 = vadd.f32 %v664, %v665
      %v667 = vsel %vm652, %v646, 0.0
      %v668 = vrot.slane %v667, 4
      %v669 = vadd.f32 %v667, %v668
      %v670 = vrot.slane %v669, 2
      %v671 = vadd.f32 %v669, %v670
      %v672 = vrot.slane %v671, 1
      %v673 = vadd.f32 %v671, %v672
      %v674 = vsel %vm652, %v647, 0.0
      %v675 = vrot.slane %v674, 4
      %v676 = vadd.f32 %v674, %v675
      %v677 = vrot.slane %v676, 2
      %v678 = vadd.f32 %v676, %v677
      %v679 = vrot.slane %v678, 1
      %v680 = vadd.f32 %v678, %v679
      %v681 = vsel %vm652, %v648, 0.0
      %v682 = vrot.slane %v681, 4
      %v683 = vadd.f32 %v681, %v682
      %v684 = vrot.slane %v683, 2
      %v685 = vadd.f32 %v683, %v684
      %v686 = vrot.slane %v685, 1
      %v687 = vadd.f32 %v685, %v686
      %v688 = vsel %vm652, %v649, 0.0
      %v689 = vrot.slane %v688, 4
      %v690 = vadd.f32 %v688, %v689
      %v691 = vrot.slane %v690, 2
      %v692 = vadd.f32 %v690, %v691
      %v693 = vrot.slane %v692, 1
      %v694 = vadd.f32 %v692, %v693
      %v695 = vsel %vm652, %v650, 0.0
      %v696 = vrot.slane %v695, 4
      %v697 = vadd.f32 %v695, %v696
      %v698 = vrot.slane %v697, 2
      %v699 = vadd.f32 %v697, %v698
      %v700 = vrot.slane %v699, 1
      %v701 = vadd.f32 %v699, %v700
      %v702 = vsel %vm652, %v651, 0.0
      %v703 = vrot.slane %v702, 4
      %v704 = vadd.f32 %v702, %v703
      %v705 = vrot.slane %v704, 2
      %v706 = vadd.f32 %v704, %v705
      %v707 = vrot.slane %v706, 1
      %v708 = vadd.f32 %v706, %v707
      %v709 = vld [vmem:[%s8] sm:$0xff]
      %v710 = vld [vmem:[%s8 + $0x8] sm:$0xff]
      %v711 = vld [vmem:[%s8 + $0x10] sm:$0xff]
      %v712 = vld [vmem:[%s8 + $0x18] sm:$0xff]
      %v713 = vld [vmem:[%s8 + $0x20] sm:$0xff]
      %v714 = vld [vmem:[%s8 + $0x28] sm:$0xff]
      %v715 = vld [vmem:[%s8 + $0x30] sm:$0xff]
      %v716 = vld [vmem:[%s8 + $0x38] sm:$0xff]
      %v717 = vld [vmem:[%s9] sm:$0xff]
      %v718 = vld [vmem:[%s9 + $0x8] sm:$0xff]
      %vm719 = vcmask 130048
      %v721 = vsel %vm719, %v548, 0
      %723 = vmatprep.subr.mxu0 0.0
      %724 = vmatpush1.msra.mxu0 %v717
      %725 = vmatprep.subr.mxu0 0.0
      %726 = vmatpush1.msra.mxu0 %v718
      %727 = vmatprep.subr.mxu0 0.0
      %728 = vmatpush1.msra.mxu0 0.0
      %729 = vmatprep.subr.mxu0 0.0
      %730 = vmatpush1.msra.mxu0 0.0
      %731 = vmatprep.subr.mxu0 0.0
      %732 = vmatpush1.msra.mxu0 0.0
      %733 = vmatprep.subr.mxu0 0.0
      %734 = vmatpush1.msra.mxu0 0.0
      %735 = vmatprep.subr.mxu0 0.0
      %736 = vmatpush1.msra.mxu0 0.0
      %737 = vmatprep.subr.mxu0 0.0
      %738 = vmatpush1.msra.mxu0 0.0
      %739 = vmatprep.subr.mxu0 0.0
      %740 = vmatpush1.msra.mxu0 0.0
      %741 = vmatprep.subr.mxu0 0.0
      %742 = vmatpush1.msra.mxu0 0.0
      %743 = vmatprep.subr.mxu0 0.0
      %744 = vmatpush1.msra.mxu0 0.0
      %745 = vmatprep.subr.mxu0 0.0
      %746 = vmatpush1.msra.mxu0 0.0
      %747 = vmatprep.subr.mxu0 0.0
      %748 = vmatpush1.msra.mxu0 0.0
      %749 = vmatprep.subr.mxu0 0.0
      %750 = vmatpush1.msra.mxu0 0.0
      %751 = vmatprep.subr.mxu0 0.0
      %752 = vmatpush1.msra.mxu0 0.0
      %753 = vmatprep.subr.mxu0 0.0
      %754 = vmatpush1.msra.mxu0 0.0
      %755 = vmatprep.subr.mxu0 0.0
      %756 = vmatpush1.msra.mxu0 0.0
      %757 = vmatprep.subr.mxu0 0.0
      %758 = vmatpush1.msra.mxu0 0.0
      %759 = vmatprep.subr.mxu0 0.0
      %760 = vmatpush1.msra.mxu0 0.0
      %761 = vmatprep.subr.mxu0 0.0
      %762 = vmatpush1.msra.mxu0 0.0
      %763 = vmatprep.subr.mxu0 0.0
      %764 = vmatpush1.msra.mxu0 0.0
      %765 = vmatprep.subr.mxu0 0.0
      %766 = vmatpush1.msra.mxu0 0.0
      %767 = vmatprep.subr.mxu0 0.0
      %768 = vmatpush1.msra.mxu0 0.0
      %769 = vmatprep.subr.mxu0 0.0
      %770 = vmatpush1.msra.mxu0 0.0
      %771 = vmatprep.subr.mxu0 0.0
      %772 = vmatpush1.msra.mxu0 0.0
      %773 = vmatprep.subr.mxu0 0.0
      %774 = vmatpush1.msra.mxu0 0.0
      %775 = vmatprep.subr.mxu0 0.0
      %776 = vmatpush1.msra.mxu0 0.0
      %777 = vmatprep.subr.mxu0 0.0
      %778 = vmatpush1.msra.mxu0 0.0
      %779 = vmatprep.subr.mxu0 0.0
      %780 = vmatpush1.msra.mxu0 0.0
      %781 = vmatprep.subr.mxu0 0.0
      %782 = vmatpush1.msra.mxu0 0.0
      %783 = vmatprep.subr.mxu0 0.0
      %784 = vmatpush1.msra.mxu0 0.0
      %785 = vmatprep.subr.mxu0 0.0
      %786 = vmatpush1.msra.mxu0 0.0
      %787 = vmatprep.mubr.f32.mxu0 0.0
      %788 = vmatmul.mubr.f32.gmra.mrb[0].mxu0 %v721
      %v789 = vpop.f32.mrb[0].mxu0
      %v790 = vadd.f32 0.0, %v789
      %v791 = vpop.f32.mrb[0].mxu0
      %792 = vdwg.mxu0
      %vm801 = vcmask 1041409
      %v802 = vsel %vm801, %v666, %v659
      %vm803 = vcmask 1042434
      %v804 = vsel %vm803, %v673, %v802
      %vm805 = vcmask 1043459
      %v806 = vsel %vm805, %v680, %v804
      %vm807 = vcmask 1044484
      %v808 = vsel %vm807, %v687, %v806
      %vm809 = vcmask 1045509
      %v810 = vsel %vm809, %v694, %v808
      %vm811 = vcmask 1046534
      %v812 = vsel %vm811, %v701, %v810
      %vm813 = vcmask 1047559
      %v814 = vsel %vm813, %v708, %v812
      %v815 = vsel %vm652, %v814, 0
      %817 = vmatprep.subr.mxu0 0.0
      %818 = vmatpush1.msra.mxu0 %v709
      %819 = vmatprep.subr.mxu0 0.0
      %820 = vmatpush1.msra.mxu0 %v710
      %821 = vmatprep.subr.mxu0 0.0
      %822 = vmatpush1.msra.mxu0 %v711
      %823 = vmatprep.subr.mxu0 0.0
      %824 = vmatpush1.msra.mxu0 %v712
      %825 = vmatprep.subr.mxu0 0.0
      %826 = vmatpush1.msra.mxu0 %v713
      %827 = vmatprep.subr.mxu0 0.0
      %828 = vmatpush1.msra.mxu0 %v714
      %829 = vmatprep.subr.mxu0 0.0
      %830 = vmatpush1.msra.mxu0 %v715
      %831 = vmatprep.subr.mxu0 0.0
      %832 = vmatpush1.msra.mxu0 %v716
      %833 = vmatprep.subr.mxu0 0.0
      %834 = vmatpush1.msra.mxu0 0.0
      %835 = vmatprep.subr.mxu0 0.0
      %836 = vmatpush1.msra.mxu0 0.0
      %837 = vmatprep.subr.mxu0 0.0
      %838 = vmatpush1.msra.mxu0 0.0
      %839 = vmatprep.subr.mxu0 0.0
      %840 = vmatpush1.msra.mxu0 0.0
      %841 = vmatprep.subr.mxu0 0.0
      %842 = vmatpush1.msra.mxu0 0.0
      %843 = vmatprep.subr.mxu0 0.0
      %844 = vmatpush1.msra.mxu0 0.0
      %845 = vmatprep.subr.mxu0 0.0
      %846 = vmatpush1.msra.mxu0 0.0
      %847 = vmatprep.subr.mxu0 0.0
      %848 = vmatpush1.msra.mxu0 0.0
      %849 = vmatprep.subr.mxu0 0.0
      %850 = vmatpush1.msra.mxu0 0.0
      %851 = vmatprep.subr.mxu0 0.0
      %852 = vmatpush1.msra.mxu0 0.0
      %853 = vmatprep.subr.mxu0 0.0
      %854 = vmatpush1.msra.mxu0 0.0
      %855 = vmatprep.subr.mxu0 0.0
      %856 = vmatpush1.msra.mxu0 0.0
      %857 = vmatprep.subr.mxu0 0.0
      %858 = vmatpush1.msra.mxu0 0.0
      %859 = vmatprep.subr.mxu0 0.0
      %860 = vmatpush1.msra.mxu0 0.0
      %861 = vmatprep.subr.mxu0 0.0
      %862 = vmatpush1.msra.mxu0 0.0
      %863 = vmatprep.subr.mxu0 0.0
      %864 = vmatpush1.msra.mxu0 0.0
      %865 = vmatprep.subr.mxu0 0.0
      %866 = vmatpush1.msra.mxu0 0.0
      %867 = vmatprep.subr.mxu0 0.0
      %868 = vmatpush1.msra.mxu0 0.0
      %869 = vmatprep.subr.mxu0 0.0
      %870 = vmatpush1.msra.mxu0 0.0
      %871 = vmatprep.subr.mxu0 0.0
      %872 = vmatpush1.msra.mxu0 0.0
      %873 = vmatprep.subr.mxu0 0.0
      %874 = vmatpush1.msra.mxu0 0.0
      %875 = vmatprep.subr.mxu0 0.0
      %876 = vmatpush1.msra.mxu0 0.0
      %877 = vmatprep.subr.mxu0 0.0
      %878 = vmatpush1.msra.mxu0 0.0
      %879 = vmatprep.subr.mxu0 0.0
      %880 = vmatpush1.msra.mxu0 0.0
      %881 = vmatprep.mubr.f32.mxu0 0.0
      %882 = vmatmul.mubr.f32.gmra.mrb[0].mxu0 %v815
      %v883 = vpop.f32.mrb[0].mxu0
      %v884 = vadd.f32 %v790, %v883
      %v885 = vpop.f32.mrb[0].mxu0
      %886 = vdwg.mxu0
      %v887 = vld [vmem:[%s10] sm:$0xff]
      %v888 = vld [vmem:[%s10 + $0x8] sm:$0xff]
      %v889 = vld [vmem:[%s10 + $0x10] sm:$0xff]
      %v890 = vld [vmem:[%s10 + $0x18] sm:$0xff]
      %v892 = vsel %vm561, %v551, 0
      %894 = vmatprep.subr.mxu0 0.0
      %895 = vmatpush1.msra.mxu0 %v887
      %896 = vmatprep.subr.mxu0 0.0
      %897 = vmatpush1.msra.mxu0 %v888
      %898 = vmatprep.subr.mxu0 0.0
      %899 = vmatpush1.msra.mxu0 %v889
      %900 = vmatprep.subr.mxu0 0.0
      %901 = vmatpush1.msra.mxu0 %v890
      %902 = vmatprep.subr.mxu0 0.0
      %903 = vmatpush1.msra.mxu0 0.0
      %904 = vmatprep.subr.mxu0 0.0
      %905 = vmatpush1.msra.mxu0 0.0
      %906 = vmatprep.subr.mxu0 0.0
      %907 = vmatpush1.msra.mxu0 0.0
      %908 = vmatprep.subr.mxu0 0.0
      %909 = vmatpush1.msra.mxu0 0.0
      %910 = vmatprep.subr.mxu0 0.0
      %911 = vmatpush1.msra.mxu0 0.0
      %912 = vmatprep.subr.mxu0 0.0
      %913 = vmatpush1.msra.mxu0 0.0
      %914 = vmatprep.subr.mxu0 0.0
      %915 = vmatpush1.msra.mxu0 0.0
      %916 = vmatprep.subr.mxu0 0.0
      %917 = vmatpush1.msra.mxu0 0.0
      %918 = vmatprep.subr.mxu0 0.0
      %919 = vmatpush1.msra.mxu0 0.0
      %920 = vmatprep.subr.mxu0 0.0
      %921 = vmatpush1.msra.mxu0 0.0
      %922 = vmatprep.subr.mxu0 0.0
      %923 = vmatpush1.msra.mxu0 0.0
      %924 = vmatprep.subr.mxu0 0.0
      %925 = vmatpush1.msra.mxu0 0.0
      %926 = vmatprep.subr.mxu0 0.0
      %927 = vmatpush1.msra.mxu0 0.0
      %928 = vmatprep.subr.mxu0 0.0
      %929 = vmatpush1.msra.mxu0 0.0
      %930 = vmatprep.subr.mxu0 0.0
      %931 = vmatpush1.msra.mxu0 0.0
      %932 = vmatprep.subr.mxu0 0.0
      %933 = vmatpush1.msra.mxu0 0.0
      %934 = vmatprep.subr.mxu0 0.0
      %935 = vmatpush1.msra.mxu0 0.0
      %936 = vmatprep.subr.mxu0 0.0
      %937 = vmatpush1.msra.mxu0 0.0
      %938 = vmatprep.subr.mxu0 0.0
      %939 = vmatpush1.msra.mxu0 0.0
      %940 = vmatprep.subr.mxu0 0.0
      %941 = vmatpush1.msra.mxu0 0.0
      %942 = vmatprep.subr.mxu0 0.0
      %943 = vmatpush1.msra.mxu0 0.0
      %944 = vmatprep.subr.mxu0 0.0
      %945 = vmatpush1.msra.mxu0 0.0
      %946 = vmatprep.subr.mxu0 0.0
      %947 = vmatpush1.msra.mxu0 0.0
      %948 = vmatprep.subr.mxu0 0.0
      %949 = vmatpush1.msra.mxu0 0.0
      %950 = vmatprep.subr.mxu0 0.0
      %951 = vmatpush1.msra.mxu0 0.0
      %952 = vmatprep.subr.mxu0 0.0
      %953 = vmatpush1.msra.mxu0 0.0
      %954 = vmatprep.subr.mxu0 0.0
      %955 = vmatpush1.msra.mxu0 0.0
      %956 = vmatprep.subr.mxu0 0.0
      %957 = vmatpush1.msra.mxu0 0.0
      %958 = vmatprep.mubr.f32.mxu0 0.0
      %959 = vmatmul.mubr.f32.gmra.mrb[0].mxu0 %v892
      %v960 = vpop.f32.mrb[0].mxu0
      %v961 = vadd.f32 0.0, %v960
      %v962 = vpop.f32.mrb[0].mxu0
      %963 = vdwg.mxu0
      %v964 = vadd.f32 %v884, %v961
      %v965 = vld [vmem:[%s11] sm:$0x1]
      %v967 = vlaneseq
      %v968 = vshrl.u32 %v967, 7
      %v969 = vsub.s32 0, %v968
      %v970 = vrot.slane %v965, %v969
      %v972 = vadd.f32 %v964, %v970
      %v973 = vxor.u32 %v972, 2147483648
      %v974 = vmul.f32 %v973, 1.442695
      %v975 = vpow.pop %v974
      %v976 = vadd.f32 %v975, 1.0
      %v977 = vrcp.pop %v976
      %v978 = vmul.f32 1.0, %v977
      %v979 = vtanh.pop %v972
      %981 = vrot.lane.b32.xlu0 %v552, 32
      %v982 = vpop.permute.xlu0 %981
      %v984 = vmul.f32 %v978, %v982
      %986 = vrot.lane.b32.xlu0 %v979, 64
      %v987 = vpop.permute.xlu0 %986
      %v989 = vmul.f32 %v978, %v987
      %991 = vrot.lane.b32.xlu0 %v989, 32
      %v992 = vpop.permute.xlu0 %991
      %v994 = vadd.f32 %v984, %v992
      %v995 = vtanh.pop %v994
      %997 = vrot.lane.b32.xlu0 %v995, 64
      %v998 = vpop.permute.xlu0 %997
      %v1000 = vmul.f32 %v978, %v998
      %1002 = vrot.lane.b32.xlu0 %v1000, 32
      %v1003 = vpop.permute.xlu0 %1002
      %1005 = vst.msk [vmem:[#allocation2] sm:$0xff] %vm561, %v1003
      %1007 = vrot.lane.b32.xlu0 %v994, 96
      %v1008 = vpop.permute.xlu0 %1007
      %1010 = vst.msk [vmem:[#allocation3] sm:$0xff] %vm561, %v1008
      %v1011 = vld [vmem:[%s12] sm:$0xff]
      %v1012 = vld [vmem:[%s12 + $0x8] sm:$0xff]
      %v1013 = vld [vmem:[%s12 + $0x10] sm:$0xff]
      %v1014 = vld [vmem:[%s12 + $0x18] sm:$0xff]
      %v1015 = vld [vmem:[%s13] sm:$0x1]
      %v1017 = vlaneseq
      %v1018 = vshrl.u32 %v1017, 7
      %v1019 = vsub.s32 0, %v1018
      %v1020 = vrot.slane %v1015, %v1019
      %v1022 = vsel %vm561, %v1003, 0
      %1024 = vmatprep.subr.mxu0 0.0
      %1025 = vmatpush1.msra.mxu0 %v1011
      %1026 = vmatprep.subr.mxu0 0.0
      %1027 = vmatpush1.msra.mxu0 %v1012
      %1028 = vmatprep.subr.mxu0 0.0
      %1029 = vmatpush1.msra.mxu0 %v1013
      %1030 = vmatprep.subr.mxu0 0.0
      %1031 = vmatpush1.msra.mxu0 %v1014
      %1032 = vmatprep.subr.mxu0 0.0
      %1033 = vmatpush1.msra.mxu0 0.0
      %1034 = vmatprep.subr.mxu0 0.0
      %1035 = vmatpush1.msra.mxu0 0.0
      %1036 = vmatprep.subr.mxu0 0.0
      %1037 = vmatpush1.msra.mxu0 0.0
      %1038 = vmatprep.subr.mxu0 0.0
      %1039 = vmatpush1.msra.mxu0 0.0
      %1040 = vmatprep.subr.mxu0 0.0
      %1041 = vmatpush1.msra.mxu0 0.0
      %1042 = vmatprep.subr.mxu0 0.0
      %1043 = vmatpush1.msra.mxu0 0.0
      %1044 = vmatprep.subr.mxu0 0.0
      %1045 = vmatpush1.msra.mxu0 0.0
      %1046 = vmatprep.subr.mxu0 0.0
      %1047 = vmatpush1.msra.mxu0 0.0
      %1048 = vmatprep.subr.mxu0 0.0
      %1049 = vmatpush1.msra.mxu0 0.0
      %1050 = vmatprep.subr.mxu0 0.0
      %1051 = vmatpush1.msra.mxu0 0.0
      %1052 = vmatprep.subr.mxu0 0.0
      %1053 = vmatpush1.msra.mxu0 0.0
      %1054 = vmatprep.subr.mxu0 0.0
      %1055 = vmatpush1.msra.mxu0 0.0
      %1056 = vmatprep.subr.mxu0 0.0
      %1057 = vmatpush1.msra.mxu0 0.0
      %1058 = vmatprep.subr.mxu0 0.0
      %1059 = vmatpush1.msra.mxu0 0.0
      %1060 = vmatprep.subr.mxu0 0.0
      %1061 = vmatpush1.msra.mxu0 0.0
      %1062 = vmatprep.subr.mxu0 0.0
      %1063 = vmatpush1.msra.mxu0 0.0
      %1064 = vmatprep.subr.mxu0 0.0
      %1065 = vmatpush1.msra.mxu0 0.0
      %1066 = vmatprep.subr.mxu0 0.0
      %1067 = vmatpush1.msra.mxu0 0.0
      %1068 = vmatprep.subr.mxu0 0.0
      %1069 = vmatpush1.msra.mxu0 0.0
      %1070 = vmatprep.subr.mxu0 0.0
      %1071 = vmatpush1.msra.mxu0 0.0
      %1072 = vmatprep.subr.mxu0 0.0
      %1073 = vmatpush1.msra.mxu0 0.0
      %1074 = vmatprep.subr.mxu0 0.0
      %1075 = vmatpush1.msra.mxu0 0.0
      %1076 = vmatprep.subr.mxu0 0.0
      %1077 = vmatpush1.msra.mxu0 0.0
      %1078 = vmatprep.subr.mxu0 0.0
      %1079 = vmatpush1.msra.mxu0 0.0
      %1080 = vmatprep.subr.mxu0 0.0
      %1081 = vmatpush1.msra.mxu0 0.0
      %1082 = vmatprep.subr.mxu0 0.0
      %1083 = vmatpush1.msra.mxu0 0.0
      %1084 = vmatprep.subr.mxu0 0.0
      %1085 = vmatpush1.msra.mxu0 0.0
      %1086 = vmatprep.subr.mxu0 0.0
      %1087 = vmatpush1.msra.mxu0 0.0
      %1088 = vmatprep.mubr.f32.mxu0 0.0
      %1089 = vmatmul.mubr.f32.gmra.mrb[0].mxu0 %v1022
      %v1090 = vpop.f32.mrb[0].mxu0
      %v1091 = vadd.f32 %v1020, %v1090
      %v1092 = vpop.f32.mrb[0].mxu0
      %1093 = vdwg.mxu0
      %1094 = vst [vmem:[%s442] sm:$0xff] %v1091
      %1095 = vmax.xlane.f32.xlu0 %v1091
      %v1096 = vpop.xlane.xlu0 %1095
      %v1097 = vlaneseq
      %v1098 = vand.u32 %v1097, 127
      %vm1099 = vcmp.eq.f32.partialorder %v1091, %v1096
      %v1100 = vsel %vm1099, %v1098, 128
      %v1101 = vand.u32 %v1100, 65535
      %v1102 = vshra.s32 %v1100, 16
      %v1103 = vcvt.s32.f32 %v1101
      %v1104 = vcvt.s32.f32 %v1102
      %1105 = vmin.xlane.f32.xlu0 %v1104
      %v1106 = vpop.xlane.xlu0 %1105
      %vm1107 = vcmp.eq.f32.partialorder %v1104, %v1106
      %v1108 = vsel %vm1107, %v1103, inf
      %1109 = vmin.xlane.f32.xlu0 %v1108
      %v1110 = vpop.xlane.xlu0 %1109
      %v1111 = vcvt.f32.s32 %v1110
      %v1112 = vcvt.f32.s32 %v1106
      %v1113 = vshll.u32 %v1112, 16
      %v1114 = vadd.s32 %v1113, %v1111
      %vm1115 = vcmp.eq.s32.totalorder %v1098, %v1114
      %v1116 = vsel %vm1115, 1, 0
      %v1117 = vcvt.s32.f32 %v1116
      %1118 = vst [vmem:[#allocation4] sm:$0xff] %v1117
      %p1119 = scmp.lt.s32.totalorder %s31, 6
      %s1120 = scalar_select %p1119, %s31, 6
      %s1121 = smul.addr %s1120, 8
      %s1122 = scalar_lea.vmem %s14, %s1121
      // Predicated region
      $region77: #{seq2seq_forward.3} parent=71 // pred_check
        %p1123 = pneg %p327
      $region78: #{seq2seq_forward.3} parent=71 // pred_check_branch
        %1125 = sbr.rel (%p1123) target = $region80
      $region79: #{seq2seq_forward.3} parent=71 // pred_region
        _
      $region80: #{seq2seq_forward.3} parent=71 // pred_fallthru
        _
    $region72: #{seq2seq_forward.3} parent=5 // pred_fallthru
      _
    %p1126 = scmp.le.s32.totalorder 2, %s26
    // Predicated region
    $region81: #{seq2seq_forward.3} parent=5 // pred_check
      %p1127 = pneg %p1126
    $region82: #{seq2seq_forward.3} parent=5 // pred_check_branch
      %1129 = sbr.rel (%p1127) target = $region84
    $region83: #{seq2seq_forward.3} parent=5 // pred_region
      %s1130 = ssub.s32 %s26, 2
      // Predicated region
      $region85: #{seq2seq_forward.3} parent=83 // pred_check
        %p1131 = pneg %p333
      $region86: #{seq2seq_forward.3} parent=83 // pred_check_branch
        %1133 = sbr.rel (%p1131) target = $region88
      $region87: #{seq2seq_forward.3} parent=83 // pred_region
        %p1134 = scmp.lt.s32.totalorder %s32, 6
        %s1135 = scalar_select %p1134, %s32, 6
        %s1136 = smul.addr %s1135, 8
        %s1137 = scalar_lea.vmem %s14, %s1136
      $region88: #{seq2seq_forward.3} parent=83 // pred_fallthru
        _
    $region84: #{seq2seq_forward.3} parent=5 // pred_fallthru
      _
  $region6: #{seq2seq_forward.3} parent=0 // loop_footer
    %s30 = sadd.s32 1, %s26
  $region7: #{seq2seq_forward.3} parent=0 // loop_footer_branch
    %25 = sbr.rel target = $region3
  $region8: #{seq2seq_forward.3} parent=0 // loop_exit
    _

</llo_original>
